<compile_context>
chip_gen: v7x
topology: tpu7x:2x2x1
jax: 0.10.0
libtpu: 0.0.40
codegen_flags: <defaults>
</compile_context>

<pallas_src>
import jax
import jax.numpy as jnp
from jax.experimental import pallas as pl
from jax.experimental.pallas import tpu as pltpu

K_IN = 1000      # real input features (kept unpadded)
N_OUT = 7        # real number of classes
N_PAD = 128      # lane-dense padded output width
NEG_BIG = -1e30  # bias value for padded class columns (exp underflows to 0)


def _round_up(x, m):
    return ((x + m - 1) // m) * m


def mlp_kernel(x_ref,
               w1_ref, b1_ref,
               w2_ref, b2_ref,
               w3_ref, b3_ref,
               w4_ref, b4_ref,
               w5_ref, b5_ref,
               o_ref):
    # x arrives as raw f32 (no wrapper pad/cast HBM pass); cast to bf16 in-kernel.
    h = x_ref[...].astype(jnp.bfloat16)                                   # (tb, 1000)

    h = jnp.dot(h, w1_ref[...], preferred_element_type=jnp.float32) + b1_ref[...]
    h = jnp.maximum(h, 0.0).astype(jnp.bfloat16)

    h = jnp.dot(h, w2_ref[...], preferred_element_type=jnp.float32) + b2_ref[...]
    h = jnp.maximum(h, 0.0).astype(jnp.bfloat16)

    h = jnp.dot(h, w3_ref[...], preferred_element_type=jnp.float32) + b3_ref[...]
    h = jnp.maximum(h, 0.0).astype(jnp.bfloat16)

    h = jnp.dot(h, w4_ref[...], preferred_element_type=jnp.float32) + b4_ref[...]
    h = jnp.maximum(h, 0.0).astype(jnp.bfloat16)

    # Padded classes (cols >= 7) carry a -1e30 bias -> exp() == 0, no mask needed.
    logits = jnp.dot(h, w5_ref[...], preferred_element_type=jnp.float32) + b5_ref[...]

    # numerically stable softmax over the lane-dense 128-wide feature axis
    m = jnp.max(logits, axis=-1, keepdims=True)
    e = jnp.exp(logits - m)
    denom = jnp.sum(e, axis=-1, keepdims=True)
    o_ref[...] = (e * pl.reciprocal(denom, approx=True)).astype(o_ref.dtype)


def mlp_forward(x, params, tile_b=512):
    """x: (B, 1000) float32. params: prepared (bf16-weight, padded-fc5) parameter dict."""
    B, K = x.shape
    assert K == K_IN, f"expected {K_IN} input features, got {K}"

    # bf16 activations pack 16 sublanes per vreg -> keep the batch tile a multiple of 16.
    tb = min(tile_b, _round_up(B, 16))
    b_pad = _round_up(B, tb)
    if b_pad != B:
        x = jnp.pad(x, ((0, b_pad - B), (0, 0)))
    grid = (b_pad // tb,)

    weight_args = (params["w1"], params["b1"],
                   params["w2"], params["b2"],
                   params["w3"], params["b3"],
                   params["w4"], params["b4"],
                   params["w5"], params["b5"])

    # x streamed at its natural f32 layout; K_IN equals the full array dim so the
    # (8,128) block-shape rule is bypassed without any feature-dim padding.
    in_specs = [pl.BlockSpec((tb, K_IN), lambda i: (i, 0))]
    # Constant block index -> weights/biases are DMA'd once and stay VMEM-resident.
    for arr in weight_args:
        in_specs.append(pl.BlockSpec(arr.shape, lambda i: (0, 0)))

    out_spec = pl.BlockSpec((tb, N_PAD), lambda i: (i, 0))

    out = pl.pallas_call(
        mlp_kernel,
        out_shape=jax.ShapeDtypeStruct((b_pad, N_PAD), jnp.bfloat16),
        grid=grid,
        in_specs=in_specs,
        out_specs=out_spec,
        compiler_params=pltpu.CompilerParams(
            dimension_semantics=("parallel",),
            vmem_limit_bytes=32 << 20,   # safe on all gens (v7x scoped default is 32 MiB)
        ),
    )(x, *weight_args)

    # slice away padded batch rows / padded class columns; return f32 probabilities
    return out[:B, :N_OUT].astype(jnp.float32)


def init_params(key):
    """Deterministic init matching nn.Linear shapes (weights transposed to (in,out)), fp32."""
    dims = [(K_IN, 512), (512, 512), (512, 256), (256, 128), (128, N_OUT)]
    params = {}
    keys = jax.random.split(key, 2 * len(dims))
    for i, (fan_in, fan_out) in enumerate(dims):
        bound = 1.0 / jnp.sqrt(fan_in)
        w = jax.random.uniform(keys[2 * i], (fan_in, fan_out),
                               minval=-bound, maxval=bound, dtype=jnp.float32)
        b = jax.random.uniform(keys[2 * i + 1], (1, fan_out),
                               minval=-bound, maxval=bound, dtype=jnp.float32)
        params[f"w{i + 1}"] = w
        params[f"b{i + 1}"] = b
    return params


def prepare_params(raw):
    """Cast weights to bf16 (biases stay f32); pad fc5 to 128 cols, padded bias cols = -1e30."""
    p = {}
    p["w1"] = raw["w1"].astype(jnp.bfloat16)            # (1000, 512) - rows kept unpadded
    p["b1"] = raw["b1"]
    p["w2"] = raw["w2"].astype(jnp.bfloat16)
    p["b2"] = raw["b2"]
    p["w3"] = raw["w3"].astype(jnp.bfloat16)
    p["b3"] = raw["b3"]
    p["w4"] = raw["w4"].astype(jnp.bfloat16)
    p["b4"] = raw["b4"]
    p["w5"] = jnp.pad(raw["w5"], ((0, 0), (0, N_PAD - N_OUT))).astype(jnp.bfloat16)
    p["b5"] = jnp.pad(raw["b5"], ((0, 0), (0, N_PAD - N_OUT)),
                      constant_values=NEG_BIG)
    return p


def reference_forward(x, p):
    """Pure-JAX reference matching the kernel's numerics (bf16 weights/activations, f32 acc)."""
    h = x.astype(jnp.bfloat16)
    for i in range(1, 5):
        h = jnp.dot(h, p[f"w{i}"], preferred_element_type=jnp.float32) + p[f"b{i}"]
        h = jnp.maximum(h, 0.0).astype(jnp.bfloat16)
    logits = jnp.dot(h, p["w5"][:, :N_OUT],
                     preferred_element_type=jnp.float32) + p["b5"][:, :N_OUT]
    return jax.nn.softmax(logits, axis=1)


if __name__ == "__main__":
    key = jax.random.PRNGKey(0)
    k_params, k_x = jax.random.split(key)

    raw_params = init_params(k_params)
    params = prepare_params(raw_params)

    B = 8
    x = jax.random.normal(k_x, (B, K_IN), dtype=jnp.float32)

    out = mlp_forward(x, params)
    out = jax.block_until_ready(out)

    ref = reference_forward(x, params)
    assert out.shape == (B, N_OUT), out.shape
    assert jnp.allclose(out, ref, atol=5e-3, rtol=5e-3), "mismatch vs reference"
    assert jnp.allclose(jnp.sum(out, axis=1), 1.0, atol=1e-2), "softmax rows must sum to ~1"

    print("KERNEL_OK")
</pallas_src>

<mosaic_0001>
module attributes {stable_mosaic.version = 11 : i64} {
  func.func @mlp_kernel(%arg0: i32, %arg1: memref<16x1000xf32, #tpu.memory_space<vmem>>, %arg2: memref<1000x512xbf16, #tpu.memory_space<vmem>>, %arg3: memref<1x512xf32, #tpu.memory_space<vmem>>, %arg4: memref<512x512xbf16, #tpu.memory_space<vmem>>, %arg5: memref<1x512xf32, #tpu.memory_space<vmem>>, %arg6: memref<512x256xbf16, #tpu.memory_space<vmem>>, %arg7: memref<1x256xf32, #tpu.memory_space<vmem>>, %arg8: memref<256x128xbf16, #tpu.memory_space<vmem>>, %arg9: memref<1x128xf32, #tpu.memory_space<vmem>>, %arg10: memref<128x128xbf16, #tpu.memory_space<vmem>>, %arg11: memref<1x128xf32, #tpu.memory_space<vmem>>, %arg12: memref<16x128xbf16, #tpu.memory_space<vmem>>) attributes {dimension_semantics = [#tpu.dimension_semantics<parallel>], iteration_bounds = array<i64: 1>, scalar_prefetch = 0 : i64, scratch_operands = 0 : i64, tpu.core_type = #tpu.core_type<tc>, window_params = [{transform_indices = @transform_0, window_bounds = array<i64: 16, 1000>}, {pipeline_mode = #tpu.pipeline_mode<synchronous>, transform_indices = @transform_1, window_bounds = array<i64: 1000, 512>}, {pipeline_mode = #tpu.pipeline_mode<synchronous>, transform_indices = @transform_2, window_bounds = array<i64: 1, 512>}, {pipeline_mode = #tpu.pipeline_mode<synchronous>, transform_indices = @transform_3, window_bounds = array<i64: 512, 512>}, {pipeline_mode = #tpu.pipeline_mode<synchronous>, transform_indices = @transform_4, window_bounds = array<i64: 1, 512>}, {pipeline_mode = #tpu.pipeline_mode<synchronous>, transform_indices = @transform_5, window_bounds = array<i64: 512, 256>}, {pipeline_mode = #tpu.pipeline_mode<synchronous>, transform_indices = @transform_6, window_bounds = array<i64: 1, 256>}, {pipeline_mode = #tpu.pipeline_mode<synchronous>, transform_indices = @transform_7, window_bounds = array<i64: 256, 128>}, {pipeline_mode = #tpu.pipeline_mode<synchronous>, transform_indices = @transform_8, window_bounds = array<i64: 1, 128>}, {pipeline_mode = #tpu.pipeline_mode<synchronous>, transform_indices = @transform_9, window_bounds = array<i64: 128, 128>}, {pipeline_mode = #tpu.pipeline_mode<synchronous>, transform_indices = @transform_10, window_bounds = array<i64: 1, 128>}, {transform_indices = @transform_11, window_bounds = array<i64: 16, 128>}]} {
    %c0 = arith.constant 0 : index
    %c0_0 = arith.constant 0 : index
    %0 = vector.load %arg1[%c0, %c0_0] : memref<16x1000xf32, #tpu.memory_space<vmem>>, vector<16x1000xf32>
    %1 = arith.truncf %0 : vector<16x1000xf32> to vector<16x1000xbf16>
    %c0_1 = arith.constant 0 : index
    %c0_2 = arith.constant 0 : index
    %2 = vector.load %arg2[%c0_1, %c0_2] : memref<1000x512xbf16, #tpu.memory_space<vmem>>, vector<1000x512xbf16>
    %cst = arith.constant dense<0.000000e+00> : vector<16x512xf32>
    %3 = tpu.matmul %1, %2, %cst {dimension_numbers = #tpu.dot_dimension_numbers<[1], [0], [0], [1], [0, 0, 1, 1], [], []>} : vector<16x1000xbf16>, vector<1000x512xbf16>, vector<16x512xf32> -> vector<16x512xf32>
    %c0_3 = arith.constant 0 : index
    %c0_4 = arith.constant 0 : index
    %4 = vector.load %arg3[%c0_3, %c0_4] : memref<1x512xf32, #tpu.memory_space<vmem>>, vector<1x512xf32>
    %5 = vector.broadcast %4 : vector<1x512xf32> to vector<16x512xf32>
    %6 = arith.addf %3, %5 : vector<16x512xf32>
    %cst_5 = arith.constant 0.000000e+00 : f32
    %7 = vector.broadcast %cst_5 : f32 to vector<16x512xf32>
    %8 = arith.maximumf %6, %7 : vector<16x512xf32>
    %9 = arith.truncf %8 : vector<16x512xf32> to vector<16x512xbf16>
    %c0_6 = arith.constant 0 : index
    %c0_7 = arith.constant 0 : index
    %10 = vector.load %arg4[%c0_6, %c0_7] : memref<512x512xbf16, #tpu.memory_space<vmem>>, vector<512x512xbf16>
    %cst_8 = arith.constant dense<0.000000e+00> : vector<16x512xf32>
    %11 = tpu.matmul %9, %10, %cst_8 {dimension_numbers = #tpu.dot_dimension_numbers<[1], [0], [0], [1], [0, 0, 1, 1], [], []>} : vector<16x512xbf16>, vector<512x512xbf16>, vector<16x512xf32> -> vector<16x512xf32>
    %c0_9 = arith.constant 0 : index
    %c0_10 = arith.constant 0 : index
    %12 = vector.load %arg5[%c0_9, %c0_10] : memref<1x512xf32, #tpu.memory_space<vmem>>, vector<1x512xf32>
    %13 = vector.broadcast %12 : vector<1x512xf32> to vector<16x512xf32>
    %14 = arith.addf %11, %13 : vector<16x512xf32>
    %cst_11 = arith.constant 0.000000e+00 : f32
    %15 = vector.broadcast %cst_11 : f32 to vector<16x512xf32>
    %16 = arith.maximumf %14, %15 : vector<16x512xf32>
    %17 = arith.truncf %16 : vector<16x512xf32> to vector<16x512xbf16>
    %c0_12 = arith.constant 0 : index
    %c0_13 = arith.constant 0 : index
    %18 = vector.load %arg6[%c0_12, %c0_13] : memref<512x256xbf16, #tpu.memory_space<vmem>>, vector<512x256xbf16>
    %cst_14 = arith.constant dense<0.000000e+00> : vector<16x256xf32>
    %19 = tpu.matmul %17, %18, %cst_14 {dimension_numbers = #tpu.dot_dimension_numbers<[1], [0], [0], [1], [0, 0, 1, 1], [], []>} : vector<16x512xbf16>, vector<512x256xbf16>, vector<16x256xf32> -> vector<16x256xf32>
    %c0_15 = arith.constant 0 : index
    %c0_16 = arith.constant 0 : index
    %20 = vector.load %arg7[%c0_15, %c0_16] : memref<1x256xf32, #tpu.memory_space<vmem>>, vector<1x256xf32>
    %21 = vector.broadcast %20 : vector<1x256xf32> to vector<16x256xf32>
    %22 = arith.addf %19, %21 : vector<16x256xf32>
    %cst_17 = arith.constant 0.000000e+00 : f32
    %23 = vector.broadcast %cst_17 : f32 to vector<16x256xf32>
    %24 = arith.maximumf %22, %23 : vector<16x256xf32>
    %25 = arith.truncf %24 : vector<16x256xf32> to vector<16x256xbf16>
    %c0_18 = arith.constant 0 : index
    %c0_19 = arith.constant 0 : index
    %26 = vector.load %arg8[%c0_18, %c0_19] : memref<256x128xbf16, #tpu.memory_space<vmem>>, vector<256x128xbf16>
    %cst_20 = arith.constant dense<0.000000e+00> : vector<16x128xf32>
    %27 = tpu.matmul %25, %26, %cst_20 {dimension_numbers = #tpu.dot_dimension_numbers<[1], [0], [0], [1], [0, 0, 1, 1], [], []>} : vector<16x256xbf16>, vector<256x128xbf16>, vector<16x128xf32> -> vector<16x128xf32>
    %c0_21 = arith.constant 0 : index
    %c0_22 = arith.constant 0 : index
    %28 = vector.load %arg9[%c0_21, %c0_22] : memref<1x128xf32, #tpu.memory_space<vmem>>, vector<1x128xf32>
    %29 = vector.broadcast %28 : vector<1x128xf32> to vector<16x128xf32>
    %30 = arith.addf %27, %29 : vector<16x128xf32>
    %cst_23 = arith.constant 0.000000e+00 : f32
    %31 = vector.broadcast %cst_23 : f32 to vector<16x128xf32>
    %32 = arith.maximumf %30, %31 : vector<16x128xf32>
    %33 = arith.truncf %32 : vector<16x128xf32> to vector<16x128xbf16>
    %c0_24 = arith.constant 0 : index
    %c0_25 = arith.constant 0 : index
    %34 = vector.load %arg10[%c0_24, %c0_25] : memref<128x128xbf16, #tpu.memory_space<vmem>>, vector<128x128xbf16>
    %cst_26 = arith.constant dense<0.000000e+00> : vector<16x128xf32>
    %35 = tpu.matmul %33, %34, %cst_26 {dimension_numbers = #tpu.dot_dimension_numbers<[1], [0], [0], [1], [0, 0, 1, 1], [], []>} : vector<16x128xbf16>, vector<128x128xbf16>, vector<16x128xf32> -> vector<16x128xf32>
    %c0_27 = arith.constant 0 : index
    %c0_28 = arith.constant 0 : index
    %36 = vector.load %arg11[%c0_27, %c0_28] : memref<1x128xf32, #tpu.memory_space<vmem>>, vector<1x128xf32>
    %37 = vector.broadcast %36 : vector<1x128xf32> to vector<16x128xf32>
    %38 = arith.addf %35, %37 : vector<16x128xf32>
    %cst_29 = arith.constant dense<0xFF800000> : vector<16xf32>
    %39 = vector.multi_reduction <maximumf>, %38, %cst_29 [1] : vector<16x128xf32> to vector<16xf32>
    %40 = vector.shape_cast %39 : vector<16xf32> to vector<16x1xf32>
    %41 = vector.broadcast %40 : vector<16x1xf32> to vector<16x128xf32>
    %42 = arith.subf %38, %41 : vector<16x128xf32>
    %43 = math.exp %42 : vector<16x128xf32>
    %cst_30 = arith.constant dense<0.000000e+00> : vector<16xf32>
    %44 = vector.multi_reduction <add>, %43, %cst_30 [1] : vector<16x128xf32> to vector<16xf32>
    %45 = vector.shape_cast %44 : vector<16xf32> to vector<16x1xf32>
    %46 = tpu.reciprocal %45 {approx = true} : vector<16x1xf32> -> vector<16x1xf32>
    %47 = vector.broadcast %46 : vector<16x1xf32> to vector<16x128xf32>
    %48 = arith.mulf %43, %47 : vector<16x128xf32>
    %49 = arith.truncf %48 : vector<16x128xf32> to vector<16x128xbf16>
    %c0_31 = arith.constant 0 : index
    %c0_32 = arith.constant 0 : index
    %50 = vector.load %arg12[%c0_31, %c0_32] : memref<16x128xbf16, #tpu.memory_space<vmem>>, vector<16x128xbf16>
    tpu.vector_store %arg12[%c0_31, %c0_32], %49 {strides = array<i32>} : memref<16x128xbf16, #tpu.memory_space<vmem>>, vector<16x128xbf16>,
    return
  }
  func.func @transform_0(%arg0: i32) -> (i32, i32) {
    %c0_i32 = arith.constant 0 : i32
    %c0_i32_0 = arith.constant 0 : i32
    return %arg0, %c0_i32 : i32, i32
  }
  func.func @transform_1(%arg0: i32) -> (i32, i32) {
    %c0_i32 = arith.constant 0 : i32
    %c0_i32_0 = arith.constant 0 : i32
    %c0_i32_1 = arith.constant 0 : i32
    return %c0_i32, %c0_i32_0 : i32, i32
  }
  func.func @transform_2(%arg0: i32) -> (i32, i32) {
    %c0_i32 = arith.constant 0 : i32
    %c0_i32_0 = arith.constant 0 : i32
    %c0_i32_1 = arith.constant 0 : i32
    return %c0_i32, %c0_i32_0 : i32, i32
  }
  func.func @transform_3(%arg0: i32) -> (i32, i32) {
    %c0_i32 = arith.constant 0 : i32
    %c0_i32_0 = arith.constant 0 : i32
    %c0_i32_1 = arith.constant 0 : i32
    return %c0_i32, %c0_i32_0 : i32, i32
  }
  func.func @transform_4(%arg0: i32) -> (i32, i32) {
    %c0_i32 = arith.constant 0 : i32
    %c0_i32_0 = arith.constant 0 : i32
    %c0_i32_1 = arith.constant 0 : i32
    return %c0_i32, %c0_i32_0 : i32, i32
  }
  func.func @transform_5(%arg0: i32) -> (i32, i32) {
    %c0_i32 = arith.constant 0 : i32
    %c0_i32_0 = arith.constant 0 : i32
    %c0_i32_1 = arith.constant 0 : i32
    return %c0_i32, %c0_i32_0 : i32, i32
  }
  func.func @transform_6(%arg0: i32) -> (i32, i32) {
    %c0_i32 = arith.constant 0 : i32
    %c0_i32_0 = arith.constant 0 : i32
    %c0_i32_1 = arith.constant 0 : i32
    return %c0_i32, %c0_i32_0 : i32, i32
  }
  func.func @transform_7(%arg0: i32) -> (i32, i32) {
    %c0_i32 = arith.constant 0 : i32
    %c0_i32_0 = arith.constant 0 : i32
    %c0_i32_1 = arith.constant 0 : i32
    return %c0_i32, %c0_i32_0 : i32, i32
  }
  func.func @transform_8(%arg0: i32) -> (i32, i32) {
    %c0_i32 = arith.constant 0 : i32
    %c0_i32_0 = arith.constant 0 : i32
    %c0_i32_1 = arith.constant 0 : i32
    return %c0_i32, %c0_i32_0 : i32, i32
  }
  func.func @transform_9(%arg0: i32) -> (i32, i32) {
    %c0_i32 = arith.constant 0 : i32
    %c0_i32_0 = arith.constant 0 : i32
    %c0_i32_1 = arith.constant 0 : i32
    return %c0_i32, %c0_i32_0 : i32, i32
  }
  func.func @transform_10(%arg0: i32) -> (i32, i32) {
    %c0_i32 = arith.constant 0 : i32
    %c0_i32_0 = arith.constant 0 : i32
    %c0_i32_1 = arith.constant 0 : i32
    return %c0_i32, %c0_i32_0 : i32, i32
  }
  func.func @transform_11(%arg0: i32) -> (i32, i32) {
    %c0_i32 = arith.constant 0 : i32
    %c0_i32_0 = arith.constant 0 : i32
    return %arg0, %c0_i32 : i32, i32
  }
}

</mosaic_0001>

<llo_original>
// kernel: tpu_custom_call.1
$region0: #{tpu_custom_call.1}
  #allocation0 [shape = 'u32[]', space=smem, size = 0x4, offset = 0x4, fixed_abs, tag = 'smem constant byte address 0x4 - core index']
  #allocation1 [shape = 'u32[144,128]{1,0:T(1,128)}', space=vmem, size = 0x12000, scoped, tag = 'internal scratch']
  %s0 = inlined_call_operand.hbm [shape: f32[16,1000], index: 0, kind: input, shape index: {}]
  %s1 = inlined_call_operand.hbm [shape: bf16[1000,512], index: 1, kind: input, shape index: {}]
  %s2 = inlined_call_operand.vmem [shape: f32[1,512], index: 2, kind: input, shape index: {}]
  %s3 = inlined_call_operand.hbm [shape: bf16[512,512], index: 3, kind: input, shape index: {}]
  %s4 = inlined_call_operand.vmem [shape: f32[1,512], index: 4, kind: input, shape index: {}]
  %s5 = inlined_call_operand.hbm [shape: bf16[512,256], index: 5, kind: input, shape index: {}]
  %s6 = inlined_call_operand.vmem [shape: f32[1,256], index: 6, kind: input, shape index: {}]
  %s7 = inlined_call_operand.hbm [shape: bf16[256,128], index: 7, kind: input, shape index: {}]
  %s8 = inlined_call_operand.vmem [shape: f32[1,128], index: 8, kind: input, shape index: {}]
  %s9 = inlined_call_operand.hbm [shape: bf16[128,128], index: 9, kind: input, shape index: {}]
  %s10 = inlined_call_operand.vmem [shape: f32[1,128], index: 10, kind: input, shape index: {}]
  %s11 = inlined_call_operand.hbm [shape: bf16[16,128], index: 11, kind: output, shape index: {}]
  %s12 = sld [smem:[#allocation0]]
  $region78: #{tpu_custom_call.1} parent=0
    _
  %s14 = ssub.s32 1, %s12
  %s15 = scalar_select 0, %s14, %s12
  $region1: #{tpu_custom_call.1} parent=0
    #allocation2 [shape = 'u8[65536]{0}', space=vmem, size = 0x10000, scoped, tag = 'input window, operand 0, single buffered']
    #allocation3 [shape = 's32[1]{0}', space=sflag, size = 0x4, scoped, tag = 'scoped memory for tpu_custom_call.1']
    #allocation4 [shape = 's32[1]{0}', space=sflag, size = 0x4, scoped, tag = 'scoped memory for tpu_custom_call.1']
    #allocation5 [shape = 'u8[1024000]{0}', space=vmem, size = 0xfa000, scoped, tag = 'input window, operand 1, single buffered']
    #allocation6 [shape = 's32[1]{0}', space=sflag, size = 0x4, scoped, tag = 'scoped memory for tpu_custom_call.1']
    #allocation7 [shape = 'u8[524288]{0}', space=vmem, size = 0x80000, scoped, tag = 'input window, operand 3, single buffered']
    #allocation8 [shape = 'u8[262144]{0}', space=vmem, size = 0x40000, scoped, tag = 'input window, operand 5, single buffered']
    #allocation9 [shape = 's32[1]{0}', space=sflag, size = 0x4, scoped, tag = 'scoped memory for tpu_custom_call.1']
    #allocation10 [shape = 'u8[65536]{0}', space=vmem, size = 0x10000, scoped, tag = 'input window, operand 7, single buffered']
    #allocation11 [shape = 'u8[32768]{0}', space=vmem, size = 0x8000, scoped, tag = 'input window, operand 9, single buffered']
    #allocation12 [shape = 's32[1]{0}', space=sflag, size = 0x4, scoped, tag = 'scoped memory for tpu_custom_call.1']
    #allocation13 [shape = 'u8[4096]{0}', space=vmem, size = 0x1000, scoped, tag = 'output window, operand 0, single buffered']
    %16 = vsyncpa [#allocation3], 0
    %17 = vsyncpa [#allocation6], 0
    %18 = vsyncpa [#allocation9], 0
    %19 = vsyncpa [#allocation12], 0
    %20 = vsyncpa [#allocation4], 0
    // Predicated region
    $region2: #{tpu_custom_call.1} parent=1 // pred_check
      _
    $region3: #{tpu_custom_call.1} parent=1 // pred_check_branch
      %22 = sbr.rel (0) target = $region5
    $region4: #{tpu_custom_call.1} parent=1 // pred_region
      %s24 = ssub.s32 2048, 2048
      %25 = vsyncadd [#allocation3], %s24
      %s26 = sshll.u32 [#allocation2], 4
      %s27 = int_to_ptr.vmem [resolvable:$true] %s26
      %32 = dma.hbm_to_vmem [thread:$0]  %s0, 2048, %s27, [#allocation3], 1024, 1024, 64
    $region5: #{tpu_custom_call.1} parent=1 // pred_fallthru
      _
    // Predicated region
    $region6: #{tpu_custom_call.1} parent=1 // pred_check
      _
    $region7: #{tpu_custom_call.1} parent=1 // pred_check_branch
      %34 = sbr.rel (0) target = $region9
    $region8: #{tpu_custom_call.1} parent=1 // pred_region
      %s36 = ssub.s32 32000, 32000
      %37 = vsyncadd [#allocation6], %s36
      %s38 = sshll.u32 [#allocation5], 4
      %s39 = int_to_ptr.vmem [resolvable:$true] %s38
      %44 = dma.hbm_to_vmem [thread:$0]  %s1, 32000, %s39, [#allocation6], 256, 256, 16
    $region9: #{tpu_custom_call.1} parent=1 // pred_fallthru
      _
    // Predicated region
    $region10: #{tpu_custom_call.1} parent=1 // pred_check
      _
    $region11: #{tpu_custom_call.1} parent=1 // pred_check_branch
      %46 = sbr.rel (0) target = $region13
    $region12: #{tpu_custom_call.1} parent=1 // pred_region
      _
    $region13: #{tpu_custom_call.1} parent=1 // pred_fallthru
      _
    // Predicated region
    $region14: #{tpu_custom_call.1} parent=1 // pred_check
      _
    $region15: #{tpu_custom_call.1} parent=1 // pred_check_branch
      %48 = sbr.rel (0) target = $region17
    $region16: #{tpu_custom_call.1} parent=1 // pred_region
      %s50 = ssub.s32 16384, 16384
      %51 = vsyncadd [#allocation6], %s50
      %s52 = sshll.u32 [#allocation7], 4
      %s53 = int_to_ptr.vmem [resolvable:$true] %s52
      %58 = dma.hbm_to_vmem [thread:$0]  %s3, 16384, %s53, [#allocation6], 256, 256, 16
    $region17: #{tpu_custom_call.1} parent=1 // pred_fallthru
      _
    // Predicated region
    $region18: #{tpu_custom_call.1} parent=1 // pred_check
      _
    $region19: #{tpu_custom_call.1} parent=1 // pred_check_branch
      %60 = sbr.rel (0) target = $region21
    $region20: #{tpu_custom_call.1} parent=1 // pred_region
      _
    $region21: #{tpu_custom_call.1} parent=1 // pred_fallthru
      _
    // Predicated region
    $region22: #{tpu_custom_call.1} parent=1 // pred_check
      _
    $region23: #{tpu_custom_call.1} parent=1 // pred_check_branch
      %62 = sbr.rel (0) target = $region25
    $region24: #{tpu_custom_call.1} parent=1 // pred_region
      %s64 = ssub.s32 8192, 8192
      %65 = vsyncadd [#allocation9], %s64
      %s66 = sshll.u32 [#allocation8], 4
      %s67 = int_to_ptr.vmem [resolvable:$true] %s66
      %72 = dma.hbm_to_vmem [thread:$0]  %s5, 8192, %s67, [#allocation9], 128, 128, 8
    $region25: #{tpu_custom_call.1} parent=1 // pred_fallthru
      _
    // Predicated region
    $region26: #{tpu_custom_call.1} parent=1 // pred_check
      _
    $region27: #{tpu_custom_call.1} parent=1 // pred_check_branch
      %74 = sbr.rel (0) target = $region29
    $region28: #{tpu_custom_call.1} parent=1 // pred_region
      _
    $region29: #{tpu_custom_call.1} parent=1 // pred_fallthru
      _
    // Predicated region
    $region30: #{tpu_custom_call.1} parent=1 // pred_check
      _
    $region31: #{tpu_custom_call.1} parent=1 // pred_check_branch
      %76 = sbr.rel (0) target = $region33
    $region32: #{tpu_custom_call.1} parent=1 // pred_region
      %s78 = ssub.s32 2048, 2048
      %79 = vsyncadd [#allocation9], %s78
      %s80 = sshll.u32 [#allocation10], 4
      %s81 = int_to_ptr.vmem [resolvable:$true] %s80
      %86 = dma.hbm_to_vmem [thread:$0]  %s7, 2048, %s81, [#allocation9], 64, 64, 4
    $region33: #{tpu_custom_call.1} parent=1 // pred_fallthru
      _
    // Predicated region
    $region34: #{tpu_custom_call.1} parent=1 // pred_check
      _
    $region35: #{tpu_custom_call.1} parent=1 // pred_check_branch
      %88 = sbr.rel (0) target = $region37
    $region36: #{tpu_custom_call.1} parent=1 // pred_region
      _
    $region37: #{tpu_custom_call.1} parent=1 // pred_fallthru
      _
    // Predicated region
    $region38: #{tpu_custom_call.1} parent=1 // pred_check
      _
    $region39: #{tpu_custom_call.1} parent=1 // pred_check_branch
      %90 = sbr.rel (0) target = $region41
    $region40: #{tpu_custom_call.1} parent=1 // pred_region
      %s92 = ssub.s32 1024, 1024
      %93 = vsyncadd [#allocation12], %s92
      %s94 = sshll.u32 [#allocation11], 4
      %s95 = int_to_ptr.vmem [resolvable:$true] %s94
      %100 = dma.hbm_to_vmem [thread:$0]  %s9, 1024, %s95, [#allocation12], 64, 64, 4
    $region41: #{tpu_custom_call.1} parent=1 // pred_fallthru
      _
    // Predicated region
    $region42: #{tpu_custom_call.1} parent=1 // pred_check
      _
    $region43: #{tpu_custom_call.1} parent=1 // pred_check_branch
      %102 = sbr.rel (0) target = $region45
    $region44: #{tpu_custom_call.1} parent=1 // pred_region
      _
    $region45: #{tpu_custom_call.1} parent=1 // pred_fallthru
      _
    // Predicated region
    $region46: #{tpu_custom_call.1} parent=1 // pred_check
      _
    $region47: #{tpu_custom_call.1} parent=1 // pred_check_branch
      %104 = sbr.rel (0) target = $region49
    $region48: #{tpu_custom_call.1} parent=1 // pred_region
      %105 = dma.done [#allocation3], 2048
    $region49: #{tpu_custom_call.1} parent=1 // pred_fallthru
      _
    // Predicated region
    $region50: #{tpu_custom_call.1} parent=1 // pred_check
      _
    $region51: #{tpu_custom_call.1} parent=1 // pred_check_branch
      %107 = sbr.rel (0) target = $region53
    $region52: #{tpu_custom_call.1} parent=1 // pred_region
      %108 = dma.done [#allocation6], 32000
    $region53: #{tpu_custom_call.1} parent=1 // pred_fallthru
      _
    // Predicated region
    $region54: #{tpu_custom_call.1} parent=1 // pred_check
      _
    $region55: #{tpu_custom_call.1} parent=1 // pred_check_branch
      %110 = sbr.rel (0) target = $region57
    $region56: #{tpu_custom_call.1} parent=1 // pred_region
      %111 = dma.done [#allocation6], 16384
    $region57: #{tpu_custom_call.1} parent=1 // pred_fallthru
      _
    // Predicated region
    $region58: #{tpu_custom_call.1} parent=1 // pred_check
      _
    $region59: #{tpu_custom_call.1} parent=1 // pred_check_branch
      %113 = sbr.rel (0) target = $region61
    $region60: #{tpu_custom_call.1} parent=1 // pred_region
      %114 = dma.done [#allocation9], 8192
    $region61: #{tpu_custom_call.1} parent=1 // pred_fallthru
      _
    // Predicated region
    $region62: #{tpu_custom_call.1} parent=1 // pred_check
      _
    $region63: #{tpu_custom_call.1} parent=1 // pred_check_branch
      %116 = sbr.rel (0) target = $region65
    $region64: #{tpu_custom_call.1} parent=1 // pred_region
      %117 = dma.done [#allocation9], 2048
    $region65: #{tpu_custom_call.1} parent=1 // pred_fallthru
      _
    // Predicated region
    $region66: #{tpu_custom_call.1} parent=1 // pred_check
      _
    $region67: #{tpu_custom_call.1} parent=1 // pred_check_branch
      %119 = sbr.rel (0) target = $region69
    $region68: #{tpu_custom_call.1} parent=1 // pred_region
      %120 = dma.done [#allocation12], 1024
    $region69: #{tpu_custom_call.1} parent=1 // pred_fallthru
      _
    %v122 = vld [vmem:[#allocation2] sm:$0xff]
    %v123 = vld [vmem:[#allocation2 + $0x8] sm:$0xff]
    %v124 = vld [vmem:[#allocation2 + $0x10] sm:$0xff]
    %v125 = vld [vmem:[#allocation2 + $0x18] sm:$0xff]
    %v126 = vld [vmem:[#allocation2 + $0x20] sm:$0xff]
    %v127 = vld [vmem:[#allocation2 + $0x28] sm:$0xff]
    %v128 = vld [vmem:[#allocation2 + $0x30] sm:$0xff]
    %v129 = vld [vmem:[#allocation2 + $0x38] sm:$0xff]
    %v130 = vld [vmem:[#allocation2 + $0x40] sm:$0xff]
    %v131 = vld [vmem:[#allocation2 + $0x48] sm:$0xff]
    %v132 = vld [vmem:[#allocation2 + $0x50] sm:$0xff]
    %v133 = vld [vmem:[#allocation2 + $0x58] sm:$0xff]
    %v134 = vld [vmem:[#allocation2 + $0x60] sm:$0xff]
    %v135 = vld [vmem:[#allocation2 + $0x68] sm:$0xff]
    %v136 = vld [vmem:[#allocation2 + $0x70] sm:$0xff]
    %v137 = vld [vmem:[#allocation2 + $0x78] sm:$0xff]
    %v138 = vpack.c.bf16 %v130, %v122
    %v139 = vpack.c.bf16 %v131, %v123
    %v140 = vpack.c.bf16 %v132, %v124
    %v141 = vpack.c.bf16 %v133, %v125
    %v142 = vpack.c.bf16 %v134, %v126
    %v143 = vpack.c.bf16 %v135, %v127
    %v144 = vpack.c.bf16 %v136, %v128
    %v145 = vpack.c.bf16 %v137, %v129
    %v146 = vld [vmem:[#allocation5] sm:$0xff]
    %v147 = vld [vmem:[#allocation5 + $0x8] sm:$0xff]
    %v148 = vld [vmem:[#allocation5 + $0x10] sm:$0xff]
    %v149 = vld [vmem:[#allocation5 + $0x18] sm:$0xff]
    %v150 = vld [vmem:[#allocation5 + $0x20] sm:$0xff]
    %v151 = vld [vmem:[#allocation5 + $0x28] sm:$0xff]
    %v152 = vld [vmem:[#allocation5 + $0x30] sm:$0xff]
    %v153 = vld [vmem:[#allocation5 + $0x38] sm:$0xff]
    %v154 = vld [vmem:[#allocation5 + $0x40] sm:$0xff]
    %v155 = vld [vmem:[#allocation5 + $0x48] sm:$0xff]
    %v156 = vld [vmem:[#allocation5 + $0x50] sm:$0xff]
    %v157 = vld [vmem:[#allocation5 + $0x58] sm:$0xff]
    %v158 = vld [vmem:[#allocation5 + $0x60] sm:$0xff]
    %v159 = vld [vmem:[#allocation5 + $0x68] sm:$0xff]
    %v160 = vld [vmem:[#allocation5 + $0x70] sm:$0xff]
    %v161 = vld [vmem:[#allocation5 + $0x78] sm:$0xff]
    %v162 = vld [vmem:[#allocation5 + $0x80] sm:$0xff]
    %v163 = vld [vmem:[#allocation5 + $0x88] sm:$0xff]
    %v164 = vld [vmem:[#allocation5 + $0x90] sm:$0xff]
    %v165 = vld [vmem:[#allocation5 + $0x98] sm:$0xff]
    %v166 = vld [vmem:[#allocation5 + $0xa0] sm:$0xff]
    %v167 = vld [vmem:[#allocation5 + $0xa8] sm:$0xff]
    %v168 = vld [vmem:[#allocation5 + $0xb0] sm:$0xff]
    %v169 = vld [vmem:[#allocation5 + $0xb8] sm:$0xff]
    %v170 = vld [vmem:[#allocation5 + $0xc0] sm:$0xff]
    %v171 = vld [vmem:[#allocation5 + $0xc8] sm:$0xff]
    %v172 = vld [vmem:[#allocation5 + $0xd0] sm:$0xff]
    %v173 = vld [vmem:[#allocation5 + $0xd8] sm:$0xff]
    %v174 = vld [vmem:[#allocation5 + $0xe0] sm:$0xff]
    %v175 = vld [vmem:[#allocation5 + $0xe8] sm:$0xff]
    %v176 = vld [vmem:[#allocation5 + $0xf0] sm:$0xff]
    %v177 = vld [vmem:[#allocation5 + $0xf8] sm:$0xff]
    %v178 = vld [vmem:[#allocation5 + $0x100] sm:$0xff]
    %v179 = vld [vmem:[#allocation5 + $0x108] sm:$0xff]
    %v180 = vld [vmem:[#allocation5 + $0x110] sm:$0xff]
    %v181 = vld [vmem:[#allocation5 + $0x118] sm:$0xff]
    %v182 = vld [vmem:[#allocation5 + $0x120] sm:$0xff]
    %v183 = vld [vmem:[#allocation5 + $0x128] sm:$0xff]
    %v184 = vld [vmem:[#allocation5 + $0x130] sm:$0xff]
    %v185 = vld [vmem:[#allocation5 + $0x138] sm:$0xff]
    %v186 = vld [vmem:[#allocation5 + $0x140] sm:$0xff]
    %v187 = vld [vmem:[#allocation5 + $0x148] sm:$0xff]
    %v188 = vld [vmem:[#allocation5 + $0x150] sm:$0xff]
    %v189 = vld [vmem:[#allocation5 + $0x158] sm:$0xff]
    %v190 = vld [vmem:[#allocation5 + $0x160] sm:$0xff]
    %v191 = vld [vmem:[#allocation5 + $0x168] sm:$0xff]
    %v192 = vld [vmem:[#allocation5 + $0x170] sm:$0xff]
    %v193 = vld [vmem:[#allocation5 + $0x178] sm:$0xff]
    %v194 = vld [vmem:[#allocation5 + $0x180] sm:$0xff]
    %v195 = vld [vmem:[#allocation5 + $0x188] sm:$0xff]
    %v196 = vld [vmem:[#allocation5 + $0x190] sm:$0xff]
    %v197 = vld [vmem:[#allocation5 + $0x198] sm:$0xff]
    %v198 = vld [vmem:[#allocation5 + $0x1a0] sm:$0xff]
    %v199 = vld [vmem:[#allocation5 + $0x1a8] sm:$0xff]
    %v200 = vld [vmem:[#allocation5 + $0x1b0] sm:$0xff]
    %v201 = vld [vmem:[#allocation5 + $0x1b8] sm:$0xff]
    %v202 = vld [vmem:[#allocation5 + $0x1c0] sm:$0xff]
    %v203 = vld [vmem:[#allocation5 + $0x1c8] sm:$0xff]
    %v204 = vld [vmem:[#allocation5 + $0x1d0] sm:$0xff]
    %v205 = vld [vmem:[#allocation5 + $0x1d8] sm:$0xff]
    %v206 = vld [vmem:[#allocation5 + $0x1e0] sm:$0xff]
    %v207 = vld [vmem:[#allocation5 + $0x1e8] sm:$0xff]
    %v208 = vld [vmem:[#allocation5 + $0x1f0] sm:$0xff]
    %v209 = vld [vmem:[#allocation5 + $0x1f8] sm:$0xff]
    %v210 = vld [vmem:[#allocation5 + $0x200] sm:$0xff]
    %v211 = vld [vmem:[#allocation5 + $0x208] sm:$0xff]
    %v212 = vld [vmem:[#allocation5 + $0x210] sm:$0xff]
    %v213 = vld [vmem:[#allocation5 + $0x218] sm:$0xff]
    %v214 = vld [vmem:[#allocation5 + $0x220] sm:$0xff]
    %v215 = vld [vmem:[#allocation5 + $0x228] sm:$0xff]
    %v216 = vld [vmem:[#allocation5 + $0x230] sm:$0xff]
    %v217 = vld [vmem:[#allocation5 + $0x238] sm:$0xff]
    %v218 = vld [vmem:[#allocation5 + $0x240] sm:$0xff]
    %v219 = vld [vmem:[#allocation5 + $0x248] sm:$0xff]
    %v220 = vld [vmem:[#allocation5 + $0x250] sm:$0xff]
    %v221 = vld [vmem:[#allocation5 + $0x258] sm:$0xff]
    %v222 = vld [vmem:[#allocation5 + $0x260] sm:$0xff]
    %v223 = vld [vmem:[#allocation5 + $0x268] sm:$0xff]
    %v224 = vld [vmem:[#allocation5 + $0x270] sm:$0xff]
    %v225 = vld [vmem:[#allocation5 + $0x278] sm:$0xff]
    %v226 = vld [vmem:[#allocation5 + $0x280] sm:$0xff]
    %v227 = vld [vmem:[#allocation5 + $0x288] sm:$0xff]
    %v228 = vld [vmem:[#allocation5 + $0x290] sm:$0xff]
    %v229 = vld [vmem:[#allocation5 + $0x298] sm:$0xff]
    %v230 = vld [vmem:[#allocation5 + $0x2a0] sm:$0xff]
    %v231 = vld [vmem:[#allocation5 + $0x2a8] sm:$0xff]
    %v232 = vld [vmem:[#allocation5 + $0x2b0] sm:$0xff]
    %v233 = vld [vmem:[#allocation5 + $0x2b8] sm:$0xff]
    %v234 = vld [vmem:[#allocation5 + $0x2c0] sm:$0xff]
    %v235 = vld [vmem:[#allocation5 + $0x2c8] sm:$0xff]
    %v236 = vld [vmem:[#allocation5 + $0x2d0] sm:$0xff]
    %v237 = vld [vmem:[#allocation5 + $0x2d8] sm:$0xff]
    %v238 = vld [vmem:[#allocation5 + $0x2e0] sm:$0xff]
    %v239 = vld [vmem:[#allocation5 + $0x2e8] sm:$0xff]
    %v240 = vld [vmem:[#allocation5 + $0x2f0] sm:$0xff]
    %v241 = vld [vmem:[#allocation5 + $0x2f8] sm:$0xff]
    %v242 = vld [vmem:[#allocation5 + $0x300] sm:$0xff]
    %v243 = vld [vmem:[#allocation5 + $0x308] sm:$0xff]
    %v244 = vld [vmem:[#allocation5 + $0x310] sm:$0xff]
    %v245 = vld [vmem:[#allocation5 + $0x318] sm:$0xff]
    %v246 = vld [vmem:[#allocation5 + $0x320] sm:$0xff]
    %v247 = vld [vmem:[#allocation5 + $0x328] sm:$0xff]
    %v248 = vld [vmem:[#allocation5 + $0x330] sm:$0xff]
    %v249 = vld [vmem:[#allocation5 + $0x338] sm:$0xff]
    %v250 = vld [vmem:[#allocation5 + $0x340] sm:$0xff]
    %v251 = vld [vmem:[#allocation5 + $0x348] sm:$0xff]
    %v252 = vld [vmem:[#allocation5 + $0x350] sm:$0xff]
    %v253 = vld [vmem:[#allocation5 + $0x358] sm:$0xff]
    %v254 = vld [vmem:[#allocation5 + $0x360] sm:$0xff]
    %v255 = vld [vmem:[#allocation5 + $0x368] sm:$0xff]
    %v256 = vld [vmem:[#allocation5 + $0x370] sm:$0xff]
    %v257 = vld [vmem:[#allocation5 + $0x378] sm:$0xff]
    %v258 = vld [vmem:[#allocation5 + $0x380] sm:$0xff]
    %v259 = vld [vmem:[#allocation5 + $0x388] sm:$0xff]
    %v260 = vld [vmem:[#allocation5 + $0x390] sm:$0xff]
    %v261 = vld [vmem:[#allocation5 + $0x398] sm:$0xff]
    %v262 = vld [vmem:[#allocation5 + $0x3a0] sm:$0xff]
    %v263 = vld [vmem:[#allocation5 + $0x3a8] sm:$0xff]
    %v264 = vld [vmem:[#allocation5 + $0x3b0] sm:$0xff]
    %v265 = vld [vmem:[#allocation5 + $0x3b8] sm:$0xff]
    %v266 = vld [vmem:[#allocation5 + $0x3c0] sm:$0xff]
    %v267 = vld [vmem:[#allocation5 + $0x3c8] sm:$0xff]
    %v268 = vld [vmem:[#allocation5 + $0x3d0] sm:$0xff]
    %v269 = vld [vmem:[#allocation5 + $0x3d8] sm:$0xff]
    %v270 = vld [vmem:[#allocation5 + $0x3e0] sm:$0xff]
    %v271 = vld [vmem:[#allocation5 + $0x3e8] sm:$0xff]
    %v272 = vld [vmem:[#allocation5 + $0x3f0] sm:$0xff]
    %v273 = vld [vmem:[#allocation5 + $0x3f8] sm:$0xff]
    %v274 = vld [vmem:[#allocation5 + $0x400] sm:$0xff]
    %v275 = vld [vmem:[#allocation5 + $0x408] sm:$0xff]
    %v276 = vld [vmem:[#allocation5 + $0x410] sm:$0xff]
    %v277 = vld [vmem:[#allocation5 + $0x418] sm:$0xff]
    %v278 = vld [vmem:[#allocation5 + $0x420] sm:$0xff]
    %v279 = vld [vmem:[#allocation5 + $0x428] sm:$0xff]
    %v280 = vld [vmem:[#allocation5 + $0x430] sm:$0xff]
    %v281 = vld [vmem:[#allocation5 + $0x438] sm:$0xff]
    %v282 = vld [vmem:[#allocation5 + $0x440] sm:$0xff]
    %v283 = vld [vmem:[#allocation5 + $0x448] sm:$0xff]
    %v284 = vld [vmem:[#allocation5 + $0x450] sm:$0xff]
    %v285 = vld [vmem:[#allocation5 + $0x458] sm:$0xff]
    %v286 = vld [vmem:[#allocation5 + $0x460] sm:$0xff]
    %v287 = vld [vmem:[#allocation5 + $0x468] sm:$0xff]
    %v288 = vld [vmem:[#allocation5 + $0x470] sm:$0xff]
    %v289 = vld [vmem:[#allocation5 + $0x478] sm:$0xff]
    %v290 = vld [vmem:[#allocation5 + $0x480] sm:$0xff]
    %v291 = vld [vmem:[#allocation5 + $0x488] sm:$0xff]
    %v292 = vld [vmem:[#allocation5 + $0x490] sm:$0xff]
    %v293 = vld [vmem:[#allocation5 + $0x498] sm:$0xff]
    %v294 = vld [vmem:[#allocation5 + $0x4a0] sm:$0xff]
    %v295 = vld [vmem:[#allocation5 + $0x4a8] sm:$0xff]
    %v296 = vld [vmem:[#allocation5 + $0x4b0] sm:$0xff]
    %v297 = vld [vmem:[#allocation5 + $0x4b8] sm:$0xff]
    %v298 = vld [vmem:[#allocation5 + $0x4c0] sm:$0xff]
    %v299 = vld [vmem:[#allocation5 + $0x4c8] sm:$0xff]
    %v300 = vld [vmem:[#allocation5 + $0x4d0] sm:$0xff]
    %v301 = vld [vmem:[#allocation5 + $0x4d8] sm:$0xff]
    %v302 = vld [vmem:[#allocation5 + $0x4e0] sm:$0xff]
    %v303 = vld [vmem:[#allocation5 + $0x4e8] sm:$0xff]
    %v304 = vld [vmem:[#allocation5 + $0x4f0] sm:$0xff]
    %v305 = vld [vmem:[#allocation5 + $0x4f8] sm:$0xff]
    %v306 = vld [vmem:[#allocation5 + $0x500] sm:$0xff]
    %v307 = vld [vmem:[#allocation5 + $0x508] sm:$0xff]
    %v308 = vld [vmem:[#allocation5 + $0x510] sm:$0xff]
    %v309 = vld [vmem:[#allocation5 + $0x518] sm:$0xff]
    %v310 = vld [vmem:[#allocation5 + $0x520] sm:$0xff]
    %v311 = vld [vmem:[#allocation5 + $0x528] sm:$0xff]
    %v312 = vld [vmem:[#allocation5 + $0x530] sm:$0xff]
    %v313 = vld [vmem:[#allocation5 + $0x538] sm:$0xff]
    %v314 = vld [vmem:[#allocation5 + $0x540] sm:$0xff]
    %v315 = vld [vmem:[#allocation5 + $0x548] sm:$0xff]
    %v316 = vld [vmem:[#allocation5 + $0x550] sm:$0xff]
    %v317 = vld [vmem:[#allocation5 + $0x558] sm:$0xff]
    %v318 = vld [vmem:[#allocation5 + $0x560] sm:$0xff]
    %v319 = vld [vmem:[#allocation5 + $0x568] sm:$0xff]
    %v320 = vld [vmem:[#allocation5 + $0x570] sm:$0xff]
    %v321 = vld [vmem:[#allocation5 + $0x578] sm:$0xff]
    %v322 = vld [vmem:[#allocation5 + $0x580] sm:$0xff]
    %v323 = vld [vmem:[#allocation5 + $0x588] sm:$0xff]
    %v324 = vld [vmem:[#allocation5 + $0x590] sm:$0xff]
    %v325 = vld [vmem:[#allocation5 + $0x598] sm:$0xff]
    %v326 = vld [vmem:[#allocation5 + $0x5a0] sm:$0xff]
    %v327 = vld [vmem:[#allocation5 + $0x5a8] sm:$0xff]
    %v328 = vld [vmem:[#allocation5 + $0x5b0] sm:$0xff]
    %v329 = vld [vmem:[#allocation5 + $0x5b8] sm:$0xff]
    %v330 = vld [vmem:[#allocation5 + $0x5c0] sm:$0xff]
    %v331 = vld [vmem:[#allocation5 + $0x5c8] sm:$0xff]
    %v332 = vld [vmem:[#allocation5 + $0x5d0] sm:$0xff]
    %v333 = vld [vmem:[#allocation5 + $0x5d8] sm:$0xff]
    %v334 = vld [vmem:[#allocation5 + $0x5e0] sm:$0xff]
    %v335 = vld [vmem:[#allocation5 + $0x5e8] sm:$0xff]
    %v336 = vld [vmem:[#allocation5 + $0x5f0] sm:$0xff]
    %v337 = vld [vmem:[#allocation5 + $0x5f8] sm:$0xff]
    %v338 = vld [vmem:[#allocation5 + $0x600] sm:$0xff]
    %v339 = vld [vmem:[#allocation5 + $0x608] sm:$0xff]
    %v340 = vld [vmem:[#allocation5 + $0x610] sm:$0xff]
    %v341 = vld [vmem:[#allocation5 + $0x618] sm:$0xff]
    %v342 = vld [vmem:[#allocation5 + $0x620] sm:$0xff]
    %v343 = vld [vmem:[#allocation5 + $0x628] sm:$0xff]
    %v344 = vld [vmem:[#allocation5 + $0x630] sm:$0xff]
    %v345 = vld [vmem:[#allocation5 + $0x638] sm:$0xff]
    %v346 = vld [vmem:[#allocation5 + $0x640] sm:$0xff]
    %v347 = vld [vmem:[#allocation5 + $0x648] sm:$0xff]
    %v348 = vld [vmem:[#allocation5 + $0x650] sm:$0xff]
    %v349 = vld [vmem:[#allocation5 + $0x658] sm:$0xff]
    %v350 = vld [vmem:[#allocation5 + $0x660] sm:$0xff]
    %v351 = vld [vmem:[#allocation5 + $0x668] sm:$0xff]
    %v352 = vld [vmem:[#allocation5 + $0x670] sm:$0xff]
    %v353 = vld [vmem:[#allocation5 + $0x678] sm:$0xff]
    %v354 = vld [vmem:[#allocation5 + $0x680] sm:$0xff]
    %v355 = vld [vmem:[#allocation5 + $0x688] sm:$0xff]
    %v356 = vld [vmem:[#allocation5 + $0x690] sm:$0xff]
    %v357 = vld [vmem:[#allocation5 + $0x698] sm:$0xff]
    %v358 = vld [vmem:[#allocation5 + $0x6a0] sm:$0xff]
    %v359 = vld [vmem:[#allocation5 + $0x6a8] sm:$0xff]
    %v360 = vld [vmem:[#allocation5 + $0x6b0] sm:$0xff]
    %v361 = vld [vmem:[#allocation5 + $0x6b8] sm:$0xff]
    %v362 = vld [vmem:[#allocation5 + $0x6c0] sm:$0xff]
    %v363 = vld [vmem:[#allocation5 + $0x6c8] sm:$0xff]
    %v364 = vld [vmem:[#allocation5 + $0x6d0] sm:$0xff]
    %v365 = vld [vmem:[#allocation5 + $0x6d8] sm:$0xff]
    %v366 = vld [vmem:[#allocation5 + $0x6e0] sm:$0xff]
    %v367 = vld [vmem:[#allocation5 + $0x6e8] sm:$0xff]
    %v368 = vld [vmem:[#allocation5 + $0x6f0] sm:$0xff]
    %v369 = vld [vmem:[#allocation5 + $0x6f8] sm:$0xff]
    %v370 = vld [vmem:[#allocation5 + $0x700] sm:$0xff]
    %v371 = vld [vmem:[#allocation5 + $0x708] sm:$0xff]
    %v372 = vld [vmem:[#allocation5 + $0x710] sm:$0xff]
    %v373 = vld [vmem:[#allocation5 + $0x718] sm:$0xff]
    %v374 = vld [vmem:[#allocation5 + $0x720] sm:$0xff]
    %v375 = vld [vmem:[#allocation5 + $0x728] sm:$0xff]
    %v376 = vld [vmem:[#allocation5 + $0x730] sm:$0xff]
    %v377 = vld [vmem:[#allocation5 + $0x738] sm:$0xff]
    %v378 = vld [vmem:[#allocation5 + $0x740] sm:$0xff]
    %v379 = vld [vmem:[#allocation5 + $0x748] sm:$0xff]
    %v380 = vld [vmem:[#allocation5 + $0x750] sm:$0xff]
    %v381 = vld [vmem:[#allocation5 + $0x758] sm:$0xff]
    %v382 = vld [vmem:[#allocation5 + $0x760] sm:$0xff]
    %v383 = vld [vmem:[#allocation5 + $0x768] sm:$0xff]
    %v384 = vld [vmem:[#allocation5 + $0x770] sm:$0xff]
    %v385 = vld [vmem:[#allocation5 + $0x778] sm:$0xff]
    %v386 = vld [vmem:[#allocation5 + $0x780] sm:$0xff]
    %v387 = vld [vmem:[#allocation5 + $0x788] sm:$0xff]
    %v388 = vld [vmem:[#allocation5 + $0x790] sm:$0xff]
    %v389 = vld [vmem:[#allocation5 + $0x798] sm:$0xff]
    %v390 = vld [vmem:[#allocation5 + $0x7a0] sm:$0xff]
    %v391 = vld [vmem:[#allocation5 + $0x7a8] sm:$0xff]
    %v392 = vld [vmem:[#allocation5 + $0x7b0] sm:$0xff]
    %v393 = vld [vmem:[#allocation5 + $0x7b8] sm:$0xff]
    %v394 = vld [vmem:[#allocation5 + $0x7c0] sm:$0xff]
    %v395 = vld [vmem:[#allocation5 + $0x7c8] sm:$0xff]
    %v396 = vld [vmem:[%s2] sm:$0xf]
    %v398 = vlaneseq
    %v399 = vshrl.u32 %v398, 7
    %v400 = vsub.s32 0, %v399
    %v401 = vrot.slane %v396, %v400
    %v402 = vlaneseq
    %v403 = vshrl.u32 %v402, 7
    %v404 = vsub.s32 1, %v403
    %v405 = vrot.slane %v396, %v404
    %v406 = vlaneseq
    %v407 = vshrl.u32 %v406, 7
    %v408 = vsub.s32 2, %v407
    %v409 = vrot.slane %v396, %v408
    %v410 = vlaneseq
    %v411 = vshrl.u32 %v410, 7
    %v412 = vsub.s32 3, %v411
    %v413 = vrot.slane %v396, %v412
    %v668 = vunpack.c.l.b16 %v146
    %v669 = vunpack.c.h.b16 %v146
    %v670 = vunpack.c.l.b16 %v147
    %v671 = vunpack.c.h.b16 %v147
    %v672 = vunpack.c.l.b16 %v148
    %v673 = vunpack.c.h.b16 %v148
    %v674 = vunpack.c.l.b16 %v149
    %v675 = vunpack.c.h.b16 %v149
    %v676 = vunpack.c.l.b16 %v150
    %v677 = vunpack.c.h.b16 %v150
    %v678 = vunpack.c.l.b16 %v151
    %v679 = vunpack.c.h.b16 %v151
    %v680 = vunpack.c.l.b16 %v152
    %v681 = vunpack.c.h.b16 %v152
    %v682 = vunpack.c.l.b16 %v153
    %v683 = vunpack.c.h.b16 %v153
    %v684 = vunpack.c.l.b16 %v154
    %v685 = vunpack.c.h.b16 %v154
    %v686 = vunpack.c.l.b16 %v155
    %v687 = vunpack.c.h.b16 %v155
    %v688 = vunpack.c.l.b16 %v156
    %v689 = vunpack.c.h.b16 %v156
    %v690 = vunpack.c.l.b16 %v157
    %v691 = vunpack.c.h.b16 %v157
    %v692 = vunpack.c.l.b16 %v158
    %v693 = vunpack.c.h.b16 %v158
    %v694 = vunpack.c.l.b16 %v159
    %v695 = vunpack.c.h.b16 %v159
    %v696 = vunpack.c.l.b16 %v160
    %v697 = vunpack.c.h.b16 %v160
    %v698 = vunpack.c.l.b16 %v161
    %v699 = vunpack.c.h.b16 %v161
    %v700 = vunpack.c.l.b16 %v162
    %v701 = vunpack.c.h.b16 %v162
    %v702 = vunpack.c.l.b16 %v163
    %v703 = vunpack.c.h.b16 %v163
    %v704 = vunpack.c.l.b16 %v164
    %v705 = vunpack.c.h.b16 %v164
    %v706 = vunpack.c.l.b16 %v165
    %v707 = vunpack.c.h.b16 %v165
    %v708 = vunpack.c.l.b16 %v166
    %v709 = vunpack.c.h.b16 %v166
    %v710 = vunpack.c.l.b16 %v167
    %v711 = vunpack.c.h.b16 %v167
    %v712 = vunpack.c.l.b16 %v168
    %v713 = vunpack.c.h.b16 %v168
    %v714 = vunpack.c.l.b16 %v169
    %v715 = vunpack.c.h.b16 %v169
    %v716 = vunpack.c.l.b16 %v170
    %v717 = vunpack.c.h.b16 %v170
    %v718 = vunpack.c.l.b16 %v171
    %v719 = vunpack.c.h.b16 %v171
    %v720 = vunpack.c.l.b16 %v172
    %v721 = vunpack.c.h.b16 %v172
    %v722 = vunpack.c.l.b16 %v173
    %v723 = vunpack.c.h.b16 %v173
    %v724 = vunpack.c.l.b16 %v174
    %v725 = vunpack.c.h.b16 %v174
    %v726 = vunpack.c.l.b16 %v175
    %v727 = vunpack.c.h.b16 %v175
    %v728 = vunpack.c.l.b16 %v176
    %v729 = vunpack.c.h.b16 %v176
    %v730 = vunpack.c.l.b16 %v177
    %v731 = vunpack.c.h.b16 %v177
    %v732 = vunpack.c.l.b16 %v178
    %v733 = vunpack.c.h.b16 %v178
    %v734 = vunpack.c.l.b16 %v179
    %v735 = vunpack.c.h.b16 %v179
    %v736 = vunpack.c.l.b16 %v180
    %v737 = vunpack.c.h.b16 %v180
    %v738 = vunpack.c.l.b16 %v181
    %v739 = vunpack.c.h.b16 %v181
    %v740 = vunpack.c.l.b16 %v182
    %v741 = vunpack.c.h.b16 %v182
    %v742 = vunpack.c.l.b16 %v183
    %v743 = vunpack.c.h.b16 %v183
    %v744 = vunpack.c.l.b16 %v184
    %v745 = vunpack.c.h.b16 %v184
    %v746 = vunpack.c.l.b16 %v185
    %v747 = vunpack.c.h.b16 %v185
    %v748 = vunpack.c.l.b16 %v186
    %v749 = vunpack.c.h.b16 %v186
    %v750 = vunpack.c.l.b16 %v187
    %v751 = vunpack.c.h.b16 %v187
    %v752 = vunpack.c.l.b16 %v188
    %v753 = vunpack.c.h.b16 %v188
    %v754 = vunpack.c.l.b16 %v189
    %v755 = vunpack.c.h.b16 %v189
    %v756 = vunpack.c.l.b16 %v190
    %v757 = vunpack.c.h.b16 %v190
    %v758 = vunpack.c.l.b16 %v191
    %v759 = vunpack.c.h.b16 %v191
    %v760 = vunpack.c.l.b16 %v192
    %v761 = vunpack.c.h.b16 %v192
    %v762 = vunpack.c.l.b16 %v193
    %v763 = vunpack.c.h.b16 %v193
    %v764 = vunpack.c.l.b16 %v194
    %v765 = vunpack.c.h.b16 %v194
    %v766 = vunpack.c.l.b16 %v195
    %v767 = vunpack.c.h.b16 %v195
    %v768 = vunpack.c.l.b16 %v196
    %v769 = vunpack.c.h.b16 %v196
    %v770 = vunpack.c.l.b16 %v197
    %v771 = vunpack.c.h.b16 %v197
    %v772 = vunpack.c.l.b16 %v198
    %v773 = vunpack.c.h.b16 %v198
    %v774 = vunpack.c.l.b16 %v199
    %v775 = vunpack.c.h.b16 %v199
    %v776 = vunpack.c.l.b16 %v200
    %v777 = vunpack.c.h.b16 %v200
    %v778 = vunpack.c.l.b16 %v201
    %v779 = vunpack.c.h.b16 %v201
    %v780 = vunpack.c.l.b16 %v202
    %v781 = vunpack.c.h.b16 %v202
    %v782 = vunpack.c.l.b16 %v203
    %v783 = vunpack.c.h.b16 %v203
    %v784 = vunpack.c.l.b16 %v204
    %v785 = vunpack.c.h.b16 %v204
    %v786 = vunpack.c.l.b16 %v205
    %v787 = vunpack.c.h.b16 %v205
    %v788 = vunpack.c.l.b16 %v206
    %v789 = vunpack.c.h.b16 %v206
    %v790 = vunpack.c.l.b16 %v207
    %v791 = vunpack.c.h.b16 %v207
    %v792 = vunpack.c.l.b16 %v208
    %v793 = vunpack.c.h.b16 %v208
    %v794 = vunpack.c.l.b16 %v209
    %v795 = vunpack.c.h.b16 %v209
    %v796 = vunpack.c.l.b16 %v210
    %v797 = vunpack.c.h.b16 %v210
    %v798 = vunpack.c.l.b16 %v211
    %v799 = vunpack.c.h.b16 %v211
    %v800 = vunpack.c.l.b16 %v212
    %v801 = vunpack.c.h.b16 %v212
    %v802 = vunpack.c.l.b16 %v213
    %v803 = vunpack.c.h.b16 %v213
    %v804 = vunpack.c.l.b16 %v214
    %v805 = vunpack.c.h.b16 %v214
    %v806 = vunpack.c.l.b16 %v215
    %v807 = vunpack.c.h.b16 %v215
    %v808 = vunpack.c.l.b16 %v216
    %v809 = vunpack.c.h.b16 %v216
    %v810 = vunpack.c.l.b16 %v217
    %v811 = vunpack.c.h.b16 %v217
    %v812 = vunpack.c.l.b16 %v218
    %v813 = vunpack.c.h.b16 %v218
    %v814 = vunpack.c.l.b16 %v219
    %v815 = vunpack.c.h.b16 %v219
    %v816 = vunpack.c.l.b16 %v220
    %v817 = vunpack.c.h.b16 %v220
    %v818 = vunpack.c.l.b16 %v221
    %v819 = vunpack.c.h.b16 %v221
    %v820 = vunpack.c.l.b16 %v222
    %v821 = vunpack.c.h.b16 %v222
    %v822 = vunpack.c.l.b16 %v223
    %v823 = vunpack.c.h.b16 %v223
    %v824 = vunpack.c.l.b16 %v224
    %v825 = vunpack.c.h.b16 %v224
    %v826 = vunpack.c.l.b16 %v225
    %v827 = vunpack.c.h.b16 %v225
    %v828 = vunpack.c.l.b16 %v226
    %v829 = vunpack.c.h.b16 %v226
    %v830 = vunpack.c.l.b16 %v227
    %v831 = vunpack.c.h.b16 %v227
    %v832 = vunpack.c.l.b16 %v228
    %v833 = vunpack.c.h.b16 %v228
    %v834 = vunpack.c.l.b16 %v229
    %v835 = vunpack.c.h.b16 %v229
    %v836 = vunpack.c.l.b16 %v230
    %v837 = vunpack.c.h.b16 %v230
    %v838 = vunpack.c.l.b16 %v231
    %v839 = vunpack.c.h.b16 %v231
    %v840 = vunpack.c.l.b16 %v232
    %v841 = vunpack.c.h.b16 %v232
    %v842 = vunpack.c.l.b16 %v233
    %v843 = vunpack.c.h.b16 %v233
    %v844 = vunpack.c.l.b16 %v234
    %v845 = vunpack.c.h.b16 %v234
    %v846 = vunpack.c.l.b16 %v235
    %v847 = vunpack.c.h.b16 %v235
    %v848 = vunpack.c.l.b16 %v236
    %v849 = vunpack.c.h.b16 %v236
    %v850 = vunpack.c.l.b16 %v237
    %v851 = vunpack.c.h.b16 %v237
    %v852 = vunpack.c.l.b16 %v238
    %v853 = vunpack.c.h.b16 %v238
    %v854 = vunpack.c.l.b16 %v239
    %v855 = vunpack.c.h.b16 %v239
    %v856 = vunpack.c.l.b16 %v240
    %v857 = vunpack.c.h.b16 %v240
    %v858 = vunpack.c.l.b16 %v241
    %v859 = vunpack.c.h.b16 %v241
    %v860 = vunpack.c.l.b16 %v242
    %v861 = vunpack.c.h.b16 %v242
    %v862 = vunpack.c.l.b16 %v243
    %v863 = vunpack.c.h.b16 %v243
    %v864 = vunpack.c.l.b16 %v244
    %v865 = vunpack.c.h.b16 %v244
    %v866 = vunpack.c.l.b16 %v245
    %v867 = vunpack.c.h.b16 %v245
    %v868 = vunpack.c.l.b16 %v246
    %v869 = vunpack.c.h.b16 %v246
    %v870 = vunpack.c.l.b16 %v247
    %v871 = vunpack.c.h.b16 %v247
    %v872 = vunpack.c.l.b16 %v248
    %v873 = vunpack.c.h.b16 %v248
    %v874 = vunpack.c.l.b16 %v249
    %v875 = vunpack.c.h.b16 %v249
    %v876 = vunpack.c.l.b16 %v250
    %v877 = vunpack.c.h.b16 %v250
    %v878 = vunpack.c.l.b16 %v251
    %v879 = vunpack.c.h.b16 %v251
    %v880 = vunpack.c.l.b16 %v252
    %v881 = vunpack.c.h.b16 %v252
    %v882 = vunpack.c.l.b16 %v253
    %v883 = vunpack.c.h.b16 %v253
    %v884 = vunpack.c.l.b16 %v254
    %v885 = vunpack.c.h.b16 %v254
    %v886 = vunpack.c.l.b16 %v255
    %v887 = vunpack.c.h.b16 %v255
    %v888 = vunpack.c.l.b16 %v256
    %v889 = vunpack.c.h.b16 %v256
    %v890 = vunpack.c.l.b16 %v257
    %v891 = vunpack.c.h.b16 %v257
    %v892 = vunpack.c.l.b16 %v258
    %v893 = vunpack.c.h.b16 %v258
    %v894 = vunpack.c.l.b16 %v259
    %v895 = vunpack.c.h.b16 %v259
    %v896 = vunpack.c.l.b16 %v260
    %v897 = vunpack.c.h.b16 %v260
    %v898 = vunpack.c.l.b16 %v261
    %v899 = vunpack.c.h.b16 %v261
    %v900 = vunpack.c.l.b16 %v262
    %v901 = vunpack.c.h.b16 %v262
    %v902 = vunpack.c.l.b16 %v263
    %v903 = vunpack.c.h.b16 %v263
    %v904 = vunpack.c.l.b16 %v264
    %v905 = vunpack.c.h.b16 %v264
    %v906 = vunpack.c.l.b16 %v265
    %v907 = vunpack.c.h.b16 %v265
    %v908 = vunpack.c.l.b16 %v266
    %v909 = vunpack.c.h.b16 %v266
    %v910 = vunpack.c.l.b16 %v267
    %v911 = vunpack.c.h.b16 %v267
    %v912 = vunpack.c.l.b16 %v268
    %v913 = vunpack.c.h.b16 %v268
    %v914 = vunpack.c.l.b16 %v269
    %v915 = vunpack.c.h.b16 %v269
    %v916 = vunpack.c.l.b16 %v270
    %v917 = vunpack.c.h.b16 %v270
    %v918 = vunpack.c.l.b16 %v271
    %v919 = vunpack.c.h.b16 %v271
    %v920 = vunpack.c.l.b16 %v272
    %v921 = vunpack.c.h.b16 %v272
    %v922 = vunpack.c.l.b16 %v273
    %v923 = vunpack.c.h.b16 %v273
    %v924 = vunpack.c.l.b16 %v274
    %v925 = vunpack.c.h.b16 %v274
    %v926 = vunpack.c.l.b16 %v275
    %v927 = vunpack.c.h.b16 %v275
    %v928 = vunpack.c.l.b16 %v276
    %v929 = vunpack.c.h.b16 %v276
    %v930 = vunpack.c.l.b16 %v277
    %v931 = vunpack.c.h.b16 %v277
    %v932 = vunpack.c.l.b16 %v278
    %v933 = vunpack.c.h.b16 %v278
    %v934 = vunpack.c.l.b16 %v279
    %v935 = vunpack.c.h.b16 %v279
    %v936 = vunpack.c.l.b16 %v280
    %v937 = vunpack.c.h.b16 %v280
    %v938 = vunpack.c.l.b16 %v281
    %v939 = vunpack.c.h.b16 %v281
    %v940 = vunpack.c.l.b16 %v282
    %v941 = vunpack.c.h.b16 %v282
    %v942 = vunpack.c.l.b16 %v283
    %v943 = vunpack.c.h.b16 %v283
    %v944 = vunpack.c.l.b16 %v284
    %v945 = vunpack.c.h.b16 %v284
    %v946 = vunpack.c.l.b16 %v285
    %v947 = vunpack.c.h.b16 %v285
    %v948 = vunpack.c.l.b16 %v286
    %v949 = vunpack.c.h.b16 %v286
    %v950 = vunpack.c.l.b16 %v287
    %v951 = vunpack.c.h.b16 %v287
    %v952 = vunpack.c.l.b16 %v288
    %v953 = vunpack.c.h.b16 %v288
    %v954 = vunpack.c.l.b16 %v289
    %v955 = vunpack.c.h.b16 %v289
    %v956 = vunpack.c.l.b16 %v290
    %v957 = vunpack.c.h.b16 %v290
    %v958 = vunpack.c.l.b16 %v291
    %v959 = vunpack.c.h.b16 %v291
    %v960 = vunpack.c.l.b16 %v292
    %v961 = vunpack.c.h.b16 %v292
    %v962 = vunpack.c.l.b16 %v293
    %v963 = vunpack.c.h.b16 %v293
    %v964 = vunpack.c.l.b16 %v294
    %v965 = vunpack.c.h.b16 %v294
    %v966 = vunpack.c.l.b16 %v295
    %v967 = vunpack.c.h.b16 %v295
    %v968 = vunpack.c.l.b16 %v296
    %v969 = vunpack.c.h.b16 %v296
    %v970 = vunpack.c.l.b16 %v297
    %v971 = vunpack.c.h.b16 %v297
    %v972 = vunpack.c.l.b16 %v298
    %v973 = vunpack.c.h.b16 %v298
    %v974 = vunpack.c.l.b16 %v299
    %v975 = vunpack.c.h.b16 %v299
    %v976 = vunpack.c.l.b16 %v300
    %v977 = vunpack.c.h.b16 %v300
    %v978 = vunpack.c.l.b16 %v301
    %v979 = vunpack.c.h.b16 %v301
    %v980 = vunpack.c.l.b16 %v302
    %v981 = vunpack.c.h.b16 %v302
    %v982 = vunpack.c.l.b16 %v303
    %v983 = vunpack.c.h.b16 %v303
    %v984 = vunpack.c.l.b16 %v304
    %v985 = vunpack.c.h.b16 %v304
    %v986 = vunpack.c.l.b16 %v305
    %v987 = vunpack.c.h.b16 %v305
    %v988 = vunpack.c.l.b16 %v306
    %v989 = vunpack.c.h.b16 %v306
    %v990 = vunpack.c.l.b16 %v307
    %v991 = vunpack.c.h.b16 %v307
    %v992 = vunpack.c.l.b16 %v308
    %v993 = vunpack.c.h.b16 %v308
    %v994 = vunpack.c.l.b16 %v309
    %v995 = vunpack.c.h.b16 %v309
    %v996 = vunpack.c.l.b16 %v310
    %v997 = vunpack.c.h.b16 %v310
    %v998 = vunpack.c.l.b16 %v311
    %v999 = vunpack.c.h.b16 %v311
    %v1000 = vunpack.c.l.b16 %v312
    %v1001 = vunpack.c.h.b16 %v312
    %v1002 = vunpack.c.l.b16 %v313
    %v1003 = vunpack.c.h.b16 %v313
    %v1004 = vunpack.c.l.b16 %v314
    %v1005 = vunpack.c.h.b16 %v314
    %v1006 = vunpack.c.l.b16 %v315
    %v1007 = vunpack.c.h.b16 %v315
    %v1008 = vunpack.c.l.b16 %v316
    %v1009 = vunpack.c.h.b16 %v316
    %v1010 = vunpack.c.l.b16 %v317
    %v1011 = vunpack.c.h.b16 %v317
    %v1012 = vunpack.c.l.b16 %v318
    %v1013 = vunpack.c.h.b16 %v318
    %v1014 = vunpack.c.l.b16 %v319
    %v1015 = vunpack.c.h.b16 %v319
    %v1016 = vunpack.c.l.b16 %v320
    %v1017 = vunpack.c.h.b16 %v320
    %v1018 = vunpack.c.l.b16 %v321
    %v1019 = vunpack.c.h.b16 %v321
    %v1020 = vunpack.c.l.b16 %v322
    %v1021 = vunpack.c.h.b16 %v322
    %v1022 = vunpack.c.l.b16 %v323
    %v1023 = vunpack.c.h.b16 %v323
    %v1024 = vunpack.c.l.b16 %v324
    %v1025 = vunpack.c.h.b16 %v324
    %v1026 = vunpack.c.l.b16 %v325
    %v1027 = vunpack.c.h.b16 %v325
    %v1028 = vunpack.c.l.b16 %v326
    %v1029 = vunpack.c.h.b16 %v326
    %v1030 = vunpack.c.l.b16 %v327
    %v1031 = vunpack.c.h.b16 %v327
    %v1032 = vunpack.c.l.b16 %v328
    %v1033 = vunpack.c.h.b16 %v328
    %v1034 = vunpack.c.l.b16 %v329
    %v1035 = vunpack.c.h.b16 %v329
    %v1036 = vunpack.c.l.b16 %v330
    %v1037 = vunpack.c.h.b16 %v330
    %v1038 = vunpack.c.l.b16 %v331
    %v1039 = vunpack.c.h.b16 %v331
    %v1040 = vunpack.c.l.b16 %v332
    %v1041 = vunpack.c.h.b16 %v332
    %v1042 = vunpack.c.l.b16 %v333
    %v1043 = vunpack.c.h.b16 %v333
    %v1044 = vunpack.c.l.b16 %v334
    %v1045 = vunpack.c.h.b16 %v334
    %v1046 = vunpack.c.l.b16 %v335
    %v1047 = vunpack.c.h.b16 %v335
    %v1048 = vunpack.c.l.b16 %v336
    %v1049 = vunpack.c.h.b16 %v336
    %v1050 = vunpack.c.l.b16 %v337
    %v1051 = vunpack.c.h.b16 %v337
    %v1052 = vunpack.c.l.b16 %v338
    %v1053 = vunpack.c.h.b16 %v338
    %v1054 = vunpack.c.l.b16 %v339
    %v1055 = vunpack.c.h.b16 %v339
    %v1056 = vunpack.c.l.b16 %v340
    %v1057 = vunpack.c.h.b16 %v340
    %v1058 = vunpack.c.l.b16 %v341
    %v1059 = vunpack.c.h.b16 %v341
    %v1060 = vunpack.c.l.b16 %v342
    %v1061 = vunpack.c.h.b16 %v342
    %v1062 = vunpack.c.l.b16 %v343
    %v1063 = vunpack.c.h.b16 %v343
    %v1064 = vunpack.c.l.b16 %v344
    %v1065 = vunpack.c.h.b16 %v344
    %v1066 = vunpack.c.l.b16 %v345
    %v1067 = vunpack.c.h.b16 %v345
    %v1068 = vunpack.c.l.b16 %v346
    %v1069 = vunpack.c.h.b16 %v346
    %v1070 = vunpack.c.l.b16 %v347
    %v1071 = vunpack.c.h.b16 %v347
    %v1072 = vunpack.c.l.b16 %v348
    %v1073 = vunpack.c.h.b16 %v348
    %v1074 = vunpack.c.l.b16 %v349
    %v1075 = vunpack.c.h.b16 %v349
    %v1076 = vunpack.c.l.b16 %v350
    %v1077 = vunpack.c.h.b16 %v350
    %v1078 = vunpack.c.l.b16 %v351
    %v1079 = vunpack.c.h.b16 %v351
    %v1080 = vunpack.c.l.b16 %v352
    %v1081 = vunpack.c.h.b16 %v352
    %v1082 = vunpack.c.l.b16 %v353
    %v1083 = vunpack.c.h.b16 %v353
    %v1084 = vunpack.c.l.b16 %v354
    %v1085 = vunpack.c.h.b16 %v354
    %v1086 = vunpack.c.l.b16 %v355
    %v1087 = vunpack.c.h.b16 %v355
    %v1088 = vunpack.c.l.b16 %v356
    %v1089 = vunpack.c.h.b16 %v356
    %v1090 = vunpack.c.l.b16 %v357
    %v1091 = vunpack.c.h.b16 %v357
    %v1092 = vunpack.c.l.b16 %v358
    %v1093 = vunpack.c.h.b16 %v358
    %v1094 = vunpack.c.l.b16 %v359
    %v1095 = vunpack.c.h.b16 %v359
    %v1096 = vunpack.c.l.b16 %v360
    %v1097 = vunpack.c.h.b16 %v360
    %v1098 = vunpack.c.l.b16 %v361
    %v1099 = vunpack.c.h.b16 %v361
    %v1100 = vunpack.c.l.b16 %v362
    %v1101 = vunpack.c.h.b16 %v362
    %v1102 = vunpack.c.l.b16 %v363
    %v1103 = vunpack.c.h.b16 %v363
    %v1104 = vunpack.c.l.b16 %v364
    %v1105 = vunpack.c.h.b16 %v364
    %v1106 = vunpack.c.l.b16 %v365
    %v1107 = vunpack.c.h.b16 %v365
    %v1108 = vunpack.c.l.b16 %v366
    %v1109 = vunpack.c.h.b16 %v366
    %v1110 = vunpack.c.l.b16 %v367
    %v1111 = vunpack.c.h.b16 %v367
    %v1112 = vunpack.c.l.b16 %v368
    %v1113 = vunpack.c.h.b16 %v368
    %v1114 = vunpack.c.l.b16 %v369
    %v1115 = vunpack.c.h.b16 %v369
    %v1116 = vunpack.c.l.b16 %v370
    %v1117 = vunpack.c.h.b16 %v370
    %v1118 = vunpack.c.l.b16 %v371
    %v1119 = vunpack.c.h.b16 %v371
    %v1120 = vunpack.c.l.b16 %v372
    %v1121 = vunpack.c.h.b16 %v372
    %v1122 = vunpack.c.l.b16 %v373
    %v1123 = vunpack.c.h.b16 %v373
    %v1124 = vunpack.c.l.b16 %v374
    %v1125 = vunpack.c.h.b16 %v374
    %v1126 = vunpack.c.l.b16 %v375
    %v1127 = vunpack.c.h.b16 %v375
    %v1128 = vunpack.c.l.b16 %v376
    %v1129 = vunpack.c.h.b16 %v376
    %v1130 = vunpack.c.l.b16 %v377
    %v1131 = vunpack.c.h.b16 %v377
    %v1132 = vunpack.c.l.b16 %v378
    %v1133 = vunpack.c.h.b16 %v378
    %v1134 = vunpack.c.l.b16 %v379
    %v1135 = vunpack.c.h.b16 %v379
    %v1136 = vunpack.c.l.b16 %v380
    %v1137 = vunpack.c.h.b16 %v380
    %v1138 = vunpack.c.l.b16 %v381
    %v1139 = vunpack.c.h.b16 %v381
    %v1140 = vunpack.c.l.b16 %v382
    %v1141 = vunpack.c.h.b16 %v382
    %v1142 = vunpack.c.l.b16 %v383
    %v1143 = vunpack.c.h.b16 %v383
    %v1144 = vunpack.c.l.b16 %v384
    %v1145 = vunpack.c.h.b16 %v384
    %v1146 = vunpack.c.l.b16 %v385
    %v1147 = vunpack.c.h.b16 %v385
    %v1148 = vunpack.c.l.b16 %v386
    %v1149 = vunpack.c.h.b16 %v386
    %v1150 = vunpack.c.l.b16 %v387
    %v1151 = vunpack.c.h.b16 %v387
    %v1152 = vunpack.c.l.b16 %v388
    %v1153 = vunpack.c.h.b16 %v388
    %v1154 = vunpack.c.l.b16 %v389
    %v1155 = vunpack.c.h.b16 %v389
    %v1156 = vunpack.c.l.b16 %v390
    %v1157 = vunpack.c.h.b16 %v390
    %v1158 = vunpack.c.l.b16 %v391
    %v1159 = vunpack.c.h.b16 %v391
    %v1160 = vunpack.c.l.b16 %v392
    %v1161 = vunpack.c.h.b16 %v392
    %v1162 = vunpack.c.l.b16 %v393
    %v1163 = vunpack.c.h.b16 %v393
    %v1164 = vunpack.c.l.b16 %v394
    %v1165 = vunpack.c.h.b16 %v394
    %v1166 = vunpack.c.l.b16 %v395
    %v1167 = vunpack.c.h.b16 %v395
    %v1168 = vpack.c.b16 %v672, %v668
    %v1169 = vpack.c.b16 %v673, %v669
    %v1170 = vpack.c.b16 %v674, %v670
    %v1171 = vpack.c.b16 %v675, %v671
    %v1172 = vpack.c.b16 %v680, %v676
    %v1173 = vpack.c.b16 %v681, %v677
    %v1174 = vpack.c.b16 %v682, %v678
    %v1175 = vpack.c.b16 %v683, %v679
    %v1176 = vpack.c.b16 %v688, %v684
    %v1177 = vpack.c.b16 %v689, %v685
    %v1178 = vpack.c.b16 %v690, %v686
    %v1179 = vpack.c.b16 %v691, %v687
    %v1180 = vpack.c.b16 %v696, %v692
    %v1181 = vpack.c.b16 %v697, %v693
    %v1182 = vpack.c.b16 %v698, %v694
    %v1183 = vpack.c.b16 %v699, %v695
    %v1184 = vpack.c.b16 %v704, %v700
    %v1185 = vpack.c.b16 %v705, %v701
    %v1186 = vpack.c.b16 %v706, %v702
    %v1187 = vpack.c.b16 %v707, %v703
    %v1188 = vpack.c.b16 %v712, %v708
    %v1189 = vpack.c.b16 %v713, %v709
    %v1190 = vpack.c.b16 %v714, %v710
    %v1191 = vpack.c.b16 %v715, %v711
    %v1192 = vpack.c.b16 %v720, %v716
    %v1193 = vpack.c.b16 %v721, %v717
    %v1194 = vpack.c.b16 %v722, %v718
    %v1195 = vpack.c.b16 %v723, %v719
    %v1196 = vpack.c.b16 %v728, %v724
    %v1197 = vpack.c.b16 %v729, %v725
    %v1198 = vpack.c.b16 %v730, %v726
    %v1199 = vpack.c.b16 %v731, %v727
    %v1200 = vpack.c.b16 %v736, %v732
    %v1201 = vpack.c.b16 %v737, %v733
    %v1202 = vpack.c.b16 %v738, %v734
    %v1203 = vpack.c.b16 %v739, %v735
    %v1204 = vpack.c.b16 %v744, %v740
    %v1205 = vpack.c.b16 %v745, %v741
    %v1206 = vpack.c.b16 %v746, %v742
    %v1207 = vpack.c.b16 %v747, %v743
    %v1208 = vpack.c.b16 %v752, %v748
    %v1209 = vpack.c.b16 %v753, %v749
    %v1210 = vpack.c.b16 %v754, %v750
    %v1211 = vpack.c.b16 %v755, %v751
    %v1212 = vpack.c.b16 %v760, %v756
    %v1213 = vpack.c.b16 %v761, %v757
    %v1214 = vpack.c.b16 %v762, %v758
    %v1215 = vpack.c.b16 %v763, %v759
    %v1216 = vpack.c.b16 %v768, %v764
    %v1217 = vpack.c.b16 %v769, %v765
    %v1218 = vpack.c.b16 %v770, %v766
    %v1219 = vpack.c.b16 %v771, %v767
    %v1220 = vpack.c.b16 %v776, %v772
    %v1221 = vpack.c.b16 %v777, %v773
    %v1222 = vpack.c.b16 %v778, %v774
    %v1223 = vpack.c.b16 %v779, %v775
    %v1224 = vpack.c.b16 %v784, %v780
    %v1225 = vpack.c.b16 %v785, %v781
    %v1226 = vpack.c.b16 %v786, %v782
    %v1227 = vpack.c.b16 %v787, %v783
    %v1228 = vpack.c.b16 %v792, %v788
    %v1229 = vpack.c.b16 %v793, %v789
    %v1230 = vpack.c.b16 %v794, %v790
    %v1231 = vpack.c.b16 %v795, %v791
    %v1232 = vpack.c.b16 %v800, %v796
    %v1233 = vpack.c.b16 %v801, %v797
    %v1234 = vpack.c.b16 %v802, %v798
    %v1235 = vpack.c.b16 %v803, %v799
    %v1236 = vpack.c.b16 %v808, %v804
    %v1237 = vpack.c.b16 %v809, %v805
    %v1238 = vpack.c.b16 %v810, %v806
    %v1239 = vpack.c.b16 %v811, %v807
    %v1240 = vpack.c.b16 %v816, %v812
    %v1241 = vpack.c.b16 %v817, %v813
    %v1242 = vpack.c.b16 %v818, %v814
    %v1243 = vpack.c.b16 %v819, %v815
    %v1244 = vpack.c.b16 %v824, %v820
    %v1245 = vpack.c.b16 %v825, %v821
    %v1246 = vpack.c.b16 %v826, %v822
    %v1247 = vpack.c.b16 %v827, %v823
    %v1248 = vpack.c.b16 %v832, %v828
    %v1249 = vpack.c.b16 %v833, %v829
    %v1250 = vpack.c.b16 %v834, %v830
    %v1251 = vpack.c.b16 %v835, %v831
    %v1252 = vpack.c.b16 %v840, %v836
    %v1253 = vpack.c.b16 %v841, %v837
    %v1254 = vpack.c.b16 %v842, %v838
    %v1255 = vpack.c.b16 %v843, %v839
    %v1256 = vpack.c.b16 %v848, %v844
    %v1257 = vpack.c.b16 %v849, %v845
    %v1258 = vpack.c.b16 %v850, %v846
    %v1259 = vpack.c.b16 %v851, %v847
    %v1260 = vpack.c.b16 %v856, %v852
    %v1261 = vpack.c.b16 %v857, %v853
    %v1262 = vpack.c.b16 %v858, %v854
    %v1263 = vpack.c.b16 %v859, %v855
    %v1264 = vpack.c.b16 %v864, %v860
    %v1265 = vpack.c.b16 %v865, %v861
    %v1266 = vpack.c.b16 %v866, %v862
    %v1267 = vpack.c.b16 %v867, %v863
    %v1268 = vpack.c.b16 %v872, %v868
    %v1269 = vpack.c.b16 %v873, %v869
    %v1270 = vpack.c.b16 %v874, %v870
    %v1271 = vpack.c.b16 %v875, %v871
    %v1272 = vpack.c.b16 %v880, %v876
    %v1273 = vpack.c.b16 %v881, %v877
    %v1274 = vpack.c.b16 %v882, %v878
    %v1275 = vpack.c.b16 %v883, %v879
    %v1276 = vpack.c.b16 %v888, %v884
    %v1277 = vpack.c.b16 %v889, %v885
    %v1278 = vpack.c.b16 %v890, %v886
    %v1279 = vpack.c.b16 %v891, %v887
    %v1280 = vpack.c.b16 %v896, %v892
    %v1281 = vpack.c.b16 %v897, %v893
    %v1282 = vpack.c.b16 %v898, %v894
    %v1283 = vpack.c.b16 %v899, %v895
    %v1284 = vpack.c.b16 %v904, %v900
    %v1285 = vpack.c.b16 %v905, %v901
    %v1286 = vpack.c.b16 %v906, %v902
    %v1287 = vpack.c.b16 %v907, %v903
    %v1288 = vpack.c.b16 %v912, %v908
    %v1289 = vpack.c.b16 %v913, %v909
    %v1290 = vpack.c.b16 %v914, %v910
    %v1291 = vpack.c.b16 %v915, %v911
    %v1292 = vpack.c.b16 %v920, %v916
    %v1293 = vpack.c.b16 %v921, %v917
    %v1294 = vpack.c.b16 %v922, %v918
    %v1295 = vpack.c.b16 %v923, %v919
    %v1296 = vpack.c.b16 %v928, %v924
    %v1297 = vpack.c.b16 %v929, %v925
    %v1298 = vpack.c.b16 %v930, %v926
    %v1299 = vpack.c.b16 %v931, %v927
    %v1300 = vpack.c.b16 %v936, %v932
    %v1301 = vpack.c.b16 %v937, %v933
    %v1302 = vpack.c.b16 %v938, %v934
    %v1303 = vpack.c.b16 %v939, %v935
    %v1304 = vpack.c.b16 %v944, %v940
    %v1305 = vpack.c.b16 %v945, %v941
    %v1306 = vpack.c.b16 %v946, %v942
    %v1307 = vpack.c.b16 %v947, %v943
    %v1308 = vpack.c.b16 %v952, %v948
    %v1309 = vpack.c.b16 %v953, %v949
    %v1310 = vpack.c.b16 %v954, %v950
    %v1311 = vpack.c.b16 %v955, %v951
    %v1312 = vpack.c.b16 %v960, %v956
    %v1313 = vpack.c.b16 %v961, %v957
    %v1314 = vpack.c.b16 %v962, %v958
    %v1315 = vpack.c.b16 %v963, %v959
    %v1316 = vpack.c.b16 %v968, %v964
    %v1317 = vpack.c.b16 %v969, %v965
    %v1318 = vpack.c.b16 %v970, %v966
    %v1319 = vpack.c.b16 %v971, %v967
    %v1320 = vpack.c.b16 %v976, %v972
    %v1321 = vpack.c.b16 %v977, %v973
    %v1322 = vpack.c.b16 %v978, %v974
    %v1323 = vpack.c.b16 %v979, %v975
    %v1324 = vpack.c.b16 %v984, %v980
    %v1325 = vpack.c.b16 %v985, %v981
    %v1326 = vpack.c.b16 %v986, %v982
    %v1327 = vpack.c.b16 %v987, %v983
    %v1328 = vpack.c.b16 %v992, %v988
    %v1329 = vpack.c.b16 %v993, %v989
    %v1330 = vpack.c.b16 %v994, %v990
    %v1331 = vpack.c.b16 %v995, %v991
    %v1332 = vpack.c.b16 %v1000, %v996
    %v1333 = vpack.c.b16 %v1001, %v997
    %v1334 = vpack.c.b16 %v1002, %v998
    %v1335 = vpack.c.b16 %v1003, %v999
    %v1336 = vpack.c.b16 %v1008, %v1004
    %v1337 = vpack.c.b16 %v1009, %v1005
    %v1338 = vpack.c.b16 %v1010, %v1006
    %v1339 = vpack.c.b16 %v1011, %v1007
    %v1340 = vpack.c.b16 %v1016, %v1012
    %v1341 = vpack.c.b16 %v1017, %v1013
    %v1342 = vpack.c.b16 %v1018, %v1014
    %v1343 = vpack.c.b16 %v1019, %v1015
    %v1344 = vpack.c.b16 %v1024, %v1020
    %v1345 = vpack.c.b16 %v1025, %v1021
    %v1346 = vpack.c.b16 %v1026, %v1022
    %v1347 = vpack.c.b16 %v1027, %v1023
    %v1348 = vpack.c.b16 %v1032, %v1028
    %v1349 = vpack.c.b16 %v1033, %v1029
    %v1350 = vpack.c.b16 %v1034, %v1030
    %v1351 = vpack.c.b16 %v1035, %v1031
    %v1352 = vpack.c.b16 %v1040, %v1036
    %v1353 = vpack.c.b16 %v1041, %v1037
    %v1354 = vpack.c.b16 %v1042, %v1038
    %v1355 = vpack.c.b16 %v1043, %v1039
    %v1356 = vpack.c.b16 %v1048, %v1044
    %v1357 = vpack.c.b16 %v1049, %v1045
    %v1358 = vpack.c.b16 %v1050, %v1046
    %v1359 = vpack.c.b16 %v1051, %v1047
    %v1360 = vpack.c.b16 %v1056, %v1052
    %v1361 = vpack.c.b16 %v1057, %v1053
    %v1362 = vpack.c.b16 %v1058, %v1054
    %v1363 = vpack.c.b16 %v1059, %v1055
    %v1364 = vpack.c.b16 %v1064, %v1060
    %v1365 = vpack.c.b16 %v1065, %v1061
    %v1366 = vpack.c.b16 %v1066, %v1062
    %v1367 = vpack.c.b16 %v1067, %v1063
    %v1368 = vpack.c.b16 %v1072, %v1068
    %v1369 = vpack.c.b16 %v1073, %v1069
    %v1370 = vpack.c.b16 %v1074, %v1070
    %v1371 = vpack.c.b16 %v1075, %v1071
    %v1372 = vpack.c.b16 %v1080, %v1076
    %v1373 = vpack.c.b16 %v1081, %v1077
    %v1374 = vpack.c.b16 %v1082, %v1078
    %v1375 = vpack.c.b16 %v1083, %v1079
    %v1376 = vpack.c.b16 %v1088, %v1084
    %v1377 = vpack.c.b16 %v1089, %v1085
    %v1378 = vpack.c.b16 %v1090, %v1086
    %v1379 = vpack.c.b16 %v1091, %v1087
    %v1380 = vpack.c.b16 %v1096, %v1092
    %v1381 = vpack.c.b16 %v1097, %v1093
    %v1382 = vpack.c.b16 %v1098, %v1094
    %v1383 = vpack.c.b16 %v1099, %v1095
    %v1384 = vpack.c.b16 %v1104, %v1100
    %v1385 = vpack.c.b16 %v1105, %v1101
    %v1386 = vpack.c.b16 %v1106, %v1102
    %v1387 = vpack.c.b16 %v1107, %v1103
    %v1388 = vpack.c.b16 %v1112, %v1108
    %v1389 = vpack.c.b16 %v1113, %v1109
    %v1390 = vpack.c.b16 %v1114, %v1110
    %v1391 = vpack.c.b16 %v1115, %v1111
    %v1392 = vpack.c.b16 %v1120, %v1116
    %v1393 = vpack.c.b16 %v1121, %v1117
    %v1394 = vpack.c.b16 %v1122, %v1118
    %v1395 = vpack.c.b16 %v1123, %v1119
    %v1396 = vpack.c.b16 %v1128, %v1124
    %v1397 = vpack.c.b16 %v1129, %v1125
    %v1398 = vpack.c.b16 %v1130, %v1126
    %v1399 = vpack.c.b16 %v1131, %v1127
    %v1400 = vpack.c.b16 %v1136, %v1132
    %v1401 = vpack.c.b16 %v1137, %v1133
    %v1402 = vpack.c.b16 %v1138, %v1134
    %v1403 = vpack.c.b16 %v1139, %v1135
    %v1404 = vpack.c.b16 %v1144, %v1140
    %v1405 = vpack.c.b16 %v1145, %v1141
    %v1406 = vpack.c.b16 %v1146, %v1142
    %v1407 = vpack.c.b16 %v1147, %v1143
    %v1408 = vpack.c.b16 %v1152, %v1148
    %v1409 = vpack.c.b16 %v1153, %v1149
    %v1410 = vpack.c.b16 %v1154, %v1150
    %v1411 = vpack.c.b16 %v1155, %v1151
    %v1412 = vpack.c.b16 %v1160, %v1156
    %v1413 = vpack.c.b16 %v1161, %v1157
    %v1414 = vpack.c.b16 %v1162, %v1158
    %v1415 = vpack.c.b16 %v1163, %v1159
    %v1416 = vpack.c.b16 %v1164, %v1164
    %v1417 = vpack.c.b16 %v1165, %v1165
    %v1418 = vpack.c.b16 %v1166, %v1166
    %v1419 = vpack.c.b16 %v1167, %v1167
    %vm1668 = vcmask 850944
    %v1670 = vsel %vm1668, %v145, 0
    %vm1672 = vcmask 1043456
    %v1674 = vsel %vm1672, %v1416, 0
    %v1677 = vsel %vm1672, %v1417, 0
    %v1680 = vsel %vm1672, %v1418, 0
    %v1683 = vsel %vm1672, %v1419, 0
    %1685 = vmatprep.subr.bf16.mxu0 %v1169
    %1686 = vmatpush1.bf16.msra.mxu0 %v1168
    %1687 = vmatprep.subr.bf16.mxu0 %v1173
    %1688 = vmatpush1.bf16.msra.mxu0 %v1172
    %1689 = vmatprep.subr.bf16.mxu0 %v1177
    %1690 = vmatpush1.bf16.msra.mxu0 %v1176
    %1691 = vmatprep.subr.bf16.mxu0 %v1181
    %1692 = vmatpush1.bf16.msra.mxu0 %v1180
    %1693 = vmatprep.subr.bf16.mxu0 %v1185
    %1694 = vmatpush1.bf16.msra.mxu0 %v1184
    %1695 = vmatprep.subr.bf16.mxu0 %v1189
    %1696 = vmatpush1.bf16.msra.mxu0 %v1188
    %1697 = vmatprep.subr.bf16.mxu0 %v1193
    %1698 = vmatpush1.bf16.msra.mxu0 %v1192
    %1699 = vmatprep.subr.bf16.mxu0 %v1197
    %1700 = vmatpush1.bf16.msra.mxu0 %v1196
    %1701 = vmatprep.subr.bf16.mxu0 %v1201
    %1702 = vmatpush1.bf16.msra.mxu0 %v1200
    %1703 = vmatprep.subr.bf16.mxu0 %v1205
    %1704 = vmatpush1.bf16.msra.mxu0 %v1204
    %1705 = vmatprep.subr.bf16.mxu0 %v1209
    %1706 = vmatpush1.bf16.msra.mxu0 %v1208
    %1707 = vmatprep.subr.bf16.mxu0 %v1213
    %1708 = vmatpush1.bf16.msra.mxu0 %v1212
    %1709 = vmatprep.subr.bf16.mxu0 %v1217
    %1710 = vmatpush1.bf16.msra.mxu0 %v1216
    %1711 = vmatprep.subr.bf16.mxu0 %v1221
    %1712 = vmatpush1.bf16.msra.mxu0 %v1220
    %1713 = vmatprep.subr.bf16.mxu0 %v1225
    %1714 = vmatpush1.bf16.msra.mxu0 %v1224
    %1715 = vmatprep.subr.bf16.mxu0 %v1229
    %1716 = vmatpush1.bf16.msra.mxu0 %v1228
    %1717 = vmatprep.mubr.bf16.mxu0 %v139
    %1718 = vmatmul.mubr.bf16.gmra.mrb[0].mxu0 %v138
    %v1719 = vpop.f32.mrb[0].mxu0
    %v1720 = vadd.f32 %v401, %v1719
    %v1721 = vpop.f32.mrb[0].mxu0
    %v1722 = vadd.f32 %v405, %v1721
    %v1723 = vpop.f32.mrb[0].mxu0
    %v1724 = vadd.f32 %v401, %v1723
    %v1725 = vpop.f32.mrb[0].mxu0
    %v1726 = vadd.f32 %v405, %v1725
    %1727 = vdwg.mxu0
    %1728 = vmatprep.subr.bf16.mxu0 %v1233
    %1729 = vmatpush1.bf16.msra.mxu0 %v1232
    %1730 = vmatprep.subr.bf16.mxu0 %v1237
    %1731 = vmatpush1.bf16.msra.mxu0 %v1236
    %1732 = vmatprep.subr.bf16.mxu0 %v1241
    %1733 = vmatpush1.bf16.msra.mxu0 %v1240
    %1734 = vmatprep.subr.bf16.mxu0 %v1245
    %1735 = vmatpush1.bf16.msra.mxu0 %v1244
    %1736 = vmatprep.subr.bf16.mxu0 %v1249
    %1737 = vmatpush1.bf16.msra.mxu0 %v1248
    %1738 = vmatprep.subr.bf16.mxu0 %v1253
    %1739 = vmatpush1.bf16.msra.mxu0 %v1252
    %1740 = vmatprep.subr.bf16.mxu0 %v1257
    %1741 = vmatpush1.bf16.msra.mxu0 %v1256
    %1742 = vmatprep.subr.bf16.mxu0 %v1261
    %1743 = vmatpush1.bf16.msra.mxu0 %v1260
    %1744 = vmatprep.subr.bf16.mxu0 %v1265
    %1745 = vmatpush1.bf16.msra.mxu0 %v1264
    %1746 = vmatprep.subr.bf16.mxu0 %v1269
    %1747 = vmatpush1.bf16.msra.mxu0 %v1268
    %1748 = vmatprep.subr.bf16.mxu0 %v1273
    %1749 = vmatpush1.bf16.msra.mxu0 %v1272
    %1750 = vmatprep.subr.bf16.mxu0 %v1277
    %1751 = vmatpush1.bf16.msra.mxu0 %v1276
    %1752 = vmatprep.subr.bf16.mxu0 %v1281
    %1753 = vmatpush1.bf16.msra.mxu0 %v1280
    %1754 = vmatprep.subr.bf16.mxu0 %v1285
    %1755 = vmatpush1.bf16.msra.mxu0 %v1284
    %1756 = vmatprep.subr.bf16.mxu0 %v1289
    %1757 = vmatpush1.bf16.msra.mxu0 %v1288
    %1758 = vmatprep.subr.bf16.mxu0 %v1293
    %1759 = vmatpush1.bf16.msra.mxu0 %v1292
    %1760 = vmatprep.mubr.bf16.mxu0 %v141
    %1761 = vmatmul.mubr.bf16.gmra.mrb[0].mxu0 %v140
    %v1762 = vpop.f32.mrb[0].mxu0
    %v1763 = vadd.f32 %v1720, %v1762
    %v1764 = vpop.f32.mrb[0].mxu0
    %v1765 = vadd.f32 %v1722, %v1764
    %v1766 = vpop.f32.mrb[0].mxu0
    %v1767 = vadd.f32 %v1724, %v1766
    %v1768 = vpop.f32.mrb[0].mxu0
    %v1769 = vadd.f32 %v1726, %v1768
    %1770 = vdwg.mxu0
    %1771 = vmatprep.subr.bf16.mxu0 %v1297
    %1772 = vmatpush1.bf16.msra.mxu0 %v1296
    %1773 = vmatprep.subr.bf16.mxu0 %v1301
    %1774 = vmatpush1.bf16.msra.mxu0 %v1300
    %1775 = vmatprep.subr.bf16.mxu0 %v1305
    %1776 = vmatpush1.bf16.msra.mxu0 %v1304
    %1777 = vmatprep.subr.bf16.mxu0 %v1309
    %1778 = vmatpush1.bf16.msra.mxu0 %v1308
    %1779 = vmatprep.subr.bf16.mxu0 %v1313
    %1780 = vmatpush1.bf16.msra.mxu0 %v1312
    %1781 = vmatprep.subr.bf16.mxu0 %v1317
    %1782 = vmatpush1.bf16.msra.mxu0 %v1316
    %1783 = vmatprep.subr.bf16.mxu0 %v1321
    %1784 = vmatpush1.bf16.msra.mxu0 %v1320
    %1785 = vmatprep.subr.bf16.mxu0 %v1325
    %1786 = vmatpush1.bf16.msra.mxu0 %v1324
    %1787 = vmatprep.subr.bf16.mxu0 %v1329
    %1788 = vmatpush1.bf16.msra.mxu0 %v1328
    %1789 = vmatprep.subr.bf16.mxu0 %v1333
    %1790 = vmatpush1.bf16.msra.mxu0 %v1332
    %1791 = vmatprep.subr.bf16.mxu0 %v1337
    %1792 = vmatpush1.bf16.msra.mxu0 %v1336
    %1793 = vmatprep.subr.bf16.mxu0 %v1341
    %1794 = vmatpush1.bf16.msra.mxu0 %v1340
    %1795 = vmatprep.subr.bf16.mxu0 %v1345
    %1796 = vmatpush1.bf16.msra.mxu0 %v1344
    %1797 = vmatprep.subr.bf16.mxu0 %v1349
    %1798 = vmatpush1.bf16.msra.mxu0 %v1348
    %1799 = vmatprep.subr.bf16.mxu0 %v1353
    %1800 = vmatpush1.bf16.msra.mxu0 %v1352
    %1801 = vmatprep.subr.bf16.mxu0 %v1357
    %1802 = vmatpush1.bf16.msra.mxu0 %v1356
    %1803 = vmatprep.mubr.bf16.mxu0 %v143
    %1804 = vmatmul.mubr.bf16.gmra.mrb[0].mxu0 %v142
    %v1805 = vpop.f32.mrb[0].mxu0
    %v1806 = vadd.f32 %v1763, %v1805
    %v1807 = vpop.f32.mrb[0].mxu0
    %v1808 = vadd.f32 %v1765, %v1807
    %v1809 = vpop.f32.mrb[0].mxu0
    %v1810 = vadd.f32 %v1767, %v1809
    %v1811 = vpop.f32.mrb[0].mxu0
    %v1812 = vadd.f32 %v1769, %v1811
    %1813 = vdwg.mxu0
    %1814 = vmatprep.subr.bf16.mxu0 %v1361
    %1815 = vmatpush1.bf16.msra.mxu0 %v1360
    %1816 = vmatprep.subr.bf16.mxu0 %v1365
    %1817 = vmatpush1.bf16.msra.mxu0 %v1364
    %1818 = vmatprep.subr.bf16.mxu0 %v1369
    %1819 = vmatpush1.bf16.msra.mxu0 %v1368
    %1820 = vmatprep.subr.bf16.mxu0 %v1373
    %1821 = vmatpush1.bf16.msra.mxu0 %v1372
    %1822 = vmatprep.subr.bf16.mxu0 %v1377
    %1823 = vmatpush1.bf16.msra.mxu0 %v1376
    %1824 = vmatprep.subr.bf16.mxu0 %v1381
    %1825 = vmatpush1.bf16.msra.mxu0 %v1380
    %1826 = vmatprep.subr.bf16.mxu0 %v1385
    %1827 = vmatpush1.bf16.msra.mxu0 %v1384
    %1828 = vmatprep.subr.bf16.mxu0 %v1389
    %1829 = vmatpush1.bf16.msra.mxu0 %v1388
    %1830 = vmatprep.subr.bf16.mxu0 %v1393
    %1831 = vmatpush1.bf16.msra.mxu0 %v1392
    %1832 = vmatprep.subr.bf16.mxu0 %v1397
    %1833 = vmatpush1.bf16.msra.mxu0 %v1396
    %1834 = vmatprep.subr.bf16.mxu0 %v1401
    %1835 = vmatpush1.bf16.msra.mxu0 %v1400
    %1836 = vmatprep.subr.bf16.mxu0 %v1405
    %1837 = vmatpush1.bf16.msra.mxu0 %v1404
    %1838 = vmatprep.subr.bf16.mxu0 %v1409
    %1839 = vmatpush1.bf16.msra.mxu0 %v1408
    %1840 = vmatprep.subr.bf16.mxu0 %v1413
    %1841 = vmatpush1.bf16.msra.mxu0 %v1412
    %1842 = vmatprep.subr.bf16.mxu0 %v1677
    %1843 = vmatpush1.bf16.msra.mxu0 %v1674
    %1844 = vmatprep.subr.bf16.mxu0 0
    %1845 = vmatpush1.bf16.msra.mxu0 0
    %1846 = vmatprep.mubr.bf16.mxu0 %v1670
    %1847 = vmatmul.mubr.bf16.gmra.mrb[0].mxu0 %v144
    %v1848 = vpop.f32.mrb[0].mxu0
    %v1849 = vadd.f32 %v1806, %v1848
    %v1850 = vpop.f32.mrb[0].mxu0
    %v1851 = vadd.f32 %v1808, %v1850
    %v1852 = vpop.f32.mrb[0].mxu0
    %v1853 = vadd.f32 %v1810, %v1852
    %v1854 = vpop.f32.mrb[0].mxu0
    %v1855 = vadd.f32 %v1812, %v1854
    %1856 = vdwg.mxu0
    %1857 = vmatprep.subr.bf16.mxu0 %v1171
    %1858 = vmatpush1.bf16.msra.mxu0 %v1170
    %1859 = vmatprep.subr.bf16.mxu0 %v1175
    %1860 = vmatpush1.bf16.msra.mxu0 %v1174
    %1861 = vmatprep.subr.bf16.mxu0 %v1179
    %1862 = vmatpush1.bf16.msra.mxu0 %v1178
    %1863 = vmatprep.subr.bf16.mxu0 %v1183
    %1864 = vmatpush1.bf16.msra.mxu0 %v1182
    %1865 = vmatprep.subr.bf16.mxu0 %v1187
    %1866 = vmatpush1.bf16.msra.mxu0 %v1186
    %1867 = vmatprep.subr.bf16.mxu0 %v1191
    %1868 = vmatpush1.bf16.msra.mxu0 %v1190
    %1869 = vmatprep.subr.bf16.mxu0 %v1195
    %1870 = vmatpush1.bf16.msra.mxu0 %v1194
    %1871 = vmatprep.subr.bf16.mxu0 %v1199
    %1872 = vmatpush1.bf16.msra.mxu0 %v1198
    %1873 = vmatprep.subr.bf16.mxu0 %v1203
    %1874 = vmatpush1.bf16.msra.mxu0 %v1202
    %1875 = vmatprep.subr.bf16.mxu0 %v1207
    %1876 = vmatpush1.bf16.msra.mxu0 %v1206
    %1877 = vmatprep.subr.bf16.mxu0 %v1211
    %1878 = vmatpush1.bf16.msra.mxu0 %v1210
    %1879 = vmatprep.subr.bf16.mxu0 %v1215
    %1880 = vmatpush1.bf16.msra.mxu0 %v1214
    %1881 = vmatprep.subr.bf16.mxu0 %v1219
    %1882 = vmatpush1.bf16.msra.mxu0 %v1218
    %1883 = vmatprep.subr.bf16.mxu0 %v1223
    %1884 = vmatpush1.bf16.msra.mxu0 %v1222
    %1885 = vmatprep.subr.bf16.mxu0 %v1227
    %1886 = vmatpush1.bf16.msra.mxu0 %v1226
    %1887 = vmatprep.subr.bf16.mxu0 %v1231
    %1888 = vmatpush1.bf16.msra.mxu0 %v1230
    %1889 = vmatprep.mubr.bf16.mxu0 %v139
    %1890 = vmatmul.mubr.bf16.gmra.mrb[0].mxu0 %v138
    %v1891 = vpop.f32.mrb[0].mxu0
    %v1892 = vadd.f32 %v409, %v1891
    %v1893 = vpop.f32.mrb[0].mxu0
    %v1894 = vadd.f32 %v413, %v1893
    %v1895 = vpop.f32.mrb[0].mxu0
    %v1896 = vadd.f32 %v409, %v1895
    %v1897 = vpop.f32.mrb[0].mxu0
    %v1898 = vadd.f32 %v413, %v1897
    %1899 = vdwg.mxu0
    %1900 = vmatprep.subr.bf16.mxu0 %v1235
    %1901 = vmatpush1.bf16.msra.mxu0 %v1234
    %1902 = vmatprep.subr.bf16.mxu0 %v1239
    %1903 = vmatpush1.bf16.msra.mxu0 %v1238
    %1904 = vmatprep.subr.bf16.mxu0 %v1243
    %1905 = vmatpush1.bf16.msra.mxu0 %v1242
    %1906 = vmatprep.subr.bf16.mxu0 %v1247
    %1907 = vmatpush1.bf16.msra.mxu0 %v1246
    %1908 = vmatprep.subr.bf16.mxu0 %v1251
    %1909 = vmatpush1.bf16.msra.mxu0 %v1250
    %1910 = vmatprep.subr.bf16.mxu0 %v1255
    %1911 = vmatpush1.bf16.msra.mxu0 %v1254
    %1912 = vmatprep.subr.bf16.mxu0 %v1259
    %1913 = vmatpush1.bf16.msra.mxu0 %v1258
    %1914 = vmatprep.subr.bf16.mxu0 %v1263
    %1915 = vmatpush1.bf16.msra.mxu0 %v1262
    %1916 = vmatprep.subr.bf16.mxu0 %v1267
    %1917 = vmatpush1.bf16.msra.mxu0 %v1266
    %1918 = vmatprep.subr.bf16.mxu0 %v1271
    %1919 = vmatpush1.bf16.msra.mxu0 %v1270
    %1920 = vmatprep.subr.bf16.mxu0 %v1275
    %1921 = vmatpush1.bf16.msra.mxu0 %v1274
    %1922 = vmatprep.subr.bf16.mxu0 %v1279
    %1923 = vmatpush1.bf16.msra.mxu0 %v1278
    %1924 = vmatprep.subr.bf16.mxu0 %v1283
    %1925 = vmatpush1.bf16.msra.mxu0 %v1282
    %1926 = vmatprep.subr.bf16.mxu0 %v1287
    %1927 = vmatpush1.bf16.msra.mxu0 %v1286
    %1928 = vmatprep.subr.bf16.mxu0 %v1291
    %1929 = vmatpush1.bf16.msra.mxu0 %v1290
    %1930 = vmatprep.subr.bf16.mxu0 %v1295
    %1931 = vmatpush1.bf16.msra.mxu0 %v1294
    %1932 = vmatprep.mubr.bf16.mxu0 %v141
    %1933 = vmatmul.mubr.bf16.gmra.mrb[0].mxu0 %v140
    %v1934 = vpop.f32.mrb[0].mxu0
    %v1935 = vadd.f32 %v1892, %v1934
    %v1936 = vpop.f32.mrb[0].mxu0
    %v1937 = vadd.f32 %v1894, %v1936
    %v1938 = vpop.f32.mrb[0].mxu0
    %v1939 = vadd.f32 %v1896, %v1938
    %v1940 = vpop.f32.mrb[0].mxu0
    %v1941 = vadd.f32 %v1898, %v1940
    %1942 = vdwg.mxu0
    %1943 = vmatprep.subr.bf16.mxu0 %v1299
    %1944 = vmatpush1.bf16.msra.mxu0 %v1298
    %1945 = vmatprep.subr.bf16.mxu0 %v1303
    %1946 = vmatpush1.bf16.msra.mxu0 %v1302
    %1947 = vmatprep.subr.bf16.mxu0 %v1307
    %1948 = vmatpush1.bf16.msra.mxu0 %v1306
    %1949 = vmatprep.subr.bf16.mxu0 %v1311
    %1950 = vmatpush1.bf16.msra.mxu0 %v1310
    %1951 = vmatprep.subr.bf16.mxu0 %v1315
    %1952 = vmatpush1.bf16.msra.mxu0 %v1314
    %1953 = vmatprep.subr.bf16.mxu0 %v1319
    %1954 = vmatpush1.bf16.msra.mxu0 %v1318
    %1955 = vmatprep.subr.bf16.mxu0 %v1323
    %1956 = vmatpush1.bf16.msra.mxu0 %v1322
    %1957 = vmatprep.subr.bf16.mxu0 %v1327
    %1958 = vmatpush1.bf16.msra.mxu0 %v1326
    %1959 = vmatprep.subr.bf16.mxu0 %v1331
    %1960 = vmatpush1.bf16.msra.mxu0 %v1330
    %1961 = vmatprep.subr.bf16.mxu0 %v1335
    %1962 = vmatpush1.bf16.msra.mxu0 %v1334
    %1963 = vmatprep.subr.bf16.mxu0 %v1339
    %1964 = vmatpush1.bf16.msra.mxu0 %v1338
    %1965 = vmatprep.subr.bf16.mxu0 %v1343
    %1966 = vmatpush1.bf16.msra.mxu0 %v1342
    %1967 = vmatprep.subr.bf16.mxu0 %v1347
    %1968 = vmatpush1.bf16.msra.mxu0 %v1346
    %1969 = vmatprep.subr.bf16.mxu0 %v1351
    %1970 = vmatpush1.bf16.msra.mxu0 %v1350
    %1971 = vmatprep.subr.bf16.mxu0 %v1355
    %1972 = vmatpush1.bf16.msra.mxu0 %v1354
    %1973 = vmatprep.subr.bf16.mxu0 %v1359
    %1974 = vmatpush1.bf16.msra.mxu0 %v1358
    %1975 = vmatprep.mubr.bf16.mxu0 %v143
    %1976 = vmatmul.mubr.bf16.gmra.mrb[0].mxu0 %v142
    %v1977 = vpop.f32.mrb[0].mxu0
    %v1978 = vadd.f32 %v1935, %v1977
    %v1979 = vpop.f32.mrb[0].mxu0
    %v1980 = vadd.f32 %v1937, %v1979
    %v1981 = vpop.f32.mrb[0].mxu0
    %v1982 = vadd.f32 %v1939, %v1981
    %v1983 = vpop.f32.mrb[0].mxu0
    %v1984 = vadd.f32 %v1941, %v1983
    %1985 = vdwg.mxu0
    %1986 = vmatprep.subr.bf16.mxu0 %v1363
    %1987 = vmatpush1.bf16.msra.mxu0 %v1362
    %1988 = vmatprep.subr.bf16.mxu0 %v1367
    %1989 = vmatpush1.bf16.msra.mxu0 %v1366
    %1990 = vmatprep.subr.bf16.mxu0 %v1371
    %1991 = vmatpush1.bf16.msra.mxu0 %v1370
    %1992 = vmatprep.subr.bf16.mxu0 %v1375
    %1993 = vmatpush1.bf16.msra.mxu0 %v1374
    %1994 = vmatprep.subr.bf16.mxu0 %v1379
    %1995 = vmatpush1.bf16.msra.mxu0 %v1378
    %1996 = vmatprep.subr.bf16.mxu0 %v1383
    %1997 = vmatpush1.bf16.msra.mxu0 %v1382
    %1998 = vmatprep.subr.bf16.mxu0 %v1387
    %1999 = vmatpush1.bf16.msra.mxu0 %v1386
    %2000 = vmatprep.subr.bf16.mxu0 %v1391
    %2001 = vmatpush1.bf16.msra.mxu0 %v1390
    %2002 = vmatprep.subr.bf16.mxu0 %v1395
    %2003 = vmatpush1.bf16.msra.mxu0 %v1394
    %2004 = vmatprep.subr.bf16.mxu0 %v1399
    %2005 = vmatpush1.bf16.msra.mxu0 %v1398
    %2006 = vmatprep.subr.bf16.mxu0 %v1403
    %2007 = vmatpush1.bf16.msra.mxu0 %v1402
    %2008 = vmatprep.subr.bf16.mxu0 %v1407
    %2009 = vmatpush1.bf16.msra.mxu0 %v1406
    %2010 = vmatprep.subr.bf16.mxu0 %v1411
    %2011 = vmatpush1.bf16.msra.mxu0 %v1410
    %2012 = vmatprep.subr.bf16.mxu0 %v1415
    %2013 = vmatpush1.bf16.msra.mxu0 %v1414
    %2014 = vmatprep.subr.bf16.mxu0 %v1683
    %2015 = vmatpush1.bf16.msra.mxu0 %v1680
    %2016 = vmatprep.subr.bf16.mxu0 0
    %2017 = vmatpush1.bf16.msra.mxu0 0
    %2018 = vmatprep.mubr.bf16.mxu0 %v1670
    %2019 = vmatmul.mubr.bf16.gmra.mrb[0].mxu0 %v144
    %v2020 = vpop.f32.mrb[0].mxu0
    %v2021 = vadd.f32 %v1978, %v2020
    %v2022 = vpop.f32.mrb[0].mxu0
    %v2023 = vadd.f32 %v1980, %v2022
    %v2024 = vpop.f32.mrb[0].mxu0
    %v2025 = vadd.f32 %v1982, %v2024
    %v2026 = vpop.f32.mrb[0].mxu0
    %v2027 = vadd.f32 %v1984, %v2026
    %2028 = vdwg.mxu0
    %v2029 = vmax.f32 %v1849, 0.0
    %v2030 = vmax.f32 %v1851, 0.0
    %v2031 = vmax.f32 %v2021, 0.0
    %v2032 = vmax.f32 %v2023, 0.0
    %v2033 = vmax.f32 %v1853, 0.0
    %v2034 = vmax.f32 %v1855, 0.0
    %v2035 = vmax.f32 %v2025, 0.0
    %v2036 = vmax.f32 %v2027, 0.0
    %v2037 = vpack.c.bf16 %v2033, %v2029
    %v2038 = vpack.c.bf16 %v2034, %v2030
    %v2039 = vpack.c.bf16 %v2035, %v2031
    %v2040 = vpack.c.bf16 %v2036, %v2032
    %v2041 = vld [vmem:[#allocation7] sm:$0xff]
    %v2042 = vld [vmem:[#allocation7 + $0x8] sm:$0xff]
    %v2043 = vld [vmem:[#allocation7 + $0x10] sm:$0xff]
    %v2044 = vld [vmem:[#allocation7 + $0x18] sm:$0xff]
    %v2045 = vld [vmem:[#allocation7 + $0x20] sm:$0xff]
    %v2046 = vld [vmem:[#allocation7 + $0x28] sm:$0xff]
    %v2047 = vld [vmem:[#allocation7 + $0x30] sm:$0xff]
    %v2048 = vld [vmem:[#allocation7 + $0x38] sm:$0xff]
    %v2049 = vld [vmem:[#allocation7 + $0x40] sm:$0xff]
    %v2050 = vld [vmem:[#allocation7 + $0x48] sm:$0xff]
    %v2051 = vld [vmem:[#allocation7 + $0x50] sm:$0xff]
    %v2052 = vld [vmem:[#allocation7 + $0x58] sm:$0xff]
    %v2053 = vld [vmem:[#allocation7 + $0x60] sm:$0xff]
    %v2054 = vld [vmem:[#allocation7 + $0x68] sm:$0xff]
    %v2055 = vld [vmem:[#allocation7 + $0x70] sm:$0xff]
    %v2056 = vld [vmem:[#allocation7 + $0x78] sm:$0xff]
    %v2057 = vld [vmem:[#allocation7 + $0x80] sm:$0xff]
    %v2058 = vld [vmem:[#allocation7 + $0x88] sm:$0xff]
    %v2059 = vld [vmem:[#allocation7 + $0x90] sm:$0xff]
    %v2060 = vld [vmem:[#allocation7 + $0x98] sm:$0xff]
    %v2061 = vld [vmem:[#allocation7 + $0xa0] sm:$0xff]
    %v2062 = vld [vmem:[#allocation7 + $0xa8] sm:$0xff]
    %v2063 = vld [vmem:[#allocation7 + $0xb0] sm:$0xff]
    %v2064 = vld [vmem:[#allocation7 + $0xb8] sm:$0xff]
    %v2065 = vld [vmem:[#allocation7 + $0xc0] sm:$0xff]
    %v2066 = vld [vmem:[#allocation7 + $0xc8] sm:$0xff]
    %v2067 = vld [vmem:[#allocation7 + $0xd0] sm:$0xff]
    %v2068 = vld [vmem:[#allocation7 + $0xd8] sm:$0xff]
    %v2069 = vld [vmem:[#allocation7 + $0xe0] sm:$0xff]
    %v2070 = vld [vmem:[#allocation7 + $0xe8] sm:$0xff]
    %v2071 = vld [vmem:[#allocation7 + $0xf0] sm:$0xff]
    %v2072 = vld [vmem:[#allocation7 + $0xf8] sm:$0xff]
    %v2073 = vld [vmem:[#allocation7 + $0x100] sm:$0xff]
    %v2074 = vld [vmem:[#allocation7 + $0x108] sm:$0xff]
    %v2075 = vld [vmem:[#allocation7 + $0x110] sm:$0xff]
    %v2076 = vld [vmem:[#allocation7 + $0x118] sm:$0xff]
    %v2077 = vld [vmem:[#allocation7 + $0x120] sm:$0xff]
    %v2078 = vld [vmem:[#allocation7 + $0x128] sm:$0xff]
    %v2079 = vld [vmem:[#allocation7 + $0x130] sm:$0xff]
    %v2080 = vld [vmem:[#allocation7 + $0x138] sm:$0xff]
    %v2081 = vld [vmem:[#allocation7 + $0x140] sm:$0xff]
    %v2082 = vld [vmem:[#allocation7 + $0x148] sm:$0xff]
    %v2083 = vld [vmem:[#allocation7 + $0x150] sm:$0xff]
    %v2084 = vld [vmem:[#allocation7 + $0x158] sm:$0xff]
    %v2085 = vld [vmem:[#allocation7 + $0x160] sm:$0xff]
    %v2086 = vld [vmem:[#allocation7 + $0x168] sm:$0xff]
    %v2087 = vld [vmem:[#allocation7 + $0x170] sm:$0xff]
    %v2088 = vld [vmem:[#allocation7 + $0x178] sm:$0xff]
    %v2089 = vld [vmem:[#allocation7 + $0x180] sm:$0xff]
    %v2090 = vld [vmem:[#allocation7 + $0x188] sm:$0xff]
    %v2091 = vld [vmem:[#allocation7 + $0x190] sm:$0xff]
    %v2092 = vld [vmem:[#allocation7 + $0x198] sm:$0xff]
    %v2093 = vld [vmem:[#allocation7 + $0x1a0] sm:$0xff]
    %v2094 = vld [vmem:[#allocation7 + $0x1a8] sm:$0xff]
    %v2095 = vld [vmem:[#allocation7 + $0x1b0] sm:$0xff]
    %v2096 = vld [vmem:[#allocation7 + $0x1b8] sm:$0xff]
    %v2097 = vld [vmem:[#allocation7 + $0x1c0] sm:$0xff]
    %v2098 = vld [vmem:[#allocation7 + $0x1c8] sm:$0xff]
    %v2099 = vld [vmem:[#allocation7 + $0x1d0] sm:$0xff]
    %v2100 = vld [vmem:[#allocation7 + $0x1d8] sm:$0xff]
    %v2101 = vld [vmem:[#allocation7 + $0x1e0] sm:$0xff]
    %v2102 = vld [vmem:[#allocation7 + $0x1e8] sm:$0xff]
    %v2103 = vld [vmem:[#allocation7 + $0x1f0] sm:$0xff]
    %v2104 = vld [vmem:[#allocation7 + $0x1f8] sm:$0xff]
    %v2105 = vld [vmem:[#allocation7 + $0x200] sm:$0xff]
    %v2106 = vld [vmem:[#allocation7 + $0x208] sm:$0xff]
    %v2107 = vld [vmem:[#allocation7 + $0x210] sm:$0xff]
    %v2108 = vld [vmem:[#allocation7 + $0x218] sm:$0xff]
    %v2109 = vld [vmem:[#allocation7 + $0x220] sm:$0xff]
    %v2110 = vld [vmem:[#allocation7 + $0x228] sm:$0xff]
    %v2111 = vld [vmem:[#allocation7 + $0x230] sm:$0xff]
    %v2112 = vld [vmem:[#allocation7 + $0x238] sm:$0xff]
    %v2113 = vld [vmem:[#allocation7 + $0x240] sm:$0xff]
    %v2114 = vld [vmem:[#allocation7 + $0x248] sm:$0xff]
    %v2115 = vld [vmem:[#allocation7 + $0x250] sm:$0xff]
    %v2116 = vld [vmem:[#allocation7 + $0x258] sm:$0xff]
    %v2117 = vld [vmem:[#allocation7 + $0x260] sm:$0xff]
    %v2118 = vld [vmem:[#allocation7 + $0x268] sm:$0xff]
    %v2119 = vld [vmem:[#allocation7 + $0x270] sm:$0xff]
    %v2120 = vld [vmem:[#allocation7 + $0x278] sm:$0xff]
    %v2121 = vld [vmem:[#allocation7 + $0x280] sm:$0xff]
    %v2122 = vld [vmem:[#allocation7 + $0x288] sm:$0xff]
    %v2123 = vld [vmem:[#allocation7 + $0x290] sm:$0xff]
    %v2124 = vld [vmem:[#allocation7 + $0x298] sm:$0xff]
    %v2125 = vld [vmem:[#allocation7 + $0x2a0] sm:$0xff]
    %v2126 = vld [vmem:[#allocation7 + $0x2a8] sm:$0xff]
    %v2127 = vld [vmem:[#allocation7 + $0x2b0] sm:$0xff]
    %v2128 = vld [vmem:[#allocation7 + $0x2b8] sm:$0xff]
    %v2129 = vld [vmem:[#allocation7 + $0x2c0] sm:$0xff]
    %v2130 = vld [vmem:[#allocation7 + $0x2c8] sm:$0xff]
    %v2131 = vld [vmem:[#allocation7 + $0x2d0] sm:$0xff]
    %v2132 = vld [vmem:[#allocation7 + $0x2d8] sm:$0xff]
    %v2133 = vld [vmem:[#allocation7 + $0x2e0] sm:$0xff]
    %v2134 = vld [vmem:[#allocation7 + $0x2e8] sm:$0xff]
    %v2135 = vld [vmem:[#allocation7 + $0x2f0] sm:$0xff]
    %v2136 = vld [vmem:[#allocation7 + $0x2f8] sm:$0xff]
    %v2137 = vld [vmem:[#allocation7 + $0x300] sm:$0xff]
    %v2138 = vld [vmem:[#allocation7 + $0x308] sm:$0xff]
    %v2139 = vld [vmem:[#allocation7 + $0x310] sm:$0xff]
    %v2140 = vld [vmem:[#allocation7 + $0x318] sm:$0xff]
    %v2141 = vld [vmem:[#allocation7 + $0x320] sm:$0xff]
    %v2142 = vld [vmem:[#allocation7 + $0x328] sm:$0xff]
    %v2143 = vld [vmem:[#allocation7 + $0x330] sm:$0xff]
    %v2144 = vld [vmem:[#allocation7 + $0x338] sm:$0xff]
    %v2145 = vld [vmem:[#allocation7 + $0x340] sm:$0xff]
    %v2146 = vld [vmem:[#allocation7 + $0x348] sm:$0xff]
    %v2147 = vld [vmem:[#allocation7 + $0x350] sm:$0xff]
    %v2148 = vld [vmem:[#allocation7 + $0x358] sm:$0xff]
    %v2149 = vld [vmem:[#allocation7 + $0x360] sm:$0xff]
    %v2150 = vld [vmem:[#allocation7 + $0x368] sm:$0xff]
    %v2151 = vld [vmem:[#allocation7 + $0x370] sm:$0xff]
    %v2152 = vld [vmem:[#allocation7 + $0x378] sm:$0xff]
    %v2153 = vld [vmem:[#allocation7 + $0x380] sm:$0xff]
    %v2154 = vld [vmem:[#allocation7 + $0x388] sm:$0xff]
    %v2155 = vld [vmem:[#allocation7 + $0x390] sm:$0xff]
    %v2156 = vld [vmem:[#allocation7 + $0x398] sm:$0xff]
    %v2157 = vld [vmem:[#allocation7 + $0x3a0] sm:$0xff]
    %v2158 = vld [vmem:[#allocation7 + $0x3a8] sm:$0xff]
    %v2159 = vld [vmem:[#allocation7 + $0x3b0] sm:$0xff]
    %v2160 = vld [vmem:[#allocation7 + $0x3b8] sm:$0xff]
    %v2161 = vld [vmem:[#allocation7 + $0x3c0] sm:$0xff]
    %v2162 = vld [vmem:[#allocation7 + $0x3c8] sm:$0xff]
    %v2163 = vld [vmem:[#allocation7 + $0x3d0] sm:$0xff]
    %v2164 = vld [vmem:[#allocation7 + $0x3d8] sm:$0xff]
    %v2165 = vld [vmem:[#allocation7 + $0x3e0] sm:$0xff]
    %v2166 = vld [vmem:[#allocation7 + $0x3e8] sm:$0xff]
    %v2167 = vld [vmem:[#allocation7 + $0x3f0] sm:$0xff]
    %v2168 = vld [vmem:[#allocation7 + $0x3f8] sm:$0xff]
    %v2169 = vld [vmem:[%s4] sm:$0xf]
    %v2171 = vlaneseq
    %v2172 = vshrl.u32 %v2171, 7
    %v2173 = vsub.s32 0, %v2172
    %v2174 = vrot.slane %v2169, %v2173
    %v2175 = vlaneseq
    %v2176 = vshrl.u32 %v2175, 7
    %v2177 = vsub.s32 1, %v2176
    %v2178 = vrot.slane %v2169, %v2177
    %v2179 = vlaneseq
    %v2180 = vshrl.u32 %v2179, 7
    %v2181 = vsub.s32 2, %v2180
    %v2182 = vrot.slane %v2169, %v2181
    %v2183 = vlaneseq
    %v2184 = vshrl.u32 %v2183, 7
    %v2185 = vsub.s32 3, %v2184
    %v2186 = vrot.slane %v2169, %v2185
    %v2319 = vunpack.c.l.b16 %v2041
    %v2320 = vunpack.c.h.b16 %v2041
    %v2321 = vunpack.c.l.b16 %v2042
    %v2322 = vunpack.c.h.b16 %v2042
    %v2323 = vunpack.c.l.b16 %v2043
    %v2324 = vunpack.c.h.b16 %v2043
    %v2325 = vunpack.c.l.b16 %v2044
    %v2326 = vunpack.c.h.b16 %v2044
    %v2327 = vunpack.c.l.b16 %v2045
    %v2328 = vunpack.c.h.b16 %v2045
    %v2329 = vunpack.c.l.b16 %v2046
    %v2330 = vunpack.c.h.b16 %v2046
    %v2331 = vunpack.c.l.b16 %v2047
    %v2332 = vunpack.c.h.b16 %v2047
    %v2333 = vunpack.c.l.b16 %v2048
    %v2334 = vunpack.c.h.b16 %v2048
    %v2335 = vunpack.c.l.b16 %v2049
    %v2336 = vunpack.c.h.b16 %v2049
    %v2337 = vunpack.c.l.b16 %v2050
    %v2338 = vunpack.c.h.b16 %v2050
    %v2339 = vunpack.c.l.b16 %v2051
    %v2340 = vunpack.c.h.b16 %v2051
    %v2341 = vunpack.c.l.b16 %v2052
    %v2342 = vunpack.c.h.b16 %v2052
    %v2343 = vunpack.c.l.b16 %v2053
    %v2344 = vunpack.c.h.b16 %v2053
    %v2345 = vunpack.c.l.b16 %v2054
    %v2346 = vunpack.c.h.b16 %v2054
    %v2347 = vunpack.c.l.b16 %v2055
    %v2348 = vunpack.c.h.b16 %v2055
    %v2349 = vunpack.c.l.b16 %v2056
    %v2350 = vunpack.c.h.b16 %v2056
    %v2351 = vunpack.c.l.b16 %v2057
    %v2352 = vunpack.c.h.b16 %v2057
    %v2353 = vunpack.c.l.b16 %v2058
    %v2354 = vunpack.c.h.b16 %v2058
    %v2355 = vunpack.c.l.b16 %v2059
    %v2356 = vunpack.c.h.b16 %v2059
    %v2357 = vunpack.c.l.b16 %v2060
    %v2358 = vunpack.c.h.b16 %v2060
    %v2359 = vunpack.c.l.b16 %v2061
    %v2360 = vunpack.c.h.b16 %v2061
    %v2361 = vunpack.c.l.b16 %v2062
    %v2362 = vunpack.c.h.b16 %v2062
    %v2363 = vunpack.c.l.b16 %v2063
    %v2364 = vunpack.c.h.b16 %v2063
    %v2365 = vunpack.c.l.b16 %v2064
    %v2366 = vunpack.c.h.b16 %v2064
    %v2367 = vunpack.c.l.b16 %v2065
    %v2368 = vunpack.c.h.b16 %v2065
    %v2369 = vunpack.c.l.b16 %v2066
    %v2370 = vunpack.c.h.b16 %v2066
    %v2371 = vunpack.c.l.b16 %v2067
    %v2372 = vunpack.c.h.b16 %v2067
    %v2373 = vunpack.c.l.b16 %v2068
    %v2374 = vunpack.c.h.b16 %v2068
    %v2375 = vunpack.c.l.b16 %v2069
    %v2376 = vunpack.c.h.b16 %v2069
    %v2377 = vunpack.c.l.b16 %v2070
    %v2378 = vunpack.c.h.b16 %v2070
    %v2379 = vunpack.c.l.b16 %v2071
    %v2380 = vunpack.c.h.b16 %v2071
    %v2381 = vunpack.c.l.b16 %v2072
    %v2382 = vunpack.c.h.b16 %v2072
    %v2383 = vunpack.c.l.b16 %v2073
    %v2384 = vunpack.c.h.b16 %v2073
    %v2385 = vunpack.c.l.b16 %v2074
    %v2386 = vunpack.c.h.b16 %v2074
    %v2387 = vunpack.c.l.b16 %v2075
    %v2388 = vunpack.c.h.b16 %v2075
    %v2389 = vunpack.c.l.b16 %v2076
    %v2390 = vunpack.c.h.b16 %v2076
    %v2391 = vunpack.c.l.b16 %v2077
    %v2392 = vunpack.c.h.b16 %v2077
    %v2393 = vunpack.c.l.b16 %v2078
    %v2394 = vunpack.c.h.b16 %v2078
    %v2395 = vunpack.c.l.b16 %v2079
    %v2396 = vunpack.c.h.b16 %v2079
    %v2397 = vunpack.c.l.b16 %v2080
    %v2398 = vunpack.c.h.b16 %v2080
    %v2399 = vunpack.c.l.b16 %v2081
    %v2400 = vunpack.c.h.b16 %v2081
    %v2401 = vunpack.c.l.b16 %v2082
    %v2402 = vunpack.c.h.b16 %v2082
    %v2403 = vunpack.c.l.b16 %v2083
    %v2404 = vunpack.c.h.b16 %v2083
    %v2405 = vunpack.c.l.b16 %v2084
    %v2406 = vunpack.c.h.b16 %v2084
    %v2407 = vunpack.c.l.b16 %v2085
    %v2408 = vunpack.c.h.b16 %v2085
    %v2409 = vunpack.c.l.b16 %v2086
    %v2410 = vunpack.c.h.b16 %v2086
    %v2411 = vunpack.c.l.b16 %v2087
    %v2412 = vunpack.c.h.b16 %v2087
    %v2413 = vunpack.c.l.b16 %v2088
    %v2414 = vunpack.c.h.b16 %v2088
    %v2415 = vunpack.c.l.b16 %v2089
    %v2416 = vunpack.c.h.b16 %v2089
    %v2417 = vunpack.c.l.b16 %v2090
    %v2418 = vunpack.c.h.b16 %v2090
    %v2419 = vunpack.c.l.b16 %v2091
    %v2420 = vunpack.c.h.b16 %v2091
    %v2421 = vunpack.c.l.b16 %v2092
    %v2422 = vunpack.c.h.b16 %v2092
    %v2423 = vunpack.c.l.b16 %v2093
    %v2424 = vunpack.c.h.b16 %v2093
    %v2425 = vunpack.c.l.b16 %v2094
    %v2426 = vunpack.c.h.b16 %v2094
    %v2427 = vunpack.c.l.b16 %v2095
    %v2428 = vunpack.c.h.b16 %v2095
    %v2429 = vunpack.c.l.b16 %v2096
    %v2430 = vunpack.c.h.b16 %v2096
    %v2431 = vunpack.c.l.b16 %v2097
    %v2432 = vunpack.c.h.b16 %v2097
    %v2433 = vunpack.c.l.b16 %v2098
    %v2434 = vunpack.c.h.b16 %v2098
    %v2435 = vunpack.c.l.b16 %v2099
    %v2436 = vunpack.c.h.b16 %v2099
    %v2437 = vunpack.c.l.b16 %v2100
    %v2438 = vunpack.c.h.b16 %v2100
    %v2439 = vunpack.c.l.b16 %v2101
    %v2440 = vunpack.c.h.b16 %v2101
    %v2441 = vunpack.c.l.b16 %v2102
    %v2442 = vunpack.c.h.b16 %v2102
    %v2443 = vunpack.c.l.b16 %v2103
    %v2444 = vunpack.c.h.b16 %v2103
    %v2445 = vunpack.c.l.b16 %v2104
    %v2446 = vunpack.c.h.b16 %v2104
    %v2447 = vunpack.c.l.b16 %v2105
    %v2448 = vunpack.c.h.b16 %v2105
    %v2449 = vunpack.c.l.b16 %v2106
    %v2450 = vunpack.c.h.b16 %v2106
    %v2451 = vunpack.c.l.b16 %v2107
    %v2452 = vunpack.c.h.b16 %v2107
    %v2453 = vunpack.c.l.b16 %v2108
    %v2454 = vunpack.c.h.b16 %v2108
    %v2455 = vunpack.c.l.b16 %v2109
    %v2456 = vunpack.c.h.b16 %v2109
    %v2457 = vunpack.c.l.b16 %v2110
    %v2458 = vunpack.c.h.b16 %v2110
    %v2459 = vunpack.c.l.b16 %v2111
    %v2460 = vunpack.c.h.b16 %v2111
    %v2461 = vunpack.c.l.b16 %v2112
    %v2462 = vunpack.c.h.b16 %v2112
    %v2463 = vunpack.c.l.b16 %v2113
    %v2464 = vunpack.c.h.b16 %v2113
    %v2465 = vunpack.c.l.b16 %v2114
    %v2466 = vunpack.c.h.b16 %v2114
    %v2467 = vunpack.c.l.b16 %v2115
    %v2468 = vunpack.c.h.b16 %v2115
    %v2469 = vunpack.c.l.b16 %v2116
    %v2470 = vunpack.c.h.b16 %v2116
    %v2471 = vunpack.c.l.b16 %v2117
    %v2472 = vunpack.c.h.b16 %v2117
    %v2473 = vunpack.c.l.b16 %v2118
    %v2474 = vunpack.c.h.b16 %v2118
    %v2475 = vunpack.c.l.b16 %v2119
    %v2476 = vunpack.c.h.b16 %v2119
    %v2477 = vunpack.c.l.b16 %v2120
    %v2478 = vunpack.c.h.b16 %v2120
    %v2479 = vunpack.c.l.b16 %v2121
    %v2480 = vunpack.c.h.b16 %v2121
    %v2481 = vunpack.c.l.b16 %v2122
    %v2482 = vunpack.c.h.b16 %v2122
    %v2483 = vunpack.c.l.b16 %v2123
    %v2484 = vunpack.c.h.b16 %v2123
    %v2485 = vunpack.c.l.b16 %v2124
    %v2486 = vunpack.c.h.b16 %v2124
    %v2487 = vunpack.c.l.b16 %v2125
    %v2488 = vunpack.c.h.b16 %v2125
    %v2489 = vunpack.c.l.b16 %v2126
    %v2490 = vunpack.c.h.b16 %v2126
    %v2491 = vunpack.c.l.b16 %v2127
    %v2492 = vunpack.c.h.b16 %v2127
    %v2493 = vunpack.c.l.b16 %v2128
    %v2494 = vunpack.c.h.b16 %v2128
    %v2495 = vunpack.c.l.b16 %v2129
    %v2496 = vunpack.c.h.b16 %v2129
    %v2497 = vunpack.c.l.b16 %v2130
    %v2498 = vunpack.c.h.b16 %v2130
    %v2499 = vunpack.c.l.b16 %v2131
    %v2500 = vunpack.c.h.b16 %v2131
    %v2501 = vunpack.c.l.b16 %v2132
    %v2502 = vunpack.c.h.b16 %v2132
    %v2503 = vunpack.c.l.b16 %v2133
    %v2504 = vunpack.c.h.b16 %v2133
    %v2505 = vunpack.c.l.b16 %v2134
    %v2506 = vunpack.c.h.b16 %v2134
    %v2507 = vunpack.c.l.b16 %v2135
    %v2508 = vunpack.c.h.b16 %v2135
    %v2509 = vunpack.c.l.b16 %v2136
    %v2510 = vunpack.c.h.b16 %v2136
    %v2511 = vunpack.c.l.b16 %v2137
    %v2512 = vunpack.c.h.b16 %v2137
    %v2513 = vunpack.c.l.b16 %v2138
    %v2514 = vunpack.c.h.b16 %v2138
    %v2515 = vunpack.c.l.b16 %v2139
    %v2516 = vunpack.c.h.b16 %v2139
    %v2517 = vunpack.c.l.b16 %v2140
    %v2518 = vunpack.c.h.b16 %v2140
    %v2519 = vunpack.c.l.b16 %v2141
    %v2520 = vunpack.c.h.b16 %v2141
    %v2521 = vunpack.c.l.b16 %v2142
    %v2522 = vunpack.c.h.b16 %v2142
    %v2523 = vunpack.c.l.b16 %v2143
    %v2524 = vunpack.c.h.b16 %v2143
    %v2525 = vunpack.c.l.b16 %v2144
    %v2526 = vunpack.c.h.b16 %v2144
    %v2527 = vunpack.c.l.b16 %v2145
    %v2528 = vunpack.c.h.b16 %v2145
    %v2529 = vunpack.c.l.b16 %v2146
    %v2530 = vunpack.c.h.b16 %v2146
    %v2531 = vunpack.c.l.b16 %v2147
    %v2532 = vunpack.c.h.b16 %v2147
    %v2533 = vunpack.c.l.b16 %v2148
    %v2534 = vunpack.c.h.b16 %v2148
    %v2535 = vunpack.c.l.b16 %v2149
    %v2536 = vunpack.c.h.b16 %v2149
    %v2537 = vunpack.c.l.b16 %v2150
    %v2538 = vunpack.c.h.b16 %v2150
    %v2539 = vunpack.c.l.b16 %v2151
    %v2540 = vunpack.c.h.b16 %v2151
    %v2541 = vunpack.c.l.b16 %v2152
    %v2542 = vunpack.c.h.b16 %v2152
    %v2543 = vunpack.c.l.b16 %v2153
    %v2544 = vunpack.c.h.b16 %v2153
    %v2545 = vunpack.c.l.b16 %v2154
    %v2546 = vunpack.c.h.b16 %v2154
    %v2547 = vunpack.c.l.b16 %v2155
    %v2548 = vunpack.c.h.b16 %v2155
    %v2549 = vunpack.c.l.b16 %v2156
    %v2550 = vunpack.c.h.b16 %v2156
    %v2551 = vunpack.c.l.b16 %v2157
    %v2552 = vunpack.c.h.b16 %v2157
    %v2553 = vunpack.c.l.b16 %v2158
    %v2554 = vunpack.c.h.b16 %v2158
    %v2555 = vunpack.c.l.b16 %v2159
    %v2556 = vunpack.c.h.b16 %v2159
    %v2557 = vunpack.c.l.b16 %v2160
    %v2558 = vunpack.c.h.b16 %v2160
    %v2559 = vunpack.c.l.b16 %v2161
    %v2560 = vunpack.c.h.b16 %v2161
    %v2561 = vunpack.c.l.b16 %v2162
    %v2562 = vunpack.c.h.b16 %v2162
    %v2563 = vunpack.c.l.b16 %v2163
    %v2564 = vunpack.c.h.b16 %v2163
    %v2565 = vunpack.c.l.b16 %v2164
    %v2566 = vunpack.c.h.b16 %v2164
    %v2567 = vunpack.c.l.b16 %v2165
    %v2568 = vunpack.c.h.b16 %v2165
    %v2569 = vunpack.c.l.b16 %v2166
    %v2570 = vunpack.c.h.b16 %v2166
    %v2571 = vunpack.c.l.b16 %v2167
    %v2572 = vunpack.c.h.b16 %v2167
    %v2573 = vunpack.c.l.b16 %v2168
    %v2574 = vunpack.c.h.b16 %v2168
    %v2575 = vpack.c.b16 %v2323, %v2319
    %v2576 = vpack.c.b16 %v2324, %v2320
    %v2577 = vpack.c.b16 %v2325, %v2321
    %v2578 = vpack.c.b16 %v2326, %v2322
    %v2579 = vpack.c.b16 %v2331, %v2327
    %v2580 = vpack.c.b16 %v2332, %v2328
    %v2581 = vpack.c.b16 %v2333, %v2329
    %v2582 = vpack.c.b16 %v2334, %v2330
    %v2583 = vpack.c.b16 %v2339, %v2335
    %v2584 = vpack.c.b16 %v2340, %v2336
    %v2585 = vpack.c.b16 %v2341, %v2337
    %v2586 = vpack.c.b16 %v2342, %v2338
    %v2587 = vpack.c.b16 %v2347, %v2343
    %v2588 = vpack.c.b16 %v2348, %v2344
    %v2589 = vpack.c.b16 %v2349, %v2345
    %v2590 = vpack.c.b16 %v2350, %v2346
    %v2591 = vpack.c.b16 %v2355, %v2351
    %v2592 = vpack.c.b16 %v2356, %v2352
    %v2593 = vpack.c.b16 %v2357, %v2353
    %v2594 = vpack.c.b16 %v2358, %v2354
    %v2595 = vpack.c.b16 %v2363, %v2359
    %v2596 = vpack.c.b16 %v2364, %v2360
    %v2597 = vpack.c.b16 %v2365, %v2361
    %v2598 = vpack.c.b16 %v2366, %v2362
    %v2599 = vpack.c.b16 %v2371, %v2367
    %v2600 = vpack.c.b16 %v2372, %v2368
    %v2601 = vpack.c.b16 %v2373, %v2369
    %v2602 = vpack.c.b16 %v2374, %v2370
    %v2603 = vpack.c.b16 %v2379, %v2375
    %v2604 = vpack.c.b16 %v2380, %v2376
    %v2605 = vpack.c.b16 %v2381, %v2377
    %v2606 = vpack.c.b16 %v2382, %v2378
    %v2607 = vpack.c.b16 %v2387, %v2383
    %v2608 = vpack.c.b16 %v2388, %v2384
    %v2609 = vpack.c.b16 %v2389, %v2385
    %v2610 = vpack.c.b16 %v2390, %v2386
    %v2611 = vpack.c.b16 %v2395, %v2391
    %v2612 = vpack.c.b16 %v2396, %v2392
    %v2613 = vpack.c.b16 %v2397, %v2393
    %v2614 = vpack.c.b16 %v2398, %v2394
    %v2615 = vpack.c.b16 %v2403, %v2399
    %v2616 = vpack.c.b16 %v2404, %v2400
    %v2617 = vpack.c.b16 %v2405, %v2401
    %v2618 = vpack.c.b16 %v2406, %v2402
    %v2619 = vpack.c.b16 %v2411, %v2407
    %v2620 = vpack.c.b16 %v2412, %v2408
    %v2621 = vpack.c.b16 %v2413, %v2409
    %v2622 = vpack.c.b16 %v2414, %v2410
    %v2623 = vpack.c.b16 %v2419, %v2415
    %v2624 = vpack.c.b16 %v2420, %v2416
    %v2625 = vpack.c.b16 %v2421, %v2417
    %v2626 = vpack.c.b16 %v2422, %v2418
    %v2627 = vpack.c.b16 %v2427, %v2423
    %v2628 = vpack.c.b16 %v2428, %v2424
    %v2629 = vpack.c.b16 %v2429, %v2425
    %v2630 = vpack.c.b16 %v2430, %v2426
    %v2631 = vpack.c.b16 %v2435, %v2431
    %v2632 = vpack.c.b16 %v2436, %v2432
    %v2633 = vpack.c.b16 %v2437, %v2433
    %v2634 = vpack.c.b16 %v2438, %v2434
    %v2635 = vpack.c.b16 %v2443, %v2439
    %v2636 = vpack.c.b16 %v2444, %v2440
    %v2637 = vpack.c.b16 %v2445, %v2441
    %v2638 = vpack.c.b16 %v2446, %v2442
    %v2639 = vpack.c.b16 %v2451, %v2447
    %v2640 = vpack.c.b16 %v2452, %v2448
    %v2641 = vpack.c.b16 %v2453, %v2449
    %v2642 = vpack.c.b16 %v2454, %v2450
    %v2643 = vpack.c.b16 %v2459, %v2455
    %v2644 = vpack.c.b16 %v2460, %v2456
    %v2645 = vpack.c.b16 %v2461, %v2457
    %v2646 = vpack.c.b16 %v2462, %v2458
    %v2647 = vpack.c.b16 %v2467, %v2463
    %v2648 = vpack.c.b16 %v2468, %v2464
    %v2649 = vpack.c.b16 %v2469, %v2465
    %v2650 = vpack.c.b16 %v2470, %v2466
    %v2651 = vpack.c.b16 %v2475, %v2471
    %v2652 = vpack.c.b16 %v2476, %v2472
    %v2653 = vpack.c.b16 %v2477, %v2473
    %v2654 = vpack.c.b16 %v2478, %v2474
    %v2655 = vpack.c.b16 %v2483, %v2479
    %v2656 = vpack.c.b16 %v2484, %v2480
    %v2657 = vpack.c.b16 %v2485, %v2481
    %v2658 = vpack.c.b16 %v2486, %v2482
    %v2659 = vpack.c.b16 %v2491, %v2487
    %v2660 = vpack.c.b16 %v2492, %v2488
    %v2661 = vpack.c.b16 %v2493, %v2489
    %v2662 = vpack.c.b16 %v2494, %v2490
    %v2663 = vpack.c.b16 %v2499, %v2495
    %v2664 = vpack.c.b16 %v2500, %v2496
    %v2665 = vpack.c.b16 %v2501, %v2497
    %v2666 = vpack.c.b16 %v2502, %v2498
    %v2667 = vpack.c.b16 %v2507, %v2503
    %v2668 = vpack.c.b16 %v2508, %v2504
    %v2669 = vpack.c.b16 %v2509, %v2505
    %v2670 = vpack.c.b16 %v2510, %v2506
    %v2671 = vpack.c.b16 %v2515, %v2511
    %v2672 = vpack.c.b16 %v2516, %v2512
    %v2673 = vpack.c.b16 %v2517, %v2513
    %v2674 = vpack.c.b16 %v2518, %v2514
    %v2675 = vpack.c.b16 %v2523, %v2519
    %v2676 = vpack.c.b16 %v2524, %v2520
    %v2677 = vpack.c.b16 %v2525, %v2521
    %v2678 = vpack.c.b16 %v2526, %v2522
    %v2679 = vpack.c.b16 %v2531, %v2527
    %v2680 = vpack.c.b16 %v2532, %v2528
    %v2681 = vpack.c.b16 %v2533, %v2529
    %v2682 = vpack.c.b16 %v2534, %v2530
    %v2683 = vpack.c.b16 %v2539, %v2535
    %v2684 = vpack.c.b16 %v2540, %v2536
    %v2685 = vpack.c.b16 %v2541, %v2537
    %v2686 = vpack.c.b16 %v2542, %v2538
    %v2687 = vpack.c.b16 %v2547, %v2543
    %v2688 = vpack.c.b16 %v2548, %v2544
    %v2689 = vpack.c.b16 %v2549, %v2545
    %v2690 = vpack.c.b16 %v2550, %v2546
    %v2691 = vpack.c.b16 %v2555, %v2551
    %v2692 = vpack.c.b16 %v2556, %v2552
    %v2693 = vpack.c.b16 %v2557, %v2553
    %v2694 = vpack.c.b16 %v2558, %v2554
    %v2695 = vpack.c.b16 %v2563, %v2559
    %v2696 = vpack.c.b16 %v2564, %v2560
    %v2697 = vpack.c.b16 %v2565, %v2561
    %v2698 = vpack.c.b16 %v2566, %v2562
    %v2699 = vpack.c.b16 %v2571, %v2567
    %v2700 = vpack.c.b16 %v2572, %v2568
    %v2701 = vpack.c.b16 %v2573, %v2569
    %v2702 = vpack.c.b16 %v2574, %v2570
    %2831 = vmatprep.subr.bf16.mxu0 %v2576
    %2832 = vmatpush1.bf16.msra.mxu0 %v2575
    %2833 = vmatprep.subr.bf16.mxu0 %v2580
    %2834 = vmatpush1.bf16.msra.mxu0 %v2579
    %2835 = vmatprep.subr.bf16.mxu0 %v2584
    %2836 = vmatpush1.bf16.msra.mxu0 %v2583
    %2837 = vmatprep.subr.bf16.mxu0 %v2588
    %2838 = vmatpush1.bf16.msra.mxu0 %v2587
    %2839 = vmatprep.subr.bf16.mxu0 %v2592
    %2840 = vmatpush1.bf16.msra.mxu0 %v2591
    %2841 = vmatprep.subr.bf16.mxu0 %v2596
    %2842 = vmatpush1.bf16.msra.mxu0 %v2595
    %2843 = vmatprep.subr.bf16.mxu0 %v2600
    %2844 = vmatpush1.bf16.msra.mxu0 %v2599
    %2845 = vmatprep.subr.bf16.mxu0 %v2604
    %2846 = vmatpush1.bf16.msra.mxu0 %v2603
    %2847 = vmatprep.subr.bf16.mxu0 %v2608
    %2848 = vmatpush1.bf16.msra.mxu0 %v2607
    %2849 = vmatprep.subr.bf16.mxu0 %v2612
    %2850 = vmatpush1.bf16.msra.mxu0 %v2611
    %2851 = vmatprep.subr.bf16.mxu0 %v2616
    %2852 = vmatpush1.bf16.msra.mxu0 %v2615
    %2853 = vmatprep.subr.bf16.mxu0 %v2620
    %2854 = vmatpush1.bf16.msra.mxu0 %v2619
    %2855 = vmatprep.subr.bf16.mxu0 %v2624
    %2856 = vmatpush1.bf16.msra.mxu0 %v2623
    %2857 = vmatprep.subr.bf16.mxu0 %v2628
    %2858 = vmatpush1.bf16.msra.mxu0 %v2627
    %2859 = vmatprep.subr.bf16.mxu0 %v2632
    %2860 = vmatpush1.bf16.msra.mxu0 %v2631
    %2861 = vmatprep.subr.bf16.mxu0 %v2636
    %2862 = vmatpush1.bf16.msra.mxu0 %v2635
    %2863 = vmatprep.mubr.bf16.mxu0 %v2038
    %2864 = vmatmul.mubr.bf16.gmra.mrb[0].mxu0 %v2037
    %v2865 = vpop.f32.mrb[0].mxu0
    %v2866 = vadd.f32 %v2174, %v2865
    %v2867 = vpop.f32.mrb[0].mxu0
    %v2868 = vadd.f32 %v2178, %v2867
    %v2869 = vpop.f32.mrb[0].mxu0
    %v2870 = vadd.f32 %v2174, %v2869
    %v2871 = vpop.f32.mrb[0].mxu0
    %v2872 = vadd.f32 %v2178, %v2871
    %2873 = vdwg.mxu0
    %2874 = vmatprep.subr.bf16.mxu0 %v2640
    %2875 = vmatpush1.bf16.msra.mxu0 %v2639
    %2876 = vmatprep.subr.bf16.mxu0 %v2644
    %2877 = vmatpush1.bf16.msra.mxu0 %v2643
    %2878 = vmatprep.subr.bf16.mxu0 %v2648
    %2879 = vmatpush1.bf16.msra.mxu0 %v2647
    %2880 = vmatprep.subr.bf16.mxu0 %v2652
    %2881 = vmatpush1.bf16.msra.mxu0 %v2651
    %2882 = vmatprep.subr.bf16.mxu0 %v2656
    %2883 = vmatpush1.bf16.msra.mxu0 %v2655
    %2884 = vmatprep.subr.bf16.mxu0 %v2660
    %2885 = vmatpush1.bf16.msra.mxu0 %v2659
    %2886 = vmatprep.subr.bf16.mxu0 %v2664
    %2887 = vmatpush1.bf16.msra.mxu0 %v2663
    %2888 = vmatprep.subr.bf16.mxu0 %v2668
    %2889 = vmatpush1.bf16.msra.mxu0 %v2667
    %2890 = vmatprep.subr.bf16.mxu0 %v2672
    %2891 = vmatpush1.bf16.msra.mxu0 %v2671
    %2892 = vmatprep.subr.bf16.mxu0 %v2676
    %2893 = vmatpush1.bf16.msra.mxu0 %v2675
    %2894 = vmatprep.subr.bf16.mxu0 %v2680
    %2895 = vmatpush1.bf16.msra.mxu0 %v2679
    %2896 = vmatprep.subr.bf16.mxu0 %v2684
    %2897 = vmatpush1.bf16.msra.mxu0 %v2683
    %2898 = vmatprep.subr.bf16.mxu0 %v2688
    %2899 = vmatpush1.bf16.msra.mxu0 %v2687
    %2900 = vmatprep.subr.bf16.mxu0 %v2692
    %2901 = vmatpush1.bf16.msra.mxu0 %v2691
    %2902 = vmatprep.subr.bf16.mxu0 %v2696
    %2903 = vmatpush1.bf16.msra.mxu0 %v2695
    %2904 = vmatprep.subr.bf16.mxu0 %v2700
    %2905 = vmatpush1.bf16.msra.mxu0 %v2699
    %2906 = vmatprep.mubr.bf16.mxu0 %v2040
    %2907 = vmatmul.mubr.bf16.gmra.mrb[0].mxu0 %v2039
    %v2908 = vpop.f32.mrb[0].mxu0
    %v2909 = vadd.f32 %v2866, %v2908
    %v2910 = vpop.f32.mrb[0].mxu0
    %v2911 = vadd.f32 %v2868, %v2910
    %v2912 = vpop.f32.mrb[0].mxu0
    %v2913 = vadd.f32 %v2870, %v2912
    %v2914 = vpop.f32.mrb[0].mxu0
    %v2915 = vadd.f32 %v2872, %v2914
    %2916 = vdwg.mxu0
    %2917 = vmatprep.subr.bf16.mxu0 %v2578
    %2918 = vmatpush1.bf16.msra.mxu0 %v2577
    %2919 = vmatprep.subr.bf16.mxu0 %v2582
    %2920 = vmatpush1.bf16.msra.mxu0 %v2581
    %2921 = vmatprep.subr.bf16.mxu0 %v2586
    %2922 = vmatpush1.bf16.msra.mxu0 %v2585
    %2923 = vmatprep.subr.bf16.mxu0 %v2590
    %2924 = vmatpush1.bf16.msra.mxu0 %v2589
    %2925 = vmatprep.subr.bf16.mxu0 %v2594
    %2926 = vmatpush1.bf16.msra.mxu0 %v2593
    %2927 = vmatprep.subr.bf16.mxu0 %v2598
    %2928 = vmatpush1.bf16.msra.mxu0 %v2597
    %2929 = vmatprep.subr.bf16.mxu0 %v2602
    %2930 = vmatpush1.bf16.msra.mxu0 %v2601
    %2931 = vmatprep.subr.bf16.mxu0 %v2606
    %2932 = vmatpush1.bf16.msra.mxu0 %v2605
    %2933 = vmatprep.subr.bf16.mxu0 %v2610
    %2934 = vmatpush1.bf16.msra.mxu0 %v2609
    %2935 = vmatprep.subr.bf16.mxu0 %v2614
    %2936 = vmatpush1.bf16.msra.mxu0 %v2613
    %2937 = vmatprep.subr.bf16.mxu0 %v2618
    %2938 = vmatpush1.bf16.msra.mxu0 %v2617
    %2939 = vmatprep.subr.bf16.mxu0 %v2622
    %2940 = vmatpush1.bf16.msra.mxu0 %v2621
    %2941 = vmatprep.subr.bf16.mxu0 %v2626
    %2942 = vmatpush1.bf16.msra.mxu0 %v2625
    %2943 = vmatprep.subr.bf16.mxu0 %v2630
    %2944 = vmatpush1.bf16.msra.mxu0 %v2629
    %2945 = vmatprep.subr.bf16.mxu0 %v2634
    %2946 = vmatpush1.bf16.msra.mxu0 %v2633
    %2947 = vmatprep.subr.bf16.mxu0 %v2638
    %2948 = vmatpush1.bf16.msra.mxu0 %v2637
    %2949 = vmatprep.mubr.bf16.mxu0 %v2038
    %2950 = vmatmul.mubr.bf16.gmra.mrb[0].mxu0 %v2037
    %v2951 = vpop.f32.mrb[0].mxu0
    %v2952 = vadd.f32 %v2182, %v2951
    %v2953 = vpop.f32.mrb[0].mxu0
    %v2954 = vadd.f32 %v2186, %v2953
    %v2955 = vpop.f32.mrb[0].mxu0
    %v2956 = vadd.f32 %v2182, %v2955
    %v2957 = vpop.f32.mrb[0].mxu0
    %v2958 = vadd.f32 %v2186, %v2957
    %2959 = vdwg.mxu0
    %2960 = vmatprep.subr.bf16.mxu0 %v2642
    %2961 = vmatpush1.bf16.msra.mxu0 %v2641
    %2962 = vmatprep.subr.bf16.mxu0 %v2646
    %2963 = vmatpush1.bf16.msra.mxu0 %v2645
    %2964 = vmatprep.subr.bf16.mxu0 %v2650
    %2965 = vmatpush1.bf16.msra.mxu0 %v2649
    %2966 = vmatprep.subr.bf16.mxu0 %v2654
    %2967 = vmatpush1.bf16.msra.mxu0 %v2653
    %2968 = vmatprep.subr.bf16.mxu0 %v2658
    %2969 = vmatpush1.bf16.msra.mxu0 %v2657
    %2970 = vmatprep.subr.bf16.mxu0 %v2662
    %2971 = vmatpush1.bf16.msra.mxu0 %v2661
    %2972 = vmatprep.subr.bf16.mxu0 %v2666
    %2973 = vmatpush1.bf16.msra.mxu0 %v2665
    %2974 = vmatprep.subr.bf16.mxu0 %v2670
    %2975 = vmatpush1.bf16.msra.mxu0 %v2669
    %2976 = vmatprep.subr.bf16.mxu0 %v2674
    %2977 = vmatpush1.bf16.msra.mxu0 %v2673
    %2978 = vmatprep.subr.bf16.mxu0 %v2678
    %2979 = vmatpush1.bf16.msra.mxu0 %v2677
    %2980 = vmatprep.subr.bf16.mxu0 %v2682
    %2981 = vmatpush1.bf16.msra.mxu0 %v2681
    %2982 = vmatprep.subr.bf16.mxu0 %v2686
    %2983 = vmatpush1.bf16.msra.mxu0 %v2685
    %2984 = vmatprep.subr.bf16.mxu0 %v2690
    %2985 = vmatpush1.bf16.msra.mxu0 %v2689
    %2986 = vmatprep.subr.bf16.mxu0 %v2694
    %2987 = vmatpush1.bf16.msra.mxu0 %v2693
    %2988 = vmatprep.subr.bf16.mxu0 %v2698
    %2989 = vmatpush1.bf16.msra.mxu0 %v2697
    %2990 = vmatprep.subr.bf16.mxu0 %v2702
    %2991 = vmatpush1.bf16.msra.mxu0 %v2701
    %2992 = vmatprep.mubr.bf16.mxu0 %v2040
    %2993 = vmatmul.mubr.bf16.gmra.mrb[0].mxu0 %v2039
    %v2994 = vpop.f32.mrb[0].mxu0
    %v2995 = vadd.f32 %v2952, %v2994
    %v2996 = vpop.f32.mrb[0].mxu0
    %v2997 = vadd.f32 %v2954, %v2996
    %v2998 = vpop.f32.mrb[0].mxu0
    %v2999 = vadd.f32 %v2956, %v2998
    %v3000 = vpop.f32.mrb[0].mxu0
    %v3001 = vadd.f32 %v2958, %v3000
    %3002 = vdwg.mxu0
    %v3003 = vmax.f32 %v2909, 0.0
    %v3004 = vmax.f32 %v2911, 0.0
    %v3005 = vmax.f32 %v2995, 0.0
    %v3006 = vmax.f32 %v2997, 0.0
    %v3007 = vmax.f32 %v2913, 0.0
    %v3008 = vmax.f32 %v2915, 0.0
    %v3009 = vmax.f32 %v2999, 0.0
    %v3010 = vmax.f32 %v3001, 0.0
    %v3011 = vpack.c.bf16 %v3007, %v3003
    %v3012 = vpack.c.bf16 %v3008, %v3004
    %v3013 = vpack.c.bf16 %v3009, %v3005
    %v3014 = vpack.c.bf16 %v3010, %v3006
    %v3015 = vld [vmem:[#allocation8] sm:$0xff]
    %v3016 = vld [vmem:[#allocation8 + $0x8] sm:$0xff]
    %v3017 = vld [vmem:[#allocation8 + $0x10] sm:$0xff]
    %v3018 = vld [vmem:[#allocation8 + $0x18] sm:$0xff]
    %v3019 = vld [vmem:[#allocation8 + $0x20] sm:$0xff]
    %v3020 = vld [vmem:[#allocation8 + $0x28] sm:$0xff]
    %v3021 = vld [vmem:[#allocation8 + $0x30] sm:$0xff]
    %v3022 = vld [vmem:[#allocation8 + $0x38] sm:$0xff]
    %v3023 = vld [vmem:[#allocation8 + $0x40] sm:$0xff]
    %v3024 = vld [vmem:[#allocation8 + $0x48] sm:$0xff]
    %v3025 = vld [vmem:[#allocation8 + $0x50] sm:$0xff]
    %v3026 = vld [vmem:[#allocation8 + $0x58] sm:$0xff]
    %v3027 = vld [vmem:[#allocation8 + $0x60] sm:$0xff]
    %v3028 = vld [vmem:[#allocation8 + $0x68] sm:$0xff]
    %v3029 = vld [vmem:[#allocation8 + $0x70] sm:$0xff]
    %v3030 = vld [vmem:[#allocation8 + $0x78] sm:$0xff]
    %v3031 = vld [vmem:[#allocation8 + $0x80] sm:$0xff]
    %v3032 = vld [vmem:[#allocation8 + $0x88] sm:$0xff]
    %v3033 = vld [vmem:[#allocation8 + $0x90] sm:$0xff]
    %v3034 = vld [vmem:[#allocation8 + $0x98] sm:$0xff]
    %v3035 = vld [vmem:[#allocation8 + $0xa0] sm:$0xff]
    %v3036 = vld [vmem:[#allocation8 + $0xa8] sm:$0xff]
    %v3037 = vld [vmem:[#allocation8 + $0xb0] sm:$0xff]
    %v3038 = vld [vmem:[#allocation8 + $0xb8] sm:$0xff]
    %v3039 = vld [vmem:[#allocation8 + $0xc0] sm:$0xff]
    %v3040 = vld [vmem:[#allocation8 + $0xc8] sm:$0xff]
    %v3041 = vld [vmem:[#allocation8 + $0xd0] sm:$0xff]
    %v3042 = vld [vmem:[#allocation8 + $0xd8] sm:$0xff]
    %v3043 = vld [vmem:[#allocation8 + $0xe0] sm:$0xff]
    %v3044 = vld [vmem:[#allocation8 + $0xe8] sm:$0xff]
    %v3045 = vld [vmem:[#allocation8 + $0xf0] sm:$0xff]
    %v3046 = vld [vmem:[#allocation8 + $0xf8] sm:$0xff]
    %v3047 = vld [vmem:[#allocation8 + $0x100] sm:$0xff]
    %v3048 = vld [vmem:[#allocation8 + $0x108] sm:$0xff]
    %v3049 = vld [vmem:[#allocation8 + $0x110] sm:$0xff]
    %v3050 = vld [vmem:[#allocation8 + $0x118] sm:$0xff]
    %v3051 = vld [vmem:[#allocation8 + $0x120] sm:$0xff]
    %v3052 = vld [vmem:[#allocation8 + $0x128] sm:$0xff]
    %v3053 = vld [vmem:[#allocation8 + $0x130] sm:$0xff]
    %v3054 = vld [vmem:[#allocation8 + $0x138] sm:$0xff]
    %v3055 = vld [vmem:[#allocation8 + $0x140] sm:$0xff]
    %v3056 = vld [vmem:[#allocation8 + $0x148] sm:$0xff]
    %v3057 = vld [vmem:[#allocation8 + $0x150] sm:$0xff]
    %v3058 = vld [vmem:[#allocation8 + $0x158] sm:$0xff]
    %v3059 = vld [vmem:[#allocation8 + $0x160] sm:$0xff]
    %v3060 = vld [vmem:[#allocation8 + $0x168] sm:$0xff]
    %v3061 = vld [vmem:[#allocation8 + $0x170] sm:$0xff]
    %v3062 = vld [vmem:[#allocation8 + $0x178] sm:$0xff]
    %v3063 = vld [vmem:[#allocation8 + $0x180] sm:$0xff]
    %v3064 = vld [vmem:[#allocation8 + $0x188] sm:$0xff]
    %v3065 = vld [vmem:[#allocation8 + $0x190] sm:$0xff]
    %v3066 = vld [vmem:[#allocation8 + $0x198] sm:$0xff]
    %v3067 = vld [vmem:[#allocation8 + $0x1a0] sm:$0xff]
    %v3068 = vld [vmem:[#allocation8 + $0x1a8] sm:$0xff]
    %v3069 = vld [vmem:[#allocation8 + $0x1b0] sm:$0xff]
    %v3070 = vld [vmem:[#allocation8 + $0x1b8] sm:$0xff]
    %v3071 = vld [vmem:[#allocation8 + $0x1c0] sm:$0xff]
    %v3072 = vld [vmem:[#allocation8 + $0x1c8] sm:$0xff]
    %v3073 = vld [vmem:[#allocation8 + $0x1d0] sm:$0xff]
    %v3074 = vld [vmem:[#allocation8 + $0x1d8] sm:$0xff]
    %v3075 = vld [vmem:[#allocation8 + $0x1e0] sm:$0xff]
    %v3076 = vld [vmem:[#allocation8 + $0x1e8] sm:$0xff]
    %v3077 = vld [vmem:[#allocation8 + $0x1f0] sm:$0xff]
    %v3078 = vld [vmem:[#allocation8 + $0x1f8] sm:$0xff]
    %v3079 = vld [vmem:[%s6] sm:$0x3]
    %v3081 = vlaneseq
    %v3082 = vshrl.u32 %v3081, 7
    %v3083 = vsub.s32 0, %v3082
    %v3084 = vrot.slane %v3079, %v3083
    %v3085 = vlaneseq
    %v3086 = vshrl.u32 %v3085, 7
    %v3087 = vsub.s32 1, %v3086
    %v3088 = vrot.slane %v3079, %v3087
    %v3155 = vunpack.c.l.b16 %v3015
    %v3156 = vunpack.c.h.b16 %v3015
    %v3157 = vunpack.c.l.b16 %v3016
    %v3158 = vunpack.c.h.b16 %v3016
    %v3159 = vunpack.c.l.b16 %v3017
    %v3160 = vunpack.c.h.b16 %v3017
    %v3161 = vunpack.c.l.b16 %v3018
    %v3162 = vunpack.c.h.b16 %v3018
    %v3163 = vunpack.c.l.b16 %v3019
    %v3164 = vunpack.c.h.b16 %v3019
    %v3165 = vunpack.c.l.b16 %v3020
    %v3166 = vunpack.c.h.b16 %v3020
    %v3167 = vunpack.c.l.b16 %v3021
    %v3168 = vunpack.c.h.b16 %v3021
    %v3169 = vunpack.c.l.b16 %v3022
    %v3170 = vunpack.c.h.b16 %v3022
    %v3171 = vunpack.c.l.b16 %v3023
    %v3172 = vunpack.c.h.b16 %v3023
    %v3173 = vunpack.c.l.b16 %v3024
    %v3174 = vunpack.c.h.b16 %v3024
    %v3175 = vunpack.c.l.b16 %v3025
    %v3176 = vunpack.c.h.b16 %v3025
    %v3177 = vunpack.c.l.b16 %v3026
    %v3178 = vunpack.c.h.b16 %v3026
    %v3179 = vunpack.c.l.b16 %v3027
    %v3180 = vunpack.c.h.b16 %v3027
    %v3181 = vunpack.c.l.b16 %v3028
    %v3182 = vunpack.c.h.b16 %v3028
    %v3183 = vunpack.c.l.b16 %v3029
    %v3184 = vunpack.c.h.b16 %v3029
    %v3185 = vunpack.c.l.b16 %v3030
    %v3186 = vunpack.c.h.b16 %v3030
    %v3187 = vunpack.c.l.b16 %v3031
    %v3188 = vunpack.c.h.b16 %v3031
    %v3189 = vunpack.c.l.b16 %v3032
    %v3190 = vunpack.c.h.b16 %v3032
    %v3191 = vunpack.c.l.b16 %v3033
    %v3192 = vunpack.c.h.b16 %v3033
    %v3193 = vunpack.c.l.b16 %v3034
    %v3194 = vunpack.c.h.b16 %v3034
    %v3195 = vunpack.c.l.b16 %v3035
    %v3196 = vunpack.c.h.b16 %v3035
    %v3197 = vunpack.c.l.b16 %v3036
    %v3198 = vunpack.c.h.b16 %v3036
    %v3199 = vunpack.c.l.b16 %v3037
    %v3200 = vunpack.c.h.b16 %v3037
    %v3201 = vunpack.c.l.b16 %v3038
    %v3202 = vunpack.c.h.b16 %v3038
    %v3203 = vunpack.c.l.b16 %v3039
    %v3204 = vunpack.c.h.b16 %v3039
    %v3205 = vunpack.c.l.b16 %v3040
    %v3206 = vunpack.c.h.b16 %v3040
    %v3207 = vunpack.c.l.b16 %v3041
    %v3208 = vunpack.c.h.b16 %v3041
    %v3209 = vunpack.c.l.b16 %v3042
    %v3210 = vunpack.c.h.b16 %v3042
    %v3211 = vunpack.c.l.b16 %v3043
    %v3212 = vunpack.c.h.b16 %v3043
    %v3213 = vunpack.c.l.b16 %v3044
    %v3214 = vunpack.c.h.b16 %v3044
    %v3215 = vunpack.c.l.b16 %v3045
    %v3216 = vunpack.c.h.b16 %v3045
    %v3217 = vunpack.c.l.b16 %v3046
    %v3218 = vunpack.c.h.b16 %v3046
    %v3219 = vunpack.c.l.b16 %v3047
    %v3220 = vunpack.c.h.b16 %v3047
    %v3221 = vunpack.c.l.b16 %v3048
    %v3222 = vunpack.c.h.b16 %v3048
    %v3223 = vunpack.c.l.b16 %v3049
    %v3224 = vunpack.c.h.b16 %v3049
    %v3225 = vunpack.c.l.b16 %v3050
    %v3226 = vunpack.c.h.b16 %v3050
    %v3227 = vunpack.c.l.b16 %v3051
    %v3228 = vunpack.c.h.b16 %v3051
    %v3229 = vunpack.c.l.b16 %v3052
    %v3230 = vunpack.c.h.b16 %v3052
    %v3231 = vunpack.c.l.b16 %v3053
    %v3232 = vunpack.c.h.b16 %v3053
    %v3233 = vunpack.c.l.b16 %v3054
    %v3234 = vunpack.c.h.b16 %v3054
    %v3235 = vunpack.c.l.b16 %v3055
    %v3236 = vunpack.c.h.b16 %v3055
    %v3237 = vunpack.c.l.b16 %v3056
    %v3238 = vunpack.c.h.b16 %v3056
    %v3239 = vunpack.c.l.b16 %v3057
    %v3240 = vunpack.c.h.b16 %v3057
    %v3241 = vunpack.c.l.b16 %v3058
    %v3242 = vunpack.c.h.b16 %v3058
    %v3243 = vunpack.c.l.b16 %v3059
    %v3244 = vunpack.c.h.b16 %v3059
    %v3245 = vunpack.c.l.b16 %v3060
    %v3246 = vunpack.c.h.b16 %v3060
    %v3247 = vunpack.c.l.b16 %v3061
    %v3248 = vunpack.c.h.b16 %v3061
    %v3249 = vunpack.c.l.b16 %v3062
    %v3250 = vunpack.c.h.b16 %v3062
    %v3251 = vunpack.c.l.b16 %v3063
    %v3252 = vunpack.c.h.b16 %v3063
    %v3253 = vunpack.c.l.b16 %v3064
    %v3254 = vunpack.c.h.b16 %v3064
    %v3255 = vunpack.c.l.b16 %v3065
    %v3256 = vunpack.c.h.b16 %v3065
    %v3257 = vunpack.c.l.b16 %v3066
    %v3258 = vunpack.c.h.b16 %v3066
    %v3259 = vunpack.c.l.b16 %v3067
    %v3260 = vunpack.c.h.b16 %v3067
    %v3261 = vunpack.c.l.b16 %v3068
    %v3262 = vunpack.c.h.b16 %v3068
    %v3263 = vunpack.c.l.b16 %v3069
    %v3264 = vunpack.c.h.b16 %v3069
    %v3265 = vunpack.c.l.b16 %v3070
    %v3266 = vunpack.c.h.b16 %v3070
    %v3267 = vunpack.c.l.b16 %v3071
    %v3268 = vunpack.c.h.b16 %v3071
    %v3269 = vunpack.c.l.b16 %v3072
    %v3270 = vunpack.c.h.b16 %v3072
    %v3271 = vunpack.c.l.b16 %v3073
    %v3272 = vunpack.c.h.b16 %v3073
    %v3273 = vunpack.c.l.b16 %v3074
    %v3274 = vunpack.c.h.b16 %v3074
    %v3275 = vunpack.c.l.b16 %v3075
    %v3276 = vunpack.c.h.b16 %v3075
    %v3277 = vunpack.c.l.b16 %v3076
    %v3278 = vunpack.c.h.b16 %v3076
    %v3279 = vunpack.c.l.b16 %v3077
    %v3280 = vunpack.c.h.b16 %v3077
    %v3281 = vunpack.c.l.b16 %v3078
    %v3282 = vunpack.c.h.b16 %v3078
    %v3283 = vpack.c.b16 %v3157, %v3155
    %v3284 = vpack.c.b16 %v3158, %v3156
    %v3285 = vpack.c.b16 %v3161, %v3159
    %v3286 = vpack.c.b16 %v3162, %v3160
    %v3287 = vpack.c.b16 %v3165, %v3163
    %v3288 = vpack.c.b16 %v3166, %v3164
    %v3289 = vpack.c.b16 %v3169, %v3167
    %v3290 = vpack.c.b16 %v3170, %v3168
    %v3291 = vpack.c.b16 %v3173, %v3171
    %v3292 = vpack.c.b16 %v3174, %v3172
    %v3293 = vpack.c.b16 %v3177, %v3175
    %v3294 = vpack.c.b16 %v3178, %v3176
    %v3295 = vpack.c.b16 %v3181, %v3179
    %v3296 = vpack.c.b16 %v3182, %v3180
    %v3297 = vpack.c.b16 %v3185, %v3183
    %v3298 = vpack.c.b16 %v3186, %v3184
    %v3299 = vpack.c.b16 %v3189, %v3187
    %v3300 = vpack.c.b16 %v3190, %v3188
    %v3301 = vpack.c.b16 %v3193, %v3191
    %v3302 = vpack.c.b16 %v3194, %v3192
    %v3303 = vpack.c.b16 %v3197, %v3195
    %v3304 = vpack.c.b16 %v3198, %v3196
    %v3305 = vpack.c.b16 %v3201, %v3199
    %v3306 = vpack.c.b16 %v3202, %v3200
    %v3307 = vpack.c.b16 %v3205, %v3203
    %v3308 = vpack.c.b16 %v3206, %v3204
    %v3309 = vpack.c.b16 %v3209, %v3207
    %v3310 = vpack.c.b16 %v3210, %v3208
    %v3311 = vpack.c.b16 %v3213, %v3211
    %v3312 = vpack.c.b16 %v3214, %v3212
    %v3313 = vpack.c.b16 %v3217, %v3215
    %v3314 = vpack.c.b16 %v3218, %v3216
    %v3315 = vpack.c.b16 %v3221, %v3219
    %v3316 = vpack.c.b16 %v3222, %v3220
    %v3317 = vpack.c.b16 %v3225, %v3223
    %v3318 = vpack.c.b16 %v3226, %v3224
    %v3319 = vpack.c.b16 %v3229, %v3227
    %v3320 = vpack.c.b16 %v3230, %v3228
    %v3321 = vpack.c.b16 %v3233, %v3231
    %v3322 = vpack.c.b16 %v3234, %v3232
    %v3323 = vpack.c.b16 %v3237, %v3235
    %v3324 = vpack.c.b16 %v3238, %v3236
    %v3325 = vpack.c.b16 %v3241, %v3239
    %v3326 = vpack.c.b16 %v3242, %v3240
    %v3327 = vpack.c.b16 %v3245, %v3243
    %v3328 = vpack.c.b16 %v3246, %v3244
    %v3329 = vpack.c.b16 %v3249, %v3247
    %v3330 = vpack.c.b16 %v3250, %v3248
    %v3331 = vpack.c.b16 %v3253, %v3251
    %v3332 = vpack.c.b16 %v3254, %v3252
    %v3333 = vpack.c.b16 %v3257, %v3255
    %v3334 = vpack.c.b16 %v3258, %v3256
    %v3335 = vpack.c.b16 %v3261, %v3259
    %v3336 = vpack.c.b16 %v3262, %v3260
    %v3337 = vpack.c.b16 %v3265, %v3263
    %v3338 = vpack.c.b16 %v3266, %v3264
    %v3339 = vpack.c.b16 %v3269, %v3267
    %v3340 = vpack.c.b16 %v3270, %v3268
    %v3341 = vpack.c.b16 %v3273, %v3271
    %v3342 = vpack.c.b16 %v3274, %v3272
    %v3343 = vpack.c.b16 %v3277, %v3275
    %v3344 = vpack.c.b16 %v3278, %v3276
    %v3345 = vpack.c.b16 %v3281, %v3279
    %v3346 = vpack.c.b16 %v3282, %v3280
    %3411 = vmatprep.subr.bf16.mxu0 %v3284
    %3412 = vmatpush1.bf16.msra.mxu0 %v3283
    %3413 = vmatprep.subr.bf16.mxu0 %v3286
    %3414 = vmatpush1.bf16.msra.mxu0 %v3285
    %3415 = vmatprep.subr.bf16.mxu0 %v3288
    %3416 = vmatpush1.bf16.msra.mxu0 %v3287
    %3417 = vmatprep.subr.bf16.mxu0 %v3290
    %3418 = vmatpush1.bf16.msra.mxu0 %v3289
    %3419 = vmatprep.subr.bf16.mxu0 %v3292
    %3420 = vmatpush1.bf16.msra.mxu0 %v3291
    %3421 = vmatprep.subr.bf16.mxu0 %v3294
    %3422 = vmatpush1.bf16.msra.mxu0 %v3293
    %3423 = vmatprep.subr.bf16.mxu0 %v3296
    %3424 = vmatpush1.bf16.msra.mxu0 %v3295
    %3425 = vmatprep.subr.bf16.mxu0 %v3298
    %3426 = vmatpush1.bf16.msra.mxu0 %v3297
    %3427 = vmatprep.subr.bf16.mxu0 %v3300
    %3428 = vmatpush1.bf16.msra.mxu0 %v3299
    %3429 = vmatprep.subr.bf16.mxu0 %v3302
    %3430 = vmatpush1.bf16.msra.mxu0 %v3301
    %3431 = vmatprep.subr.bf16.mxu0 %v3304
    %3432 = vmatpush1.bf16.msra.mxu0 %v3303
    %3433 = vmatprep.subr.bf16.mxu0 %v3306
    %3434 = vmatpush1.bf16.msra.mxu0 %v3305
    %3435 = vmatprep.subr.bf16.mxu0 %v3308
    %3436 = vmatpush1.bf16.msra.mxu0 %v3307
    %3437 = vmatprep.subr.bf16.mxu0 %v3310
    %3438 = vmatpush1.bf16.msra.mxu0 %v3309
    %3439 = vmatprep.subr.bf16.mxu0 %v3312
    %3440 = vmatpush1.bf16.msra.mxu0 %v3311
    %3441 = vmatprep.subr.bf16.mxu0 %v3314
    %3442 = vmatpush1.bf16.msra.mxu0 %v3313
    %3443 = vmatprep.mubr.bf16.mxu0 %v3012
    %3444 = vmatmul.mubr.bf16.gmra.mrb[0].mxu0 %v3011
    %v3445 = vpop.f32.mrb[0].mxu0
    %v3446 = vadd.f32 %v3084, %v3445
    %v3447 = vpop.f32.mrb[0].mxu0
    %v3448 = vadd.f32 %v3088, %v3447
    %v3449 = vpop.f32.mrb[0].mxu0
    %v3450 = vadd.f32 %v3084, %v3449
    %v3451 = vpop.f32.mrb[0].mxu0
    %v3452 = vadd.f32 %v3088, %v3451
    %3453 = vdwg.mxu0
    %3454 = vmatprep.subr.bf16.mxu0 %v3316
    %3455 = vmatpush1.bf16.msra.mxu0 %v3315
    %3456 = vmatprep.subr.bf16.mxu0 %v3318
    %3457 = vmatpush1.bf16.msra.mxu0 %v3317
    %3458 = vmatprep.subr.bf16.mxu0 %v3320
    %3459 = vmatpush1.bf16.msra.mxu0 %v3319
    %3460 = vmatprep.subr.bf16.mxu0 %v3322
    %3461 = vmatpush1.bf16.msra.mxu0 %v3321
    %3462 = vmatprep.subr.bf16.mxu0 %v3324
    %3463 = vmatpush1.bf16.msra.mxu0 %v3323
    %3464 = vmatprep.subr.bf16.mxu0 %v3326
    %3465 = vmatpush1.bf16.msra.mxu0 %v3325
    %3466 = vmatprep.subr.bf16.mxu0 %v3328
    %3467 = vmatpush1.bf16.msra.mxu0 %v3327
    %3468 = vmatprep.subr.bf16.mxu0 %v3330
    %3469 = vmatpush1.bf16.msra.mxu0 %v3329
    %3470 = vmatprep.subr.bf16.mxu0 %v3332
    %3471 = vmatpush1.bf16.msra.mxu0 %v3331
    %3472 = vmatprep.subr.bf16.mxu0 %v3334
    %3473 = vmatpush1.bf16.msra.mxu0 %v3333
    %3474 = vmatprep.subr.bf16.mxu0 %v3336
    %3475 = vmatpush1.bf16.msra.mxu0 %v3335
    %3476 = vmatprep.subr.bf16.mxu0 %v3338
    %3477 = vmatpush1.bf16.msra.mxu0 %v3337
    %3478 = vmatprep.subr.bf16.mxu0 %v3340
    %3479 = vmatpush1.bf16.msra.mxu0 %v3339
    %3480 = vmatprep.subr.bf16.mxu0 %v3342
    %3481 = vmatpush1.bf16.msra.mxu0 %v3341
    %3482 = vmatprep.subr.bf16.mxu0 %v3344
    %3483 = vmatpush1.bf16.msra.mxu0 %v3343
    %3484 = vmatprep.subr.bf16.mxu0 %v3346
    %3485 = vmatpush1.bf16.msra.mxu0 %v3345
    %3486 = vmatprep.mubr.bf16.mxu0 %v3014
    %3487 = vmatmul.mubr.bf16.gmra.mrb[0].mxu0 %v3013
    %v3488 = vpop.f32.mrb[0].mxu0
    %v3489 = vadd.f32 %v3446, %v3488
    %v3490 = vpop.f32.mrb[0].mxu0
    %v3491 = vadd.f32 %v3448, %v3490
    %v3492 = vpop.f32.mrb[0].mxu0
    %v3493 = vadd.f32 %v3450, %v3492
    %v3494 = vpop.f32.mrb[0].mxu0
    %v3495 = vadd.f32 %v3452, %v3494
    %3496 = vdwg.mxu0
    %v3497 = vmax.f32 %v3489, 0.0
    %v3498 = vmax.f32 %v3491, 0.0
    %v3499 = vmax.f32 %v3493, 0.0
    %v3500 = vmax.f32 %v3495, 0.0
    %v3501 = vpack.c.bf16 %v3499, %v3497
    %v3502 = vpack.c.bf16 %v3500, %v3498
    %v3503 = vld [vmem:[#allocation10] sm:$0xf]
    %v3504 = vld [vmem:[#allocation10 + $0x4] sm:$0xf]
    %v3505 = vld [vmem:[#allocation10 + $0x8] sm:$0xf]
    %v3506 = vld [vmem:[#allocation10 + $0xc] sm:$0xf]
    %v3507 = vld [vmem:[#allocation10 + $0x10] sm:$0xf]
    %v3508 = vld [vmem:[#allocation10 + $0x14] sm:$0xf]
    %v3509 = vld [vmem:[#allocation10 + $0x18] sm:$0xf]
    %v3510 = vld [vmem:[#allocation10 + $0x1c] sm:$0xf]
    %v3511 = vld [vmem:[#allocation10 + $0x20] sm:$0xf]
    %v3512 = vld [vmem:[#allocation10 + $0x24] sm:$0xf]
    %v3513 = vld [vmem:[#allocation10 + $0x28] sm:$0xf]
    %v3514 = vld [vmem:[#allocation10 + $0x2c] sm:$0xf]
    %v3515 = vld [vmem:[#allocation10 + $0x30] sm:$0xf]
    %v3516 = vld [vmem:[#allocation10 + $0x34] sm:$0xf]
    %v3517 = vld [vmem:[#allocation10 + $0x38] sm:$0xf]
    %v3518 = vld [vmem:[#allocation10 + $0x3c] sm:$0xf]
    %v3519 = vld [vmem:[#allocation10 + $0x40] sm:$0xf]
    %v3520 = vld [vmem:[#allocation10 + $0x44] sm:$0xf]
    %v3521 = vld [vmem:[#allocation10 + $0x48] sm:$0xf]
    %v3522 = vld [vmem:[#allocation10 + $0x4c] sm:$0xf]
    %v3523 = vld [vmem:[#allocation10 + $0x50] sm:$0xf]
    %v3524 = vld [vmem:[#allocation10 + $0x54] sm:$0xf]
    %v3525 = vld [vmem:[#allocation10 + $0x58] sm:$0xf]
    %v3526 = vld [vmem:[#allocation10 + $0x5c] sm:$0xf]
    %v3527 = vld [vmem:[#allocation10 + $0x60] sm:$0xf]
    %v3528 = vld [vmem:[#allocation10 + $0x64] sm:$0xf]
    %v3529 = vld [vmem:[#allocation10 + $0x68] sm:$0xf]
    %v3530 = vld [vmem:[#allocation10 + $0x6c] sm:$0xf]
    %v3531 = vld [vmem:[#allocation10 + $0x70] sm:$0xf]
    %v3532 = vld [vmem:[#allocation10 + $0x74] sm:$0xf]
    %v3533 = vld [vmem:[#allocation10 + $0x78] sm:$0xf]
    %v3534 = vld [vmem:[#allocation10 + $0x7c] sm:$0xf]
    %v3535 = vld [vmem:[%s8] sm:$0x1]
    %v3537 = vlaneseq
    %v3538 = vshrl.u32 %v3537, 7
    %v3539 = vsub.s32 0, %v3538
    %v3540 = vrot.slane %v3535, %v3539
    %v3574 = vunpack.c.l.b16 %v3503
    %v3575 = vunpack.c.l.b16 %v3504
    %v3576 = vunpack.c.l.b16 %v3505
    %v3577 = vunpack.c.l.b16 %v3506
    %v3578 = vunpack.c.l.b16 %v3507
    %v3579 = vunpack.c.l.b16 %v3508
    %v3580 = vunpack.c.l.b16 %v3509
    %v3581 = vunpack.c.l.b16 %v3510
    %v3582 = vunpack.c.l.b16 %v3511
    %v3583 = vunpack.c.l.b16 %v3512
    %v3584 = vunpack.c.l.b16 %v3513
    %v3585 = vunpack.c.l.b16 %v3514
    %v3586 = vunpack.c.l.b16 %v3515
    %v3587 = vunpack.c.l.b16 %v3516
    %v3588 = vunpack.c.l.b16 %v3517
    %v3589 = vunpack.c.l.b16 %v3518
    %v3590 = vunpack.c.l.b16 %v3519
    %v3591 = vunpack.c.l.b16 %v3520
    %v3592 = vunpack.c.l.b16 %v3521
    %v3593 = vunpack.c.l.b16 %v3522
    %v3594 = vunpack.c.l.b16 %v3523
    %v3595 = vunpack.c.l.b16 %v3524
    %v3596 = vunpack.c.l.b16 %v3525
    %v3597 = vunpack.c.l.b16 %v3526
    %v3598 = vunpack.c.l.b16 %v3527
    %v3599 = vunpack.c.l.b16 %v3528
    %v3600 = vunpack.c.l.b16 %v3529
    %v3601 = vunpack.c.l.b16 %v3530
    %v3602 = vunpack.c.l.b16 %v3531
    %v3603 = vunpack.c.l.b16 %v3532
    %v3604 = vunpack.c.l.b16 %v3533
    %v3605 = vunpack.c.l.b16 %v3534
    %v3606 = vpack.c.b16 %v3575, %v3574
    %v3607 = vpack.c.b16 %v3577, %v3576
    %v3608 = vpack.c.b16 %v3579, %v3578
    %v3609 = vpack.c.b16 %v3581, %v3580
    %v3610 = vpack.c.b16 %v3583, %v3582
    %v3611 = vpack.c.b16 %v3585, %v3584
    %v3612 = vpack.c.b16 %v3587, %v3586
    %v3613 = vpack.c.b16 %v3589, %v3588
    %v3614 = vpack.c.b16 %v3591, %v3590
    %v3615 = vpack.c.b16 %v3593, %v3592
    %v3616 = vpack.c.b16 %v3595, %v3594
    %v3617 = vpack.c.b16 %v3597, %v3596
    %v3618 = vpack.c.b16 %v3599, %v3598
    %v3619 = vpack.c.b16 %v3601, %v3600
    %v3620 = vpack.c.b16 %v3603, %v3602
    %v3621 = vpack.c.b16 %v3605, %v3604
    %3638 = vmatprep.subr.bf16.mxu0 0
    %3639 = vmatpush1.bf16.msra.mxu0 %v3606
    %3640 = vmatprep.subr.bf16.mxu0 0
    %3641 = vmatpush1.bf16.msra.mxu0 %v3607
    %3642 = vmatprep.subr.bf16.mxu0 0
    %3643 = vmatpush1.bf16.msra.mxu0 %v3608
    %3644 = vmatprep.subr.bf16.mxu0 0
    %3645 = vmatpush1.bf16.msra.mxu0 %v3609
    %3646 = vmatprep.subr.bf16.mxu0 0
    %3647 = vmatpush1.bf16.msra.mxu0 %v3610
    %3648 = vmatprep.subr.bf16.mxu0 0
    %3649 = vmatpush1.bf16.msra.mxu0 %v3611
    %3650 = vmatprep.subr.bf16.mxu0 0
    %3651 = vmatpush1.bf16.msra.mxu0 %v3612
    %3652 = vmatprep.subr.bf16.mxu0 0
    %3653 = vmatpush1.bf16.msra.mxu0 %v3613
    %3654 = vmatprep.subr.bf16.mxu0 0
    %3655 = vmatpush1.bf16.msra.mxu0 %v3614
    %3656 = vmatprep.subr.bf16.mxu0 0
    %3657 = vmatpush1.bf16.msra.mxu0 %v3615
    %3658 = vmatprep.subr.bf16.mxu0 0
    %3659 = vmatpush1.bf16.msra.mxu0 %v3616
    %3660 = vmatprep.subr.bf16.mxu0 0
    %3661 = vmatpush1.bf16.msra.mxu0 %v3617
    %3662 = vmatprep.subr.bf16.mxu0 0
    %3663 = vmatpush1.bf16.msra.mxu0 %v3618
    %3664 = vmatprep.subr.bf16.mxu0 0
    %3665 = vmatpush1.bf16.msra.mxu0 %v3619
    %3666 = vmatprep.subr.bf16.mxu0 0
    %3667 = vmatpush1.bf16.msra.mxu0 %v3620
    %3668 = vmatprep.subr.bf16.mxu0 0
    %3669 = vmatpush1.bf16.msra.mxu0 %v3621
    %3670 = vmatprep.mubr.bf16.mxu0 %v3502
    %3671 = vmatmul.mubr.bf16.gmra.mrb[0].mxu0 %v3501
    %v3672 = vpop.f32.mrb[0].mxu0
    %v3673 = vadd.f32 %v3540, %v3672
    %v3674 = vpop.f32.mrb[0].mxu0
    %v3675 = vpop.f32.mrb[0].mxu0
    %v3676 = vadd.f32 %v3540, %v3675
    %v3677 = vpop.f32.mrb[0].mxu0
    %3678 = vdwg.mxu0
    %v3679 = vmax.f32 %v3673, 0.0
    %v3680 = vmax.f32 %v3676, 0.0
    %v3681 = vpack.c.bf16 %v3680, %v3679
    %v3682 = vld [vmem:[#allocation11] sm:$0xf]
    %v3683 = vld [vmem:[#allocation11 + $0x4] sm:$0xf]
    %v3684 = vld [vmem:[#allocation11 + $0x8] sm:$0xf]
    %v3685 = vld [vmem:[#allocation11 + $0xc] sm:$0xf]
    %v3686 = vld [vmem:[#allocation11 + $0x10] sm:$0xf]
    %v3687 = vld [vmem:[#allocation11 + $0x14] sm:$0xf]
    %v3688 = vld [vmem:[#allocation11 + $0x18] sm:$0xf]
    %v3689 = vld [vmem:[#allocation11 + $0x1c] sm:$0xf]
    %v3690 = vld [vmem:[#allocation11 + $0x20] sm:$0xf]
    %v3691 = vld [vmem:[#allocation11 + $0x24] sm:$0xf]
    %v3692 = vld [vmem:[#allocation11 + $0x28] sm:$0xf]
    %v3693 = vld [vmem:[#allocation11 + $0x2c] sm:$0xf]
    %v3694 = vld [vmem:[#allocation11 + $0x30] sm:$0xf]
    %v3695 = vld [vmem:[#allocation11 + $0x34] sm:$0xf]
    %v3696 = vld [vmem:[#allocation11 + $0x38] sm:$0xf]
    %v3697 = vld [vmem:[#allocation11 + $0x3c] sm:$0xf]
    %v3698 = vld [vmem:[%s10] sm:$0x1]
    %v3700 = vlaneseq
    %v3701 = vshrl.u32 %v3700, 7
    %v3702 = vsub.s32 0, %v3701
    %v3703 = vrot.slane %v3698, %v3702
    %v3721 = vunpack.c.l.b16 %v3682
    %v3722 = vunpack.c.l.b16 %v3683
    %v3723 = vunpack.c.l.b16 %v3684
    %v3724 = vunpack.c.l.b16 %v3685
    %v3725 = vunpack.c.l.b16 %v3686
    %v3726 = vunpack.c.l.b16 %v3687
    %v3727 = vunpack.c.l.b16 %v3688
    %v3728 = vunpack.c.l.b16 %v3689
    %v3729 = vunpack.c.l.b16 %v3690
    %v3730 = vunpack.c.l.b16 %v3691
    %v3731 = vunpack.c.l.b16 %v3692
    %v3732 = vunpack.c.l.b16 %v3693
    %v3733 = vunpack.c.l.b16 %v3694
    %v3734 = vunpack.c.l.b16 %v3695
    %v3735 = vunpack.c.l.b16 %v3696
    %v3736 = vunpack.c.l.b16 %v3697
    %v3737 = vpack.c.b16 %v3722, %v3721
    %v3738 = vpack.c.b16 %v3724, %v3723
    %v3739 = vpack.c.b16 %v3726, %v3725
    %v3740 = vpack.c.b16 %v3728, %v3727
    %v3741 = vpack.c.b16 %v3730, %v3729
    %v3742 = vpack.c.b16 %v3732, %v3731
    %v3743 = vpack.c.b16 %v3734, %v3733
    %v3744 = vpack.c.b16 %v3736, %v3735
    %3753 = vmatprep.subr.bf16.mxu0 0
    %3754 = vmatpush1.bf16.msra.mxu0 %v3737
    %3755 = vmatprep.subr.bf16.mxu0 0
    %3756 = vmatpush1.bf16.msra.mxu0 %v3738
    %3757 = vmatprep.subr.bf16.mxu0 0
    %3758 = vmatpush1.bf16.msra.mxu0 %v3739
    %3759 = vmatprep.subr.bf16.mxu0 0
    %3760 = vmatpush1.bf16.msra.mxu0 %v3740
    %3761 = vmatprep.subr.bf16.mxu0 0
    %3762 = vmatpush1.bf16.msra.mxu0 %v3741
    %3763 = vmatprep.subr.bf16.mxu0 0
    %3764 = vmatpush1.bf16.msra.mxu0 %v3742
    %3765 = vmatprep.subr.bf16.mxu0 0
    %3766 = vmatpush1.bf16.msra.mxu0 %v3743
    %3767 = vmatprep.subr.bf16.mxu0 0
    %3768 = vmatpush1.bf16.msra.mxu0 %v3744
    %3769 = vmatprep.subr.bf16.mxu0 0
    %3770 = vmatpush1.bf16.msra.mxu0 0
    %3771 = vmatprep.subr.bf16.mxu0 0
    %3772 = vmatpush1.bf16.msra.mxu0 0
    %3773 = vmatprep.subr.bf16.mxu0 0
    %3774 = vmatpush1.bf16.msra.mxu0 0
    %3775 = vmatprep.subr.bf16.mxu0 0
    %3776 = vmatpush1.bf16.msra.mxu0 0
    %3777 = vmatprep.subr.bf16.mxu0 0
    %3778 = vmatpush1.bf16.msra.mxu0 0
    %3779 = vmatprep.subr.bf16.mxu0 0
    %3780 = vmatpush1.bf16.msra.mxu0 0
    %3781 = vmatprep.subr.bf16.mxu0 0
    %3782 = vmatpush1.bf16.msra.mxu0 0
    %3783 = vmatprep.subr.bf16.mxu0 0
    %3784 = vmatpush1.bf16.msra.mxu0 0
    %3785 = vmatprep.mubr.bf16.mxu0 0
    %3786 = vmatmul.mubr.bf16.gmra.mrb[0].mxu0 %v3681
    %v3787 = vpop.f32.mrb[0].mxu0
    %v3788 = vadd.f32 %v3703, %v3787
    %v3789 = vpop.f32.mrb[0].mxu0
    %v3790 = vpop.f32.mrb[0].mxu0
    %v3791 = vadd.f32 %v3703, %v3790
    %v3792 = vpop.f32.mrb[0].mxu0
    %3793 = vdwg.mxu0
    %3794 = vmax.xlane.f32.xlu0 %v3788
    %v3795 = vpop.xlane.xlu0 %3794
    %3796 = vmax.xlane.f32.xlu0 %v3791
    %v3797 = vpop.xlane.xlu0 %3796
    %v3798 = vsub.f32 %v3788, %v3795
    %v3799 = vsub.f32 %v3791, %v3797
    %v3800 = vmul.f32 %v3798, 1.442695
    %v3801 = vpow.pop %v3800
    %v3802 = vmul.f32 %v3799, 1.442695
    %v3803 = vpow.pop %v3802
    %3804 = vadd.xlane.f32.xlu0 %v3801
    %v3805 = vpop.xlane.xlu0 %3804
    %3806 = vadd.xlane.f32.xlu0 %v3803
    %v3807 = vpop.xlane.xlu0 %3806
    %v3808 = vrcp.pop %v3805
    %v3809 = vrcp.pop %v3807
    %v3810 = vmul.f32 %v3801, %v3808
    %v3811 = vmul.f32 %v3803, %v3809
    %v3812 = vpack.c.bf16 %v3811, %v3810
    %v3814 = vunpack.c.l.b16 %v3812
    %v3815 = vunpack.c.h.b16 %v3812
    %v3816 = vpack.c.b16 %v3814, %v3814
    %v3817 = vpack.c.b16 %v3815, %v3815
    %3820 = vst [vmem:[#allocation13] sm:$0xf] %v3816
    %3821 = vst [vmem:[#allocation13 + $0x4] sm:$0xf] %v3817
    // Predicated region
    $region70: #{tpu_custom_call.1} parent=1 // pred_check
      _
    $region71: #{tpu_custom_call.1} parent=1 // pred_check_branch
      %3823 = sbr.rel (0) target = $region73
    $region72: #{tpu_custom_call.1} parent=1 // pred_region
      %s3825 = ssub.s32 128, 128
      %3826 = vsyncadd [#allocation4], %s3825
      %s3827 = sshll.u32 [#allocation13], 4
      %s3828 = int_to_ptr.vmem [resolvable:$true] %s3827
      %3833 = dma.vmem_to_hbm [thread:$0]  %s3828, 128, %s11, [#allocation4], 64, 64, 4
    $region73: #{tpu_custom_call.1} parent=1 // pred_fallthru
      _
    // Predicated region
    $region74: #{tpu_custom_call.1} parent=1 // pred_check
      _
    $region75: #{tpu_custom_call.1} parent=1 // pred_check_branch
      %3835 = sbr.rel (0) target = $region77
    $region76: #{tpu_custom_call.1} parent=1 // pred_region
      %3836 = dma.done [#allocation4], 128
    $region77: #{tpu_custom_call.1} parent=1 // pred_fallthru
      _
    %3837 = vsyncpa [#allocation3], 1
    %3838 = vsyncpa [#allocation6], 1
    %3839 = vsyncpa [#allocation9], 1
    %3840 = vsyncpa [#allocation12], 1
    %3841 = vsyncpa [#allocation4], 1

</llo_original>
